<compile_context>
chip_gen: v7x
topology: tpu7x:2x2x1
jax: 0.10.0
libtpu: 0.0.40
codegen_flags: <defaults>
</compile_context>

<pallas_src>
import functools

import jax
import jax.numpy as jnp
import numpy as np
from jax.experimental import pallas as pl
from jax.experimental.pallas import tpu as pltpu


def _double_conv_kernel(x_ref, t1_ref, b1_ref, g1_ref, be1_ref, gs1_ref, bg1_ref,
                        t2_ref, b2_ref, g2_ref, be2_ref, gs2_ref, bg2_ref,
                        out_ref, mid_ref, *, groups, eps, H, W):
    # x_ref   : (Nb, H+2, W*Cin)        H-zero-padded, lane-dense input slab
    # t*_ref  : (3, W*Cin_k, W*Cout_k)  block-Toeplitz conv weights (one per dy)
    # b*/g*/be*_ref : (1, W*C)          bias / gamma / beta, pre-tiled across W
    # gs*_ref : (W*C, G)                lane -> group summation matrix
    # bg*_ref : (G, W*C)                group -> lane broadcast matrix (= gs.T)
    # out_ref : (Nb, H, W*Cout)         lane-dense output
    # mid_ref : (Nb, H+2, W*Cmid)       VMEM scratch, H-padded intermediate
    Nb = x_ref.shape[0]
    K1 = t1_ref.shape[1]          # W * Cin
    L1 = t1_ref.shape[2]          # W * Cmid
    L2 = t2_ref.shape[2]          # W * Cout
    rows = Nb * H
    f32 = jnp.float32

    def conv3x3(load_slab, t_ref, bias_row):
        # Sum over the 3 H-taps; each tap is one (rows, K) @ (K, L) MXU matmul.
        # Seed the accumulator with tap-0 + bias (no separate zero-init pass).
        acc = jnp.dot(load_slab(0), t_ref[0], preferred_element_type=f32) + bias_row
        for dy in (1, 2):
            acc = acc + jnp.dot(load_slab(dy), t_ref[dy],
                                preferred_element_type=f32)
        return acc                                            # (rows, L) fp32

    def group_norm_relu(a, gs_ref, bg_ref, gamma_row, beta_row, L):
        # a: (rows, L) fp32 in lane-dense (h, w*c) layout.
        cpg = (L // W) // groups                              # channels per group
        cnt = float(H * W * cpg)
        # Per-row partial group sums (MXU), then sublane reduce over H.
        s1 = jnp.dot(a, gs_ref[...], preferred_element_type=f32)       # (rows, G)
        s2 = jnp.dot(a * a, gs_ref[...], preferred_element_type=f32)   # (rows, G)
        s1 = jnp.sum(s1.reshape(Nb, H, groups), axis=1)                 # (Nb, G)
        s2 = jnp.sum(s2.reshape(Nb, H, groups), axis=1)                 # (Nb, G)
        mean_g = s1 / cnt
        # single-pass variance (E[x^2]-E[x]^2); adequate at fp32 / 1e-4 tol.
        var_g = s2 / cnt - mean_g * mean_g
        inv_g = jax.lax.rsqrt(var_g + eps)
        # Broadcast mean & inv-std back to lanes in ONE stacked matmul.
        mb = jnp.dot(jnp.concatenate([mean_g, inv_g], axis=0), bg_ref[...],
                     preferred_element_type=f32)              # (2*Nb, L)
        mean_l = mb[:Nb]                                      # (Nb, L)
        inv_l = mb[Nb:]                                       # (Nb, L)
        scale = inv_l * gamma_row                             # (Nb, L)
        shift = beta_row - mean_l * scale                     # (Nb, L)
        a3 = a.reshape(Nb, H, L)
        return jnp.maximum(a3 * scale[:, None, :] + shift[:, None, :], 0.0)

    # ---- conv1 + GN1 + ReLU --------------------------------------------------
    h1 = conv3x3(lambda dy: x_ref[:, dy:dy + H, :].reshape(rows, K1),
                 t1_ref, b1_ref[...])
    h1 = group_norm_relu(h1, gs1_ref, bg1_ref, g1_ref[...], be1_ref[...], L1)

    # ---- stage the intermediate as an H-padded lane-dense slab in scratch -----
    # (both border rows re-zeroed + interior overwritten every step, so the
    #  "parallel" batch axis never observes stale scratch contents)
    zrow = jnp.zeros((Nb, 1, L1), f32)
    mid_ref[:, 0:1, :] = zrow
    mid_ref[:, H + 1:H + 2, :] = zrow
    mid_ref[:, 1:H + 1, :] = h1

    # ---- conv2 + GN2 + ReLU --------------------------------------------------
    h2 = conv3x3(lambda dy: mid_ref[:, dy:dy + H, :].reshape(rows, L1),
                 t2_ref, b2_ref[...])
    h2 = group_norm_relu(h2, gs2_ref, bg2_ref, g2_ref[...], be2_ref[...], L2)

    out_ref[...] = h2.astype(out_ref.dtype)


# ------------------------------ wrapper helpers --------------------------------
def _toeplitz_weight(w_hwio, W):
    """(3,3,Cin,Cout) HWIO conv weight -> (3, W*Cin, W*Cout) block-Toeplitz.

    T[dy, wi*Cin+ci, wo*Cout+co] = w[dy, wi-wo+1, ci, co] (0 otherwise), which
    folds both the W-direction taps and the W zero-padding into the weight.
    Built with gather/where only, so it is numerically exact in fp32.
    """
    kh, kw, cin, cout = w_hwio.shape
    wi = jnp.arange(W)[:, None]              # input W position
    wo = jnp.arange(W)[None, :]              # output W position
    dx = wi - wo + (kw // 2)                 # which W-tap connects them
    valid = (dx >= 0) & (dx < kw)
    dx = jnp.clip(dx, 0, kw - 1)
    t = w_hwio[:, dx]                        # (kh, W, W, cin, cout)
    t = jnp.where(valid[None, :, :, None, None], t, 0)
    t = jnp.transpose(t, (0, 1, 3, 2, 4))    # (kh, W, cin, W, cout)
    return t.reshape(kh, W * cin, W * cout)


def _group_matrices(C, groups, W):
    """Lane<->group maps for GroupNorm stats in the (h, w*c) lane layout."""
    m = (jnp.arange(C)[:, None] // (C // groups)
         == jnp.arange(groups)[None, :]).astype(jnp.float32)   # (C, G)
    gsum = jnp.tile(m, (W, 1))                                  # (W*C, G)
    return gsum, gsum.T                                         # and (G, W*C)


def _tile_row(v, W):
    return jnp.tile(v, W).reshape(1, -1)                        # (1, W*C)


def double_conv_pallas(x_nchw, params, *, groups=32, eps=1e-5, block_n=None):
    """DoubleConv forward. Input/output NCHW (PyTorch layout); weights HWIO."""
    w1, b1, g1, be1, w2, b2, g2, be2 = params
    N, Cin, H, W = x_nchw.shape
    kh, kw, _, Cmid = w1.shape
    Cout = w2.shape[3]
    assert (kh, kw) == (3, 3) and w2.shape[:2] == (3, 3)
    if Cmid % groups or Cout % groups:
        raise ValueError("channel count must be divisible by norm_num_groups")

    if block_n is None:  # batch elements per grid step (amortize step overhead)
        block_n = next(nb for nb in (8, 4, 2, 1) if N % nb == 0)

    # NCHW -> lane-dense (N, H, W*Cin), zero-pad the H axis by 1 on each side.
    x_slab = jnp.transpose(x_nchw, (0, 2, 3, 1)).reshape(N, H, W * Cin)
    x_slab = jnp.pad(x_slab, ((0, 0), (1, 1), (0, 0)))

    t1 = _toeplitz_weight(w1, W)                   # (3, W*Cin,  W*Cmid)
    t2 = _toeplitz_weight(w2, W)                   # (3, W*Cmid, W*Cout)
    gs1, bg1 = _group_matrices(Cmid, groups, W)
    gs2, bg2 = _group_matrices(Cout, groups, W)
    b1t, g1t, be1t = (_tile_row(v, W) for v in (b1, g1, be1))
    b2t, g2t, be2t = (_tile_row(v, W) for v in (b2, g2, be2))

    K1, L1, L2 = W * Cin, W * Cmid, W * Cout
    kernel = functools.partial(_double_conv_kernel,
                               groups=groups, eps=eps, H=H, W=W)

    const2 = lambda shape: pl.BlockSpec(shape, lambda n: (0, 0))
    const3 = lambda shape: pl.BlockSpec(shape, lambda n: (0, 0, 0))

    out_slab = pl.pallas_call(
        kernel,
        out_shape=jax.ShapeDtypeStruct((N, H, L2), x_nchw.dtype),
        grid_spec=pltpu.PrefetchScalarGridSpec(
            num_scalar_prefetch=0,
            grid=(N // block_n,),
            in_specs=[
                pl.BlockSpec((block_n, H + 2, K1), lambda n: (n, 0, 0)),
                const3((3, K1, L1)), const2((1, L1)), const2((1, L1)),
                const2((1, L1)), const2((L1, groups)), const2((groups, L1)),
                const3((3, L1, L2)), const2((1, L2)), const2((1, L2)),
                const2((1, L2)), const2((L2, groups)), const2((groups, L2)),
            ],
            out_specs=pl.BlockSpec((block_n, H, L2), lambda n: (n, 0, 0)),
            scratch_shapes=[pltpu.VMEM((block_n, H + 2, L1), jnp.float32)],
        ),
        compiler_params=pltpu.CompilerParams(
            dimension_semantics=("parallel",)),
    )(x_slab, t1, b1t, g1t, be1t, gs1, bg1, t2, b2t, g2t, be2t, gs2, bg2)

    out_nhwc = out_slab.reshape(N, H, W, Cout)
    return jnp.transpose(out_nhwc, (0, 3, 1, 2))               # back to NCHW


# ----------------------------- pure-JAX reference ------------------------------
def _ref_forward(x_nchw, params, *, groups=32, eps=1e-5):
    w1, b1, g1, be1, w2, b2, g2, be2 = params
    x = jnp.transpose(x_nchw, (0, 2, 3, 1))

    def conv(x, w, b):
        y = jax.lax.conv_general_dilated(
            x, w, (1, 1), 'SAME',
            dimension_numbers=('NHWC', 'HWIO', 'NHWC'),
            precision=jax.lax.Precision.HIGHEST)
        return y + b

    def gn_relu(x, gamma, beta):
        N, H, W, C = x.shape
        xr = x.reshape(N, H * W, groups, C // groups)
        mean = xr.mean(axis=(1, 3), keepdims=True)
        var = ((xr - mean) ** 2).mean(axis=(1, 3), keepdims=True)
        xn = ((xr - mean) / jnp.sqrt(var + eps)).reshape(N, H, W, C)
        return jnp.maximum(xn * gamma + beta, 0.0)

    h = gn_relu(conv(x, w1, b1), g1, be1)
    h = gn_relu(conv(h, w2, b2), g2, be2)
    return jnp.transpose(h, (0, 3, 1, 2))


# ----------------------------------- main ---------------------------------------
if __name__ == "__main__":
    # DoubleConv(in_channels=4, out_channels=32) with default norm_num_groups=32
    N, Cin, H, W = 2, 4, 16, 16
    Cmid = Cout = 32
    GROUPS = 32

    key = jax.random.PRNGKey(0)
    k = jax.random.split(key, 9)
    x = jax.random.normal(k[0], (N, Cin, H, W), jnp.float32)

    # deterministic parameter init (HWIO conv weights, fan-in scaled)
    w1 = jax.random.normal(k[1], (3, 3, Cin, Cmid), jnp.float32) / np.sqrt(9 * Cin)
    b1 = 0.1 * jax.random.normal(k[2], (Cmid,), jnp.float32)
    g1 = 1.0 + 0.1 * jax.random.normal(k[3], (Cmid,), jnp.float32)
    be1 = 0.1 * jax.random.normal(k[4], (Cmid,), jnp.float32)
    w2 = jax.random.normal(k[5], (3, 3, Cmid, Cout), jnp.float32) / np.sqrt(9 * Cmid)
    b2 = 0.1 * jax.random.normal(k[6], (Cout,), jnp.float32)
    g2 = 1.0 + 0.1 * jax.random.normal(k[7], (Cout,), jnp.float32)
    be2 = 0.1 * jax.random.normal(k[8], (Cout,), jnp.float32)
    params = (w1, b1, g1, be1, w2, b2, g2, be2)

    out = double_conv_pallas(x, params, groups=GROUPS)
    out = jax.block_until_ready(out)

    ref = _ref_forward(x, params, groups=GROUPS)
    np.testing.assert_allclose(np.asarray(out), np.asarray(ref),
                               rtol=1e-4, atol=1e-4)

    print("KERNEL_OK")
</pallas_src>

<mosaic_0001>
module attributes {stable_mosaic.version = 11 : i64} {
  func.func @_double_conv_kernel(%arg0: i32, %arg1: memref<2x18x64xf32, #tpu.memory_space<vmem>>, %arg2: memref<3x64x512xf32, #tpu.memory_space<vmem>>, %arg3: memref<1x512xf32, #tpu.memory_space<vmem>>, %arg4: memref<1x512xf32, #tpu.memory_space<vmem>>, %arg5: memref<1x512xf32, #tpu.memory_space<vmem>>, %arg6: memref<512x32xf32, #tpu.memory_space<vmem>>, %arg7: memref<32x512xf32, #tpu.memory_space<vmem>>, %arg8: memref<3x512x512xf32, #tpu.memory_space<vmem>>, %arg9: memref<1x512xf32, #tpu.memory_space<vmem>>, %arg10: memref<1x512xf32, #tpu.memory_space<vmem>>, %arg11: memref<1x512xf32, #tpu.memory_space<vmem>>, %arg12: memref<512x32xf32, #tpu.memory_space<vmem>>, %arg13: memref<32x512xf32, #tpu.memory_space<vmem>>, %arg14: memref<2x16x512xf32, #tpu.memory_space<vmem>>, %arg15: memref<2x18x512xf32, #tpu.memory_space<vmem>>) attributes {dimension_semantics = [#tpu.dimension_semantics<parallel>], iteration_bounds = array<i64: 1>, scalar_prefetch = 0 : i64, scratch_operands = 1 : i64, tpu.core_type = #tpu.core_type<tc>, window_params = [{transform_indices = @transform_0, window_bounds = array<i64: 2, 18, 64>}, {pipeline_mode = #tpu.pipeline_mode<synchronous>, transform_indices = @transform_1, window_bounds = array<i64: 3, 64, 512>}, {pipeline_mode = #tpu.pipeline_mode<synchronous>, transform_indices = @transform_2, window_bounds = array<i64: 1, 512>}, {pipeline_mode = #tpu.pipeline_mode<synchronous>, transform_indices = @transform_3, window_bounds = array<i64: 1, 512>}, {pipeline_mode = #tpu.pipeline_mode<synchronous>, transform_indices = @transform_4, window_bounds = array<i64: 1, 512>}, {pipeline_mode = #tpu.pipeline_mode<synchronous>, transform_indices = @transform_5, window_bounds = array<i64: 512, 32>}, {pipeline_mode = #tpu.pipeline_mode<synchronous>, transform_indices = @transform_6, window_bounds = array<i64: 32, 512>}, {pipeline_mode = #tpu.pipeline_mode<synchronous>, transform_indices = @transform_7, window_bounds = array<i64: 3, 512, 512>}, {pipeline_mode = #tpu.pipeline_mode<synchronous>, transform_indices = @transform_8, window_bounds = array<i64: 1, 512>}, {pipeline_mode = #tpu.pipeline_mode<synchronous>, transform_indices = @transform_9, window_bounds = array<i64: 1, 512>}, {pipeline_mode = #tpu.pipeline_mode<synchronous>, transform_indices = @transform_10, window_bounds = array<i64: 1, 512>}, {pipeline_mode = #tpu.pipeline_mode<synchronous>, transform_indices = @transform_11, window_bounds = array<i64: 512, 32>}, {pipeline_mode = #tpu.pipeline_mode<synchronous>, transform_indices = @transform_12, window_bounds = array<i64: 32, 512>}, {transform_indices = @transform_13, window_bounds = array<i64: 2, 16, 512>}]} {
    %c0 = arith.constant 0 : index
    %c0_0 = arith.constant 0 : index
    %0 = vector.load %arg3[%c0, %c0_0] : memref<1x512xf32, #tpu.memory_space<vmem>>, vector<1x512xf32>
    %c0_1 = arith.constant 0 : index
    %c0_2 = arith.constant 0 : index
    %c0_3 = arith.constant 0 : index
    %1 = vector.load %arg1[%c0_1, %c0_2, %c0_3] : memref<2x18x64xf32, #tpu.memory_space<vmem>>, vector<2x16x64xf32>
    %2 = vector.shape_cast %1 : vector<2x16x64xf32> to vector<32x64xf32>
    %c0_4 = arith.constant 0 : index
    %c0_5 = arith.constant 0 : index
    %c0_6 = arith.constant 0 : index
    %3 = vector.load %arg2[%c0_4, %c0_5, %c0_6] : memref<3x64x512xf32, #tpu.memory_space<vmem>>, vector<1x64x512xf32>
    %4 = vector.shape_cast %3 : vector<1x64x512xf32> to vector<64x512xf32>
    %cst = arith.constant dense<0.000000e+00> : vector<32x512xf32>
    %5 = tpu.matmul %2, %4, %cst {dimension_numbers = #tpu.dot_dimension_numbers<[1], [0], [0], [1], [0, 0, 1, 1], [], []>} : vector<32x64xf32>, vector<64x512xf32>, vector<32x512xf32> -> vector<32x512xf32>
    %6 = vector.broadcast %0 : vector<1x512xf32> to vector<32x512xf32>
    %7 = arith.addf %5, %6 : vector<32x512xf32>
    %c0_7 = arith.constant 0 : index
    %c1 = arith.constant 1 : index
    %c0_8 = arith.constant 0 : index
    %8 = vector.load %arg1[%c0_7, %c1, %c0_8] : memref<2x18x64xf32, #tpu.memory_space<vmem>>, vector<2x16x64xf32>
    %9 = vector.shape_cast %8 : vector<2x16x64xf32> to vector<32x64xf32>
    %c1_9 = arith.constant 1 : index
    %c0_10 = arith.constant 0 : index
    %c0_11 = arith.constant 0 : index
    %10 = vector.load %arg2[%c1_9, %c0_10, %c0_11] : memref<3x64x512xf32, #tpu.memory_space<vmem>>, vector<1x64x512xf32>
    %11 = vector.shape_cast %10 : vector<1x64x512xf32> to vector<64x512xf32>
    %cst_12 = arith.constant dense<0.000000e+00> : vector<32x512xf32>
    %12 = tpu.matmul %9, %11, %cst_12 {dimension_numbers = #tpu.dot_dimension_numbers<[1], [0], [0], [1], [0, 0, 1, 1], [], []>} : vector<32x64xf32>, vector<64x512xf32>, vector<32x512xf32> -> vector<32x512xf32>
    %13 = arith.addf %7, %12 : vector<32x512xf32>
    %c0_13 = arith.constant 0 : index
    %c2 = arith.constant 2 : index
    %c0_14 = arith.constant 0 : index
    %14 = vector.load %arg1[%c0_13, %c2, %c0_14] : memref<2x18x64xf32, #tpu.memory_space<vmem>>, vector<2x16x64xf32>
    %15 = vector.shape_cast %14 : vector<2x16x64xf32> to vector<32x64xf32>
    %c2_15 = arith.constant 2 : index
    %c0_16 = arith.constant 0 : index
    %c0_17 = arith.constant 0 : index
    %16 = vector.load %arg2[%c2_15, %c0_16, %c0_17] : memref<3x64x512xf32, #tpu.memory_space<vmem>>, vector<1x64x512xf32>
    %17 = vector.shape_cast %16 : vector<1x64x512xf32> to vector<64x512xf32>
    %cst_18 = arith.constant dense<0.000000e+00> : vector<32x512xf32>
    %18 = tpu.matmul %15, %17, %cst_18 {dimension_numbers = #tpu.dot_dimension_numbers<[1], [0], [0], [1], [0, 0, 1, 1], [], []>} : vector<32x64xf32>, vector<64x512xf32>, vector<32x512xf32> -> vector<32x512xf32>
    %19 = arith.addf %13, %18 : vector<32x512xf32>
    %c0_19 = arith.constant 0 : index
    %c0_20 = arith.constant 0 : index
    %20 = vector.load %arg4[%c0_19, %c0_20] : memref<1x512xf32, #tpu.memory_space<vmem>>, vector<1x512xf32>
    %c0_21 = arith.constant 0 : index
    %c0_22 = arith.constant 0 : index
    %21 = vector.load %arg5[%c0_21, %c0_22] : memref<1x512xf32, #tpu.memory_space<vmem>>, vector<1x512xf32>
    %c0_23 = arith.constant 0 : index
    %c0_24 = arith.constant 0 : index
    %22 = vector.load %arg6[%c0_23, %c0_24] : memref<512x32xf32, #tpu.memory_space<vmem>>, vector<512x32xf32>
    %cst_25 = arith.constant dense<0.000000e+00> : vector<32x32xf32>
    %23 = tpu.matmul %19, %22, %cst_25 {dimension_numbers = #tpu.dot_dimension_numbers<[1], [0], [0], [1], [0, 0, 1, 1], [], []>} : vector<32x512xf32>, vector<512x32xf32>, vector<32x32xf32> -> vector<32x32xf32>
    %24 = arith.mulf %19, %19 : vector<32x512xf32>
    %c0_26 = arith.constant 0 : index
    %c0_27 = arith.constant 0 : index
    %25 = vector.load %arg6[%c0_26, %c0_27] : memref<512x32xf32, #tpu.memory_space<vmem>>, vector<512x32xf32>
    %cst_28 = arith.constant dense<0.000000e+00> : vector<32x32xf32>
    %26 = tpu.matmul %24, %25, %cst_28 {dimension_numbers = #tpu.dot_dimension_numbers<[1], [0], [0], [1], [0, 0, 1, 1], [], []>} : vector<32x512xf32>, vector<512x32xf32>, vector<32x32xf32> -> vector<32x32xf32>
    %27 = vector.shape_cast %23 : vector<32x32xf32> to vector<2x16x32xf32>
    %cst_29 = arith.constant dense<0.000000e+00> : vector<2x32xf32>
    %28 = vector.multi_reduction <add>, %27, %cst_29 [1] : vector<2x16x32xf32> to vector<2x32xf32>
    %29 = vector.shape_cast %26 : vector<32x32xf32> to vector<2x16x32xf32>
    %cst_30 = arith.constant dense<0.000000e+00> : vector<2x32xf32>
    %30 = vector.multi_reduction <add>, %29, %cst_30 [1] : vector<2x16x32xf32> to vector<2x32xf32>
    %cst_31 = arith.constant 2.560000e+02 : f32
    %31 = vector.broadcast %cst_31 : f32 to vector<2x32xf32>
    %32 = arith.divf %28, %31 : vector<2x32xf32>
    %cst_32 = arith.constant 2.560000e+02 : f32
    %33 = vector.broadcast %cst_32 : f32 to vector<2x32xf32>
    %34 = arith.divf %30, %33 : vector<2x32xf32>
    %35 = arith.mulf %32, %32 : vector<2x32xf32>
    %36 = arith.subf %34, %35 : vector<2x32xf32>
    %cst_33 = arith.constant 9.99999974E-6 : f32
    %37 = vector.broadcast %cst_33 : f32 to vector<2x32xf32>
    %38 = arith.addf %36, %37 : vector<2x32xf32>
    %39 = math.rsqrt %38 : vector<2x32xf32>
    %40 = tpu.concatenate %32, %39 in 0 : vector<2x32xf32>, vector<2x32xf32> -> vector<4x32xf32>
    %c0_34 = arith.constant 0 : index
    %c0_35 = arith.constant 0 : index
    %41 = vector.load %arg7[%c0_34, %c0_35] : memref<32x512xf32, #tpu.memory_space<vmem>>, vector<32x512xf32>
    %cst_36 = arith.constant dense<0.000000e+00> : vector<4x512xf32>
    %42 = tpu.matmul %40, %41, %cst_36 {dimension_numbers = #tpu.dot_dimension_numbers<[1], [0], [0], [1], [0, 0, 1, 1], [], []>} : vector<4x32xf32>, vector<32x512xf32>, vector<4x512xf32> -> vector<4x512xf32>
    %43 = vector.extract_strided_slice %42 {offsets = [0, 0], sizes = [2, 512], strides = [1, 1]} : vector<4x512xf32> to vector<2x512xf32>
    %44 = vector.extract_strided_slice %42 {offsets = [2, 0], sizes = [2, 512], strides = [1, 1]} : vector<4x512xf32> to vector<2x512xf32>
    %45 = vector.broadcast %20 : vector<1x512xf32> to vector<2x512xf32>
    %46 = arith.mulf %44, %45 : vector<2x512xf32>
    %47 = arith.mulf %43, %46 : vector<2x512xf32>
    %48 = vector.broadcast %21 : vector<1x512xf32> to vector<2x512xf32>
    %49 = arith.subf %48, %47 : vector<2x512xf32>
    %50 = vector.shape_cast %19 : vector<32x512xf32> to vector<2x16x512xf32>
    %51 = vector.shape_cast %46 : vector<2x512xf32> to vector<2x1x512xf32>
    %52 = vector.broadcast %51 : vector<2x1x512xf32> to vector<2x16x512xf32>
    %53 = arith.mulf %50, %52 : vector<2x16x512xf32>
    %54 = vector.shape_cast %49 : vector<2x512xf32> to vector<2x1x512xf32>
    %55 = vector.broadcast %54 : vector<2x1x512xf32> to vector<2x16x512xf32>
    %56 = arith.addf %53, %55 : vector<2x16x512xf32>
    %cst_37 = arith.constant 0.000000e+00 : f32
    %57 = vector.broadcast %cst_37 : f32 to vector<2x16x512xf32>
    %58 = arith.maximumf %56, %57 : vector<2x16x512xf32>
    %cst_38 = arith.constant 0.000000e+00 : f32
    %59 = vector.broadcast %cst_38 : f32 to vector<2x1x512xf32>
    %c0_39 = arith.constant 0 : index
    %c0_40 = arith.constant 0 : index
    %c0_41 = arith.constant 0 : index
    %60 = vector.load %arg15[%c0_39, %c0_40, %c0_41] : memref<2x18x512xf32, #tpu.memory_space<vmem>>, vector<2x1x512xf32>
    tpu.vector_store %arg15[%c0_39, %c0_40, %c0_41], %59 {strides = array<i32>} : memref<2x18x512xf32, #tpu.memory_space<vmem>>, vector<2x1x512xf32>,
    %c0_42 = arith.constant 0 : index
    %c17 = arith.constant 17 : index
    %c0_43 = arith.constant 0 : index
    %61 = vector.load %arg15[%c0_42, %c17, %c0_43] : memref<2x18x512xf32, #tpu.memory_space<vmem>>, vector<2x1x512xf32>
    tpu.vector_store %arg15[%c0_42, %c17, %c0_43], %59 {strides = array<i32>} : memref<2x18x512xf32, #tpu.memory_space<vmem>>, vector<2x1x512xf32>,
    %c0_44 = arith.constant 0 : index
    %c1_45 = arith.constant 1 : index
    %c0_46 = arith.constant 0 : index
    %62 = vector.load %arg15[%c0_44, %c1_45, %c0_46] : memref<2x18x512xf32, #tpu.memory_space<vmem>>, vector<2x16x512xf32>
    tpu.vector_store %arg15[%c0_44, %c1_45, %c0_46], %58 {strides = array<i32>} : memref<2x18x512xf32, #tpu.memory_space<vmem>>, vector<2x16x512xf32>,
    %c0_47 = arith.constant 0 : index
    %c0_48 = arith.constant 0 : index
    %63 = vector.load %arg9[%c0_47, %c0_48] : memref<1x512xf32, #tpu.memory_space<vmem>>, vector<1x512xf32>
    %c0_49 = arith.constant 0 : index
    %c0_50 = arith.constant 0 : index
    %c0_51 = arith.constant 0 : index
    %64 = vector.load %arg15[%c0_49, %c0_50, %c0_51] : memref<2x18x512xf32, #tpu.memory_space<vmem>>, vector<2x16x512xf32>
    %65 = vector.shape_cast %64 : vector<2x16x512xf32> to vector<32x512xf32>
    %c0_52 = arith.constant 0 : index
    %c0_53 = arith.constant 0 : index
    %c0_54 = arith.constant 0 : index
    %66 = vector.load %arg8[%c0_52, %c0_53, %c0_54] : memref<3x512x512xf32, #tpu.memory_space<vmem>>, vector<1x512x512xf32>
    %67 = vector.shape_cast %66 : vector<1x512x512xf32> to vector<512x512xf32>
    %cst_55 = arith.constant dense<0.000000e+00> : vector<32x512xf32>
    %68 = tpu.matmul %65, %67, %cst_55 {dimension_numbers = #tpu.dot_dimension_numbers<[1], [0], [0], [1], [0, 0, 1, 1], [], []>} : vector<32x512xf32>, vector<512x512xf32>, vector<32x512xf32> -> vector<32x512xf32>
    %69 = vector.broadcast %63 : vector<1x512xf32> to vector<32x512xf32>
    %70 = arith.addf %68, %69 : vector<32x512xf32>
    %c0_56 = arith.constant 0 : index
    %c1_57 = arith.constant 1 : index
    %c0_58 = arith.constant 0 : index
    %71 = vector.load %arg15[%c0_56, %c1_57, %c0_58] : memref<2x18x512xf32, #tpu.memory_space<vmem>>, vector<2x16x512xf32>
    %72 = vector.shape_cast %71 : vector<2x16x512xf32> to vector<32x512xf32>
    %c1_59 = arith.constant 1 : index
    %c0_60 = arith.constant 0 : index
    %c0_61 = arith.constant 0 : index
    %73 = vector.load %arg8[%c1_59, %c0_60, %c0_61] : memref<3x512x512xf32, #tpu.memory_space<vmem>>, vector<1x512x512xf32>
    %74 = vector.shape_cast %73 : vector<1x512x512xf32> to vector<512x512xf32>
    %cst_62 = arith.constant dense<0.000000e+00> : vector<32x512xf32>
    %75 = tpu.matmul %72, %74, %cst_62 {dimension_numbers = #tpu.dot_dimension_numbers<[1], [0], [0], [1], [0, 0, 1, 1], [], []>} : vector<32x512xf32>, vector<512x512xf32>, vector<32x512xf32> -> vector<32x512xf32>
    %76 = arith.addf %70, %75 : vector<32x512xf32>
    %c0_63 = arith.constant 0 : index
    %c2_64 = arith.constant 2 : index
    %c0_65 = arith.constant 0 : index
    %77 = vector.load %arg15[%c0_63, %c2_64, %c0_65] : memref<2x18x512xf32, #tpu.memory_space<vmem>>, vector<2x16x512xf32>
    %78 = vector.shape_cast %77 : vector<2x16x512xf32> to vector<32x512xf32>
    %c2_66 = arith.constant 2 : index
    %c0_67 = arith.constant 0 : index
    %c0_68 = arith.constant 0 : index
    %79 = vector.load %arg8[%c2_66, %c0_67, %c0_68] : memref<3x512x512xf32, #tpu.memory_space<vmem>>, vector<1x512x512xf32>
    %80 = vector.shape_cast %79 : vector<1x512x512xf32> to vector<512x512xf32>
    %cst_69 = arith.constant dense<0.000000e+00> : vector<32x512xf32>
    %81 = tpu.matmul %78, %80, %cst_69 {dimension_numbers = #tpu.dot_dimension_numbers<[1], [0], [0], [1], [0, 0, 1, 1], [], []>} : vector<32x512xf32>, vector<512x512xf32>, vector<32x512xf32> -> vector<32x512xf32>
    %82 = arith.addf %76, %81 : vector<32x512xf32>
    %c0_70 = arith.constant 0 : index
    %c0_71 = arith.constant 0 : index
    %83 = vector.load %arg10[%c0_70, %c0_71] : memref<1x512xf32, #tpu.memory_space<vmem>>, vector<1x512xf32>
    %c0_72 = arith.constant 0 : index
    %c0_73 = arith.constant 0 : index
    %84 = vector.load %arg11[%c0_72, %c0_73] : memref<1x512xf32, #tpu.memory_space<vmem>>, vector<1x512xf32>
    %c0_74 = arith.constant 0 : index
    %c0_75 = arith.constant 0 : index
    %85 = vector.load %arg12[%c0_74, %c0_75] : memref<512x32xf32, #tpu.memory_space<vmem>>, vector<512x32xf32>
    %cst_76 = arith.constant dense<0.000000e+00> : vector<32x32xf32>
    %86 = tpu.matmul %82, %85, %cst_76 {dimension_numbers = #tpu.dot_dimension_numbers<[1], [0], [0], [1], [0, 0, 1, 1], [], []>} : vector<32x512xf32>, vector<512x32xf32>, vector<32x32xf32> -> vector<32x32xf32>
    %87 = arith.mulf %82, %82 : vector<32x512xf32>
    %c0_77 = arith.constant 0 : index
    %c0_78 = arith.constant 0 : index
    %88 = vector.load %arg12[%c0_77, %c0_78] : memref<512x32xf32, #tpu.memory_space<vmem>>, vector<512x32xf32>
    %cst_79 = arith.constant dense<0.000000e+00> : vector<32x32xf32>
    %89 = tpu.matmul %87, %88, %cst_79 {dimension_numbers = #tpu.dot_dimension_numbers<[1], [0], [0], [1], [0, 0, 1, 1], [], []>} : vector<32x512xf32>, vector<512x32xf32>, vector<32x32xf32> -> vector<32x32xf32>
    %90 = vector.shape_cast %86 : vector<32x32xf32> to vector<2x16x32xf32>
    %cst_80 = arith.constant dense<0.000000e+00> : vector<2x32xf32>
    %91 = vector.multi_reduction <add>, %90, %cst_80 [1] : vector<2x16x32xf32> to vector<2x32xf32>
    %92 = vector.shape_cast %89 : vector<32x32xf32> to vector<2x16x32xf32>
    %cst_81 = arith.constant dense<0.000000e+00> : vector<2x32xf32>
    %93 = vector.multi_reduction <add>, %92, %cst_81 [1] : vector<2x16x32xf32> to vector<2x32xf32>
    %cst_82 = arith.constant 2.560000e+02 : f32
    %94 = vector.broadcast %cst_82 : f32 to vector<2x32xf32>
    %95 = arith.divf %91, %94 : vector<2x32xf32>
    %cst_83 = arith.constant 2.560000e+02 : f32
    %96 = vector.broadcast %cst_83 : f32 to vector<2x32xf32>
    %97 = arith.divf %93, %96 : vector<2x32xf32>
    %98 = arith.mulf %95, %95 : vector<2x32xf32>
    %99 = arith.subf %97, %98 : vector<2x32xf32>
    %cst_84 = arith.constant 9.99999974E-6 : f32
    %100 = vector.broadcast %cst_84 : f32 to vector<2x32xf32>
    %101 = arith.addf %99, %100 : vector<2x32xf32>
    %102 = math.rsqrt %101 : vector<2x32xf32>
    %103 = tpu.concatenate %95, %102 in 0 : vector<2x32xf32>, vector<2x32xf32> -> vector<4x32xf32>
    %c0_85 = arith.constant 0 : index
    %c0_86 = arith.constant 0 : index
    %104 = vector.load %arg13[%c0_85, %c0_86] : memref<32x512xf32, #tpu.memory_space<vmem>>, vector<32x512xf32>
    %cst_87 = arith.constant dense<0.000000e+00> : vector<4x512xf32>
    %105 = tpu.matmul %103, %104, %cst_87 {dimension_numbers = #tpu.dot_dimension_numbers<[1], [0], [0], [1], [0, 0, 1, 1], [], []>} : vector<4x32xf32>, vector<32x512xf32>, vector<4x512xf32> -> vector<4x512xf32>
    %106 = vector.extract_strided_slice %105 {offsets = [0, 0], sizes = [2, 512], strides = [1, 1]} : vector<4x512xf32> to vector<2x512xf32>
    %107 = vector.extract_strided_slice %105 {offsets = [2, 0], sizes = [2, 512], strides = [1, 1]} : vector<4x512xf32> to vector<2x512xf32>
    %108 = vector.broadcast %83 : vector<1x512xf32> to vector<2x512xf32>
    %109 = arith.mulf %107, %108 : vector<2x512xf32>
    %110 = arith.mulf %106, %109 : vector<2x512xf32>
    %111 = vector.broadcast %84 : vector<1x512xf32> to vector<2x512xf32>
    %112 = arith.subf %111, %110 : vector<2x512xf32>
    %113 = vector.shape_cast %82 : vector<32x512xf32> to vector<2x16x512xf32>
    %114 = vector.shape_cast %109 : vector<2x512xf32> to vector<2x1x512xf32>
    %115 = vector.broadcast %114 : vector<2x1x512xf32> to vector<2x16x512xf32>
    %116 = arith.mulf %113, %115 : vector<2x16x512xf32>
    %117 = vector.shape_cast %112 : vector<2x512xf32> to vector<2x1x512xf32>
    %118 = vector.broadcast %117 : vector<2x1x512xf32> to vector<2x16x512xf32>
    %119 = arith.addf %116, %118 : vector<2x16x512xf32>
    %cst_88 = arith.constant 0.000000e+00 : f32
    %120 = vector.broadcast %cst_88 : f32 to vector<2x16x512xf32>
    %121 = arith.maximumf %119, %120 : vector<2x16x512xf32>
    %c0_89 = arith.constant 0 : index
    %c0_90 = arith.constant 0 : index
    %c0_91 = arith.constant 0 : index
    %122 = vector.load %arg14[%c0_89, %c0_90, %c0_91] : memref<2x16x512xf32, #tpu.memory_space<vmem>>, vector<2x16x512xf32>
    tpu.vector_store %arg14[%c0_89, %c0_90, %c0_91], %121 {strides = array<i32>} : memref<2x16x512xf32, #tpu.memory_space<vmem>>, vector<2x16x512xf32>,
    return
  }
  func.func @transform_0(%arg0: i32) -> (i32, i32, i32) {
    %c0_i32 = arith.constant 0 : i32
    %c0_i32_0 = arith.constant 0 : i32
    %c0_i32_1 = arith.constant 0 : i32
    return %arg0, %c0_i32, %c0_i32_0 : i32, i32, i32
  }
  func.func @transform_1(%arg0: i32) -> (i32, i32, i32) {
    %c0_i32 = arith.constant 0 : i32
    %c0_i32_0 = arith.constant 0 : i32
    %c0_i32_1 = arith.constant 0 : i32
    %c0_i32_2 = arith.constant 0 : i32
    return %c0_i32, %c0_i32_0, %c0_i32_1 : i32, i32, i32
  }
  func.func @transform_2(%arg0: i32) -> (i32, i32) {
    %c0_i32 = arith.constant 0 : i32
    %c0_i32_0 = arith.constant 0 : i32
    %c0_i32_1 = arith.constant 0 : i32
    return %c0_i32, %c0_i32_0 : i32, i32
  }
  func.func @transform_3(%arg0: i32) -> (i32, i32) {
    %c0_i32 = arith.constant 0 : i32
    %c0_i32_0 = arith.constant 0 : i32
    %c0_i32_1 = arith.constant 0 : i32
    return %c0_i32, %c0_i32_0 : i32, i32
  }
  func.func @transform_4(%arg0: i32) -> (i32, i32) {
    %c0_i32 = arith.constant 0 : i32
    %c0_i32_0 = arith.constant 0 : i32
    %c0_i32_1 = arith.constant 0 : i32
    return %c0_i32, %c0_i32_0 : i32, i32
  }
  func.func @transform_5(%arg0: i32) -> (i32, i32) {
    %c0_i32 = arith.constant 0 : i32
    %c0_i32_0 = arith.constant 0 : i32
    %c0_i32_1 = arith.constant 0 : i32
    return %c0_i32, %c0_i32_0 : i32, i32
  }
  func.func @transform_6(%arg0: i32) -> (i32, i32) {
    %c0_i32 = arith.constant 0 : i32
    %c0_i32_0 = arith.constant 0 : i32
    %c0_i32_1 = arith.constant 0 : i32
    return %c0_i32, %c0_i32_0 : i32, i32
  }
  func.func @transform_7(%arg0: i32) -> (i32, i32, i32) {
    %c0_i32 = arith.constant 0 : i32
    %c0_i32_0 = arith.constant 0 : i32
    %c0_i32_1 = arith.constant 0 : i32
    %c0_i32_2 = arith.constant 0 : i32
    return %c0_i32, %c0_i32_0, %c0_i32_1 : i32, i32, i32
  }
  func.func @transform_8(%arg0: i32) -> (i32, i32) {
    %c0_i32 = arith.constant 0 : i32
    %c0_i32_0 = arith.constant 0 : i32
    %c0_i32_1 = arith.constant 0 : i32
    return %c0_i32, %c0_i32_0 : i32, i32
  }
  func.func @transform_9(%arg0: i32) -> (i32, i32) {
    %c0_i32 = arith.constant 0 : i32
    %c0_i32_0 = arith.constant 0 : i32
    %c0_i32_1 = arith.constant 0 : i32
    return %c0_i32, %c0_i32_0 : i32, i32
  }
  func.func @transform_10(%arg0: i32) -> (i32, i32) {
    %c0_i32 = arith.constant 0 : i32
    %c0_i32_0 = arith.constant 0 : i32
    %c0_i32_1 = arith.constant 0 : i32
    return %c0_i32, %c0_i32_0 : i32, i32
  }
  func.func @transform_11(%arg0: i32) -> (i32, i32) {
    %c0_i32 = arith.constant 0 : i32
    %c0_i32_0 = arith.constant 0 : i32
    %c0_i32_1 = arith.constant 0 : i32
    return %c0_i32, %c0_i32_0 : i32, i32
  }
  func.func @transform_12(%arg0: i32) -> (i32, i32) {
    %c0_i32 = arith.constant 0 : i32
    %c0_i32_0 = arith.constant 0 : i32
    %c0_i32_1 = arith.constant 0 : i32
    return %c0_i32, %c0_i32_0 : i32, i32
  }
  func.func @transform_13(%arg0: i32) -> (i32, i32, i32) {
    %c0_i32 = arith.constant 0 : i32
    %c0_i32_0 = arith.constant 0 : i32
    %c0_i32_1 = arith.constant 0 : i32
    return %arg0, %c0_i32, %c0_i32_0 : i32, i32, i32
  }
}

</mosaic_0001>

<llo_original>
// kernel: tpu_custom_call.1
$region0: #{tpu_custom_call.1}
  #allocation0 [shape = 'u32[]', space=smem, size = 0x4, offset = 0x4, fixed_abs, tag = 'smem constant byte address 0x4 - core index']
  #allocation1 [shape = 'u32[144,128]{1,0:T(1,128)}', space=vmem, size = 0x12000, scoped, tag = 'internal scratch']
  #allocation2 [shape = 'f32[2,18,512]{2,1,0:T(8,128)}', space=vmem, size = 0x18000, scoped, tag = 'scratch operand']
  %s0 = inlined_call_operand.vmem [shape: f32[2,18,64], index: 0, kind: input, shape index: {}]
  %s1 = inlined_call_operand.hbm [shape: f32[3,64,512], index: 1, kind: input, shape index: {}]
  %s2 = inlined_call_operand.hbm [shape: f32[1,512], index: 2, kind: input, shape index: {}]
  %s3 = inlined_call_operand.hbm [shape: f32[1,512], index: 3, kind: input, shape index: {}]
  %s4 = inlined_call_operand.hbm [shape: f32[1,512], index: 4, kind: input, shape index: {}]
  %s5 = inlined_call_operand.vmem [shape: f32[512,32], index: 5, kind: input, shape index: {}]
  %s6 = inlined_call_operand.hbm [shape: f32[32,512], index: 6, kind: input, shape index: {}]
  %s7 = inlined_call_operand.hbm [shape: f32[3,512,512], index: 7, kind: input, shape index: {}]
  %s8 = inlined_call_operand.hbm [shape: f32[1,512], index: 8, kind: input, shape index: {}]
  %s9 = inlined_call_operand.hbm [shape: f32[1,512], index: 9, kind: input, shape index: {}]
  %s10 = inlined_call_operand.hbm [shape: f32[1,512], index: 10, kind: input, shape index: {}]
  %s11 = inlined_call_operand.vmem [shape: f32[512,32], index: 11, kind: input, shape index: {}]
  %s12 = inlined_call_operand.hbm [shape: f32[32,512], index: 12, kind: input, shape index: {}]
  %s13 = inlined_call_operand.hbm [shape: f32[2,16,512], index: 13, kind: output, shape index: {}]
  %s14 = sld [smem:[#allocation0]]
  $region102: #{tpu_custom_call.1} parent=0
    _
  %s16 = ssub.s32 1, %s14
  %s17 = scalar_select 0, %s16, %s14
  $region1: #{tpu_custom_call.1} parent=0
    #allocation3 [shape = 'u8[393216]{0}', space=vmem, size = 0x60000, scoped, tag = 'input window, operand 1, single buffered']
    #allocation4 [shape = 's32[1]{0}', space=sflag, size = 0x4, scoped, tag = 'scoped memory for tpu_custom_call.1']
    #allocation5 [shape = 's32[1]{0}', space=sflag, size = 0x4, scoped, tag = 'scoped memory for tpu_custom_call.1']
    #allocation6 [shape = 'u8[2048]{0}', space=vmem, size = 0x800, scoped, tag = 'input window, operand 2, single buffered']
    #allocation7 [shape = 's32[1]{0}', space=sflag, size = 0x4, scoped, tag = 'scoped memory for tpu_custom_call.1']
    #allocation8 [shape = 'u8[2048]{0}', space=vmem, size = 0x800, scoped, tag = 'input window, operand 3, single buffered']
    #allocation9 [shape = 'u8[2048]{0}', space=vmem, size = 0x800, scoped, tag = 'input window, operand 4, single buffered']
    #allocation10 [shape = 's32[1]{0}', space=sflag, size = 0x4, scoped, tag = 'scoped memory for tpu_custom_call.1']
    #allocation11 [shape = 'u8[65536]{0}', space=vmem, size = 0x10000, scoped, tag = 'input window, operand 6, single buffered']
    #allocation12 [shape = 'u8[3145728]{0}', space=vmem, size = 0x300000, scoped, tag = 'input window, operand 7, single buffered']
    #allocation13 [shape = 's32[1]{0}', space=sflag, size = 0x4, scoped, tag = 'scoped memory for tpu_custom_call.1']
    #allocation14 [shape = 'u8[2048]{0}', space=vmem, size = 0x800, scoped, tag = 'input window, operand 8, single buffered']
    #allocation15 [shape = 'u8[2048]{0}', space=vmem, size = 0x800, scoped, tag = 'input window, operand 9, single buffered']
    #allocation16 [shape = 's32[1]{0}', space=sflag, size = 0x4, scoped, tag = 'scoped memory for tpu_custom_call.1']
    #allocation17 [shape = 'u8[2048]{0}', space=vmem, size = 0x800, scoped, tag = 'input window, operand 10, single buffered']
    #allocation18 [shape = 'u8[65536]{0}', space=vmem, size = 0x10000, scoped, tag = 'input window, operand 12, single buffered']
    #allocation19 [shape = 's32[1]{0}', space=sflag, size = 0x4, scoped, tag = 'scoped memory for tpu_custom_call.1']
    #allocation20 [shape = 'u8[65536]{0}', space=vmem, size = 0x10000, scoped, tag = 'output window, operand 0, single buffered']
    %18 = vsyncpa [#allocation4], 0
    %19 = vsyncpa [#allocation7], 0
    %20 = vsyncpa [#allocation10], 0
    %21 = vsyncpa [#allocation13], 0
    %22 = vsyncpa [#allocation16], 0
    %23 = vsyncpa [#allocation19], 0
    %24 = vsyncpa [#allocation5], 0
    // Predicated region
    $region2: #{tpu_custom_call.1} parent=1 // pred_check
      _
    $region3: #{tpu_custom_call.1} parent=1 // pred_check_branch
      %26 = sbr.rel (0) target = $region5
    $region4: #{tpu_custom_call.1} parent=1 // pred_region
      _
    $region5: #{tpu_custom_call.1} parent=1 // pred_fallthru
      _
    // Predicated region
    $region6: #{tpu_custom_call.1} parent=1 // pred_check
      _
    $region7: #{tpu_custom_call.1} parent=1 // pred_check_branch
      %28 = sbr.rel (0) target = $region9
    $region8: #{tpu_custom_call.1} parent=1 // pred_region
      %s30 = ssub.s32 12288, 12288
      %31 = vsyncadd [#allocation4], %s30
      %s32 = sshll.u32 [#allocation3], 4
      %s33 = int_to_ptr.vmem [resolvable:$true] %s32
      %38 = dma.hbm_to_vmem [thread:$0]  %s1, 12288, %s33, [#allocation4], 512, 512, 32
    $region9: #{tpu_custom_call.1} parent=1 // pred_fallthru
      _
    // Predicated region
    $region10: #{tpu_custom_call.1} parent=1 // pred_check
      _
    $region11: #{tpu_custom_call.1} parent=1 // pred_check_branch
      %40 = sbr.rel (0) target = $region13
    $region12: #{tpu_custom_call.1} parent=1 // pred_region
      %s42 = ssub.s32 64, 64
      %43 = vsyncadd [#allocation7], %s42
      %s45 = sshll.u32 [#allocation6], 4
      %s46 = int_to_ptr.vmem [resolvable:$true] %s45
      %48 = dma.hbm_to_vmem [thread:$0]  %s2, 64, %s46, [#allocation7]
    $region13: #{tpu_custom_call.1} parent=1 // pred_fallthru
      _
    // Predicated region
    $region14: #{tpu_custom_call.1} parent=1 // pred_check
      _
    $region15: #{tpu_custom_call.1} parent=1 // pred_check_branch
      %50 = sbr.rel (0) target = $region17
    $region16: #{tpu_custom_call.1} parent=1 // pred_region
      %s52 = ssub.s32 64, 64
      %53 = vsyncadd [#allocation7], %s52
      %s55 = sshll.u32 [#allocation8], 4
      %s56 = int_to_ptr.vmem [resolvable:$true] %s55
      %58 = dma.hbm_to_vmem [thread:$0]  %s3, 64, %s56, [#allocation7]
    $region17: #{tpu_custom_call.1} parent=1 // pred_fallthru
      _
    // Predicated region
    $region18: #{tpu_custom_call.1} parent=1 // pred_check
      _
    $region19: #{tpu_custom_call.1} parent=1 // pred_check_branch
      %60 = sbr.rel (0) target = $region21
    $region20: #{tpu_custom_call.1} parent=1 // pred_region
      %s62 = ssub.s32 64, 64
      %63 = vsyncadd [#allocation10], %s62
      %s65 = sshll.u32 [#allocation9], 4
      %s66 = int_to_ptr.vmem [resolvable:$true] %s65
      %68 = dma.hbm_to_vmem [thread:$0]  %s4, 64, %s66, [#allocation10]
    $region21: #{tpu_custom_call.1} parent=1 // pred_fallthru
      _
    // Predicated region
    $region22: #{tpu_custom_call.1} parent=1 // pred_check
      _
    $region23: #{tpu_custom_call.1} parent=1 // pred_check_branch
      %70 = sbr.rel (0) target = $region25
    $region24: #{tpu_custom_call.1} parent=1 // pred_region
      _
    $region25: #{tpu_custom_call.1} parent=1 // pred_fallthru
      _
    // Predicated region
    $region26: #{tpu_custom_call.1} parent=1 // pred_check
      _
    $region27: #{tpu_custom_call.1} parent=1 // pred_check_branch
      %72 = sbr.rel (0) target = $region29
    $region28: #{tpu_custom_call.1} parent=1 // pred_region
      %s74 = ssub.s32 2048, 2048
      %75 = vsyncadd [#allocation10], %s74
      %s76 = sshll.u32 [#allocation11], 4
      %s77 = int_to_ptr.vmem [resolvable:$true] %s76
      %82 = dma.hbm_to_vmem [thread:$0]  %s6, 2048, %s77, [#allocation10], 512, 512, 32
    $region29: #{tpu_custom_call.1} parent=1 // pred_fallthru
      _
    // Predicated region
    $region30: #{tpu_custom_call.1} parent=1 // pred_check
      _
    $region31: #{tpu_custom_call.1} parent=1 // pred_check_branch
      %84 = sbr.rel (0) target = $region33
    $region32: #{tpu_custom_call.1} parent=1 // pred_region
      %s86 = ssub.s32 98304, 98304
      %87 = vsyncadd [#allocation13], %s86
      %s88 = sshll.u32 [#allocation12], 4
      %s89 = int_to_ptr.vmem [resolvable:$true] %s88
      %94 = dma.hbm_to_vmem [thread:$0]  %s7, 98304, %s89, [#allocation13], 512, 512, 32
    $region33: #{tpu_custom_call.1} parent=1 // pred_fallthru
      _
    // Predicated region
    $region34: #{tpu_custom_call.1} parent=1 // pred_check
      _
    $region35: #{tpu_custom_call.1} parent=1 // pred_check_branch
      %96 = sbr.rel (0) target = $region37
    $region36: #{tpu_custom_call.1} parent=1 // pred_region
      %s98 = ssub.s32 64, 64
      %99 = vsyncadd [#allocation13], %s98
      %s101 = sshll.u32 [#allocation14], 4
      %s102 = int_to_ptr.vmem [resolvable:$true] %s101
      %104 = dma.hbm_to_vmem [thread:$0]  %s8, 64, %s102, [#allocation13]
    $region37: #{tpu_custom_call.1} parent=1 // pred_fallthru
      _
    // Predicated region
    $region38: #{tpu_custom_call.1} parent=1 // pred_check
      _
    $region39: #{tpu_custom_call.1} parent=1 // pred_check_branch
      %106 = sbr.rel (0) target = $region41
    $region40: #{tpu_custom_call.1} parent=1 // pred_region
      %s108 = ssub.s32 64, 64
      %109 = vsyncadd [#allocation16], %s108
      %s111 = sshll.u32 [#allocation15], 4
      %s112 = int_to_ptr.vmem [resolvable:$true] %s111
      %114 = dma.hbm_to_vmem [thread:$0]  %s9, 64, %s112, [#allocation16]
    $region41: #{tpu_custom_call.1} parent=1 // pred_fallthru
      _
    // Predicated region
    $region42: #{tpu_custom_call.1} parent=1 // pred_check
      _
    $region43: #{tpu_custom_call.1} parent=1 // pred_check_branch
      %116 = sbr.rel (0) target = $region45
    $region44: #{tpu_custom_call.1} parent=1 // pred_region
      %s118 = ssub.s32 64, 64
      %119 = vsyncadd [#allocation16], %s118
      %s121 = sshll.u32 [#allocation17], 4
      %s122 = int_to_ptr.vmem [resolvable:$true] %s121
      %124 = dma.hbm_to_vmem [thread:$0]  %s10, 64, %s122, [#allocation16]
    $region45: #{tpu_custom_call.1} parent=1 // pred_fallthru
      _
    // Predicated region
    $region46: #{tpu_custom_call.1} parent=1 // pred_check
      _
    $region47: #{tpu_custom_call.1} parent=1 // pred_check_branch
      %126 = sbr.rel (0) target = $region49
    $region48: #{tpu_custom_call.1} parent=1 // pred_region
      _
    $region49: #{tpu_custom_call.1} parent=1 // pred_fallthru
      _
    // Predicated region
    $region50: #{tpu_custom_call.1} parent=1 // pred_check
      _
    $region51: #{tpu_custom_call.1} parent=1 // pred_check_branch
      %128 = sbr.rel (0) target = $region53
    $region52: #{tpu_custom_call.1} parent=1 // pred_region
      %s130 = ssub.s32 2048, 2048
      %131 = vsyncadd [#allocation19], %s130
      %s132 = sshll.u32 [#allocation18], 4
      %s133 = int_to_ptr.vmem [resolvable:$true] %s132
      %138 = dma.hbm_to_vmem [thread:$0]  %s12, 2048, %s133, [#allocation19], 512, 512, 32
    $region53: #{tpu_custom_call.1} parent=1 // pred_fallthru
      _
    // Predicated region
    $region54: #{tpu_custom_call.1} parent=1 // pred_check
      _
    $region55: #{tpu_custom_call.1} parent=1 // pred_check_branch
      %140 = sbr.rel (0) target = $region57
    $region56: #{tpu_custom_call.1} parent=1 // pred_region
      %141 = dma.done [#allocation4], 12288
    $region57: #{tpu_custom_call.1} parent=1 // pred_fallthru
      _
    // Predicated region
    $region58: #{tpu_custom_call.1} parent=1 // pred_check
      _
    $region59: #{tpu_custom_call.1} parent=1 // pred_check_branch
      %143 = sbr.rel (0) target = $region61
    $region60: #{tpu_custom_call.1} parent=1 // pred_region
      %144 = dma.done [#allocation7], 64
    $region61: #{tpu_custom_call.1} parent=1 // pred_fallthru
      _
    // Predicated region
    $region62: #{tpu_custom_call.1} parent=1 // pred_check
      _
    $region63: #{tpu_custom_call.1} parent=1 // pred_check_branch
      %146 = sbr.rel (0) target = $region65
    $region64: #{tpu_custom_call.1} parent=1 // pred_region
      %147 = dma.done [#allocation7], 64
    $region65: #{tpu_custom_call.1} parent=1 // pred_fallthru
      _
    // Predicated region
    $region66: #{tpu_custom_call.1} parent=1 // pred_check
      _
    $region67: #{tpu_custom_call.1} parent=1 // pred_check_branch
      %149 = sbr.rel (0) target = $region69
    $region68: #{tpu_custom_call.1} parent=1 // pred_region
      %150 = dma.done [#allocation10], 64
    $region69: #{tpu_custom_call.1} parent=1 // pred_fallthru
      _
    // Predicated region
    $region70: #{tpu_custom_call.1} parent=1 // pred_check
      _
    $region71: #{tpu_custom_call.1} parent=1 // pred_check_branch
      %152 = sbr.rel (0) target = $region73
    $region72: #{tpu_custom_call.1} parent=1 // pred_region
      %153 = dma.done [#allocation10], 2048
    $region73: #{tpu_custom_call.1} parent=1 // pred_fallthru
      _
    // Predicated region
    $region74: #{tpu_custom_call.1} parent=1 // pred_check
      _
    $region75: #{tpu_custom_call.1} parent=1 // pred_check_branch
      %155 = sbr.rel (0) target = $region77
    $region76: #{tpu_custom_call.1} parent=1 // pred_region
      %156 = dma.done [#allocation13], 98304
    $region77: #{tpu_custom_call.1} parent=1 // pred_fallthru
      _
    // Predicated region
    $region78: #{tpu_custom_call.1} parent=1 // pred_check
      _
    $region79: #{tpu_custom_call.1} parent=1 // pred_check_branch
      %158 = sbr.rel (0) target = $region81
    $region80: #{tpu_custom_call.1} parent=1 // pred_region
      %159 = dma.done [#allocation13], 64
    $region81: #{tpu_custom_call.1} parent=1 // pred_fallthru
      _
    // Predicated region
    $region82: #{tpu_custom_call.1} parent=1 // pred_check
      _
    $region83: #{tpu_custom_call.1} parent=1 // pred_check_branch
      %161 = sbr.rel (0) target = $region85
    $region84: #{tpu_custom_call.1} parent=1 // pred_region
      %162 = dma.done [#allocation16], 64
    $region85: #{tpu_custom_call.1} parent=1 // pred_fallthru
      _
    // Predicated region
    $region86: #{tpu_custom_call.1} parent=1 // pred_check
      _
    $region87: #{tpu_custom_call.1} parent=1 // pred_check_branch
      %164 = sbr.rel (0) target = $region89
    $region88: #{tpu_custom_call.1} parent=1 // pred_region
      %165 = dma.done [#allocation16], 64
    $region89: #{tpu_custom_call.1} parent=1 // pred_fallthru
      _
    // Predicated region
    $region90: #{tpu_custom_call.1} parent=1 // pred_check
      _
    $region91: #{tpu_custom_call.1} parent=1 // pred_check_branch
      %167 = sbr.rel (0) target = $region93
    $region92: #{tpu_custom_call.1} parent=1 // pred_region
      %168 = dma.done [#allocation19], 2048
    $region93: #{tpu_custom_call.1} parent=1 // pred_fallthru
      _
    %v169 = vld [vmem:[#allocation6] sm:$0xf]
    %v170 = vld [vmem:[%s0] sm:$0xff]
    %v171 = vld [vmem:[%s0 + $0x8] sm:$0xff]
    %v172 = vld [vmem:[%s0 + $0x18] sm:$0xff]
    %v173 = vld [vmem:[%s0 + $0x20] sm:$0xff]
    %v174 = vld [vmem:[#allocation3] sm:$0xff]
    %v175 = vld [vmem:[#allocation3 + $0x8] sm:$0xff]
    %v176 = vld [vmem:[#allocation3 + $0x10] sm:$0xff]
    %v177 = vld [vmem:[#allocation3 + $0x18] sm:$0xff]
    %v178 = vld [vmem:[#allocation3 + $0x20] sm:$0xff]
    %v179 = vld [vmem:[#allocation3 + $0x28] sm:$0xff]
    %v180 = vld [vmem:[#allocation3 + $0x30] sm:$0xff]
    %v181 = vld [vmem:[#allocation3 + $0x38] sm:$0xff]
    %v182 = vld [vmem:[#allocation3 + $0x40] sm:$0xff]
    %v183 = vld [vmem:[#allocation3 + $0x48] sm:$0xff]
    %v184 = vld [vmem:[#allocation3 + $0x50] sm:$0xff]
    %v185 = vld [vmem:[#allocation3 + $0x58] sm:$0xff]
    %v186 = vld [vmem:[#allocation3 + $0x60] sm:$0xff]
    %v187 = vld [vmem:[#allocation3 + $0x68] sm:$0xff]
    %v188 = vld [vmem:[#allocation3 + $0x70] sm:$0xff]
    %v189 = vld [vmem:[#allocation3 + $0x78] sm:$0xff]
    %v190 = vld [vmem:[#allocation3 + $0x80] sm:$0xff]
    %v191 = vld [vmem:[#allocation3 + $0x88] sm:$0xff]
    %v192 = vld [vmem:[#allocation3 + $0x90] sm:$0xff]
    %v193 = vld [vmem:[#allocation3 + $0x98] sm:$0xff]
    %v194 = vld [vmem:[#allocation3 + $0xa0] sm:$0xff]
    %v195 = vld [vmem:[#allocation3 + $0xa8] sm:$0xff]
    %v196 = vld [vmem:[#allocation3 + $0xb0] sm:$0xff]
    %v197 = vld [vmem:[#allocation3 + $0xb8] sm:$0xff]
    %v198 = vld [vmem:[#allocation3 + $0xc0] sm:$0xff]
    %v199 = vld [vmem:[#allocation3 + $0xc8] sm:$0xff]
    %v200 = vld [vmem:[#allocation3 + $0xd0] sm:$0xff]
    %v201 = vld [vmem:[#allocation3 + $0xd8] sm:$0xff]
    %v202 = vld [vmem:[#allocation3 + $0xe0] sm:$0xff]
    %v203 = vld [vmem:[#allocation3 + $0xe8] sm:$0xff]
    %v204 = vld [vmem:[#allocation3 + $0xf0] sm:$0xff]
    %v205 = vld [vmem:[#allocation3 + $0xf8] sm:$0xff]
    %v207 = vlaneseq
    %v208 = vshrl.u32 %v207, 7
    %v209 = vsub.s32 0, %v208
    %v210 = vrot.slane %v169, %v209
    %v211 = vlaneseq
    %v212 = vshrl.u32 %v211, 7
    %v213 = vsub.s32 1, %v212
    %v214 = vrot.slane %v169, %v213
    %v215 = vlaneseq
    %v216 = vshrl.u32 %v215, 7
    %v217 = vsub.s32 2, %v216
    %v218 = vrot.slane %v169, %v217
    %v219 = vlaneseq
    %v220 = vshrl.u32 %v219, 7
    %v221 = vsub.s32 3, %v220
    %v222 = vrot.slane %v169, %v221
    %vm227 = vcmask 523264
    %v229 = vsel %vm227, %v170, 0
    %v232 = vsel %vm227, %v171, 0
    %v235 = vsel %vm227, %v172, 0
    %v238 = vsel %vm227, %v173, 0
    %240 = vmatprep.subr.mxu0 %v175
    %241 = vmatpush1.msra.mxu0 %v174
    %242 = vmatprep.subr.mxu0 %v179
    %243 = vmatpush1.msra.mxu0 %v178
    %244 = vmatprep.subr.mxu0 %v183
    %245 = vmatpush1.msra.mxu0 %v182
    %246 = vmatprep.subr.mxu0 %v187
    %247 = vmatpush1.msra.mxu0 %v186
    %248 = vmatprep.subr.mxu0 %v191
    %249 = vmatpush1.msra.mxu0 %v190
    %250 = vmatprep.subr.mxu0 %v195
    %251 = vmatpush1.msra.mxu0 %v194
    %252 = vmatprep.subr.mxu0 %v199
    %253 = vmatpush1.msra.mxu0 %v198
    %254 = vmatprep.subr.mxu0 %v203
    %255 = vmatpush1.msra.mxu0 %v202
    %256 = vmatprep.subr.mxu0 0.0
    %257 = vmatpush1.msra.mxu0 0.0
    %258 = vmatprep.subr.mxu0 0.0
    %259 = vmatpush1.msra.mxu0 0.0
    %260 = vmatprep.subr.mxu0 0.0
    %261 = vmatpush1.msra.mxu0 0.0
    %262 = vmatprep.subr.mxu0 0.0
    %263 = vmatpush1.msra.mxu0 0.0
    %264 = vmatprep.subr.mxu0 0.0
    %265 = vmatpush1.msra.mxu0 0.0
    %266 = vmatprep.subr.mxu0 0.0
    %267 = vmatpush1.msra.mxu0 0.0
    %268 = vmatprep.subr.mxu0 0.0
    %269 = vmatpush1.msra.mxu0 0.0
    %270 = vmatprep.subr.mxu0 0.0
    %271 = vmatpush1.msra.mxu0 0.0
    %272 = vmatprep.subr.mxu0 0.0
    %273 = vmatpush1.msra.mxu0 0.0
    %274 = vmatprep.subr.mxu0 0.0
    %275 = vmatpush1.msra.mxu0 0.0
    %276 = vmatprep.subr.mxu0 0.0
    %277 = vmatpush1.msra.mxu0 0.0
    %278 = vmatprep.subr.mxu0 0.0
    %279 = vmatpush1.msra.mxu0 0.0
    %280 = vmatprep.subr.mxu0 0.0
    %281 = vmatpush1.msra.mxu0 0.0
    %282 = vmatprep.subr.mxu0 0.0
    %283 = vmatpush1.msra.mxu0 0.0
    %284 = vmatprep.subr.mxu0 0.0
    %285 = vmatpush1.msra.mxu0 0.0
    %286 = vmatprep.subr.mxu0 0.0
    %287 = vmatpush1.msra.mxu0 0.0
    %288 = vmatprep.subr.mxu0 0.0
    %289 = vmatpush1.msra.mxu0 0.0
    %290 = vmatprep.subr.mxu0 0.0
    %291 = vmatpush1.msra.mxu0 0.0
    %292 = vmatprep.subr.mxu0 0.0
    %293 = vmatpush1.msra.mxu0 0.0
    %294 = vmatprep.subr.mxu0 0.0
    %295 = vmatpush1.msra.mxu0 0.0
    %296 = vmatprep.subr.mxu0 0.0
    %297 = vmatpush1.msra.mxu0 0.0
    %298 = vmatprep.subr.mxu0 0.0
    %299 = vmatpush1.msra.mxu0 0.0
    %300 = vmatprep.subr.mxu0 0.0
    %301 = vmatpush1.msra.mxu0 0.0
    %302 = vmatprep.subr.mxu0 0.0
    %303 = vmatpush1.msra.mxu0 0.0
    %304 = vmatprep.mubr.f32.mxu0 0.0
    %305 = vmatmul.mubr.f32.gmra.mrb[0].mxu0 %v229
    %v306 = vpop.f32.mrb[0].mxu0
    %v307 = vadd.f32 %v210, %v306
    %v308 = vpop.f32.mrb[0].mxu0
    %v309 = vadd.f32 %v214, %v308
    %310 = vmatprep.mubr.f32.mxu0 0.0
    %311 = vmatmul.mubr.f32.gmra.mrb[0].mxu0 %v232
    %v312 = vpop.f32.mrb[0].mxu0
    %v313 = vadd.f32 %v210, %v312
    %v314 = vpop.f32.mrb[0].mxu0
    %v315 = vadd.f32 %v214, %v314
    %316 = vmatprep.mubr.f32.mxu0 0.0
    %317 = vmatmul.mubr.f32.gmra.mrb[0].mxu0 %v235
    %v318 = vpop.f32.mrb[0].mxu0
    %v319 = vadd.f32 %v210, %v318
    %v320 = vpop.f32.mrb[0].mxu0
    %v321 = vadd.f32 %v214, %v320
    %322 = vmatprep.mubr.f32.mxu0 0.0
    %323 = vmatmul.mubr.f32.gmra.mrb[0].mxu0 %v238
    %v324 = vpop.f32.mrb[0].mxu0
    %v325 = vadd.f32 %v210, %v324
    %v326 = vpop.f32.mrb[0].mxu0
    %v327 = vadd.f32 %v214, %v326
    %328 = vdwg.mxu0
    %329 = vmatprep.subr.mxu0 %v177
    %330 = vmatpush1.msra.mxu0 %v176
    %331 = vmatprep.subr.mxu0 %v181
    %332 = vmatpush1.msra.mxu0 %v180
    %333 = vmatprep.subr.mxu0 %v185
    %334 = vmatpush1.msra.mxu0 %v184
    %335 = vmatprep.subr.mxu0 %v189
    %336 = vmatpush1.msra.mxu0 %v188
    %337 = vmatprep.subr.mxu0 %v193
    %338 = vmatpush1.msra.mxu0 %v192
    %339 = vmatprep.subr.mxu0 %v197
    %340 = vmatpush1.msra.mxu0 %v196
    %341 = vmatprep.subr.mxu0 %v201
    %342 = vmatpush1.msra.mxu0 %v200
    %343 = vmatprep.subr.mxu0 %v205
    %344 = vmatpush1.msra.mxu0 %v204
    %345 = vmatprep.subr.mxu0 0.0
    %346 = vmatpush1.msra.mxu0 0.0
    %347 = vmatprep.subr.mxu0 0.0
    %348 = vmatpush1.msra.mxu0 0.0
    %349 = vmatprep.subr.mxu0 0.0
    %350 = vmatpush1.msra.mxu0 0.0
    %351 = vmatprep.subr.mxu0 0.0
    %352 = vmatpush1.msra.mxu0 0.0
    %353 = vmatprep.subr.mxu0 0.0
    %354 = vmatpush1.msra.mxu0 0.0
    %355 = vmatprep.subr.mxu0 0.0
    %356 = vmatpush1.msra.mxu0 0.0
    %357 = vmatprep.subr.mxu0 0.0
    %358 = vmatpush1.msra.mxu0 0.0
    %359 = vmatprep.subr.mxu0 0.0
    %360 = vmatpush1.msra.mxu0 0.0
    %361 = vmatprep.subr.mxu0 0.0
    %362 = vmatpush1.msra.mxu0 0.0
    %363 = vmatprep.subr.mxu0 0.0
    %364 = vmatpush1.msra.mxu0 0.0
    %365 = vmatprep.subr.mxu0 0.0
    %366 = vmatpush1.msra.mxu0 0.0
    %367 = vmatprep.subr.mxu0 0.0
    %368 = vmatpush1.msra.mxu0 0.0
    %369 = vmatprep.subr.mxu0 0.0
    %370 = vmatpush1.msra.mxu0 0.0
    %371 = vmatprep.subr.mxu0 0.0
    %372 = vmatpush1.msra.mxu0 0.0
    %373 = vmatprep.subr.mxu0 0.0
    %374 = vmatpush1.msra.mxu0 0.0
    %375 = vmatprep.subr.mxu0 0.0
    %376 = vmatpush1.msra.mxu0 0.0
    %377 = vmatprep.subr.mxu0 0.0
    %378 = vmatpush1.msra.mxu0 0.0
    %379 = vmatprep.subr.mxu0 0.0
    %380 = vmatpush1.msra.mxu0 0.0
    %381 = vmatprep.subr.mxu0 0.0
    %382 = vmatpush1.msra.mxu0 0.0
    %383 = vmatprep.subr.mxu0 0.0
    %384 = vmatpush1.msra.mxu0 0.0
    %385 = vmatprep.subr.mxu0 0.0
    %386 = vmatpush1.msra.mxu0 0.0
    %387 = vmatprep.subr.mxu0 0.0
    %388 = vmatpush1.msra.mxu0 0.0
    %389 = vmatprep.subr.mxu0 0.0
    %390 = vmatpush1.msra.mxu0 0.0
    %391 = vmatprep.subr.mxu0 0.0
    %392 = vmatpush1.msra.mxu0 0.0
    %393 = vmatprep.mubr.f32.mxu0 0.0
    %394 = vmatmul.mubr.f32.gmra.mrb[0].mxu0 %v229
    %v395 = vpop.f32.mrb[0].mxu0
    %v396 = vadd.f32 %v218, %v395
    %v397 = vpop.f32.mrb[0].mxu0
    %v398 = vadd.f32 %v222, %v397
    %399 = vmatprep.mubr.f32.mxu0 0.0
    %400 = vmatmul.mubr.f32.gmra.mrb[0].mxu0 %v232
    %v401 = vpop.f32.mrb[0].mxu0
    %v402 = vadd.f32 %v218, %v401
    %v403 = vpop.f32.mrb[0].mxu0
    %v404 = vadd.f32 %v222, %v403
    %405 = vmatprep.mubr.f32.mxu0 0.0
    %406 = vmatmul.mubr.f32.gmra.mrb[0].mxu0 %v235
    %v407 = vpop.f32.mrb[0].mxu0
    %v408 = vadd.f32 %v218, %v407
    %v409 = vpop.f32.mrb[0].mxu0
    %v410 = vadd.f32 %v222, %v409
    %411 = vmatprep.mubr.f32.mxu0 0.0
    %412 = vmatmul.mubr.f32.gmra.mrb[0].mxu0 %v238
    %v413 = vpop.f32.mrb[0].mxu0
    %v414 = vadd.f32 %v218, %v413
    %v415 = vpop.f32.mrb[0].mxu0
    %v416 = vadd.f32 %v222, %v415
    %417 = vdwg.mxu0
    %v418 = vld [vmem:[%s0 + $0x1] sm:$0xff]
    %v419 = vld [vmem:[%s0 + $0x9] sm:$0xff]
    %v420 = vld [vmem:[%s0 + $0x19] sm:$0xff]
    %v421 = vld [vmem:[%s0 + $0x21] sm:$0xff]
    %s422 = scalar_lea.vmem [#allocation3], 256
    %v423 = vld [vmem:[%s422] sm:$0xff]
    %v424 = vld [vmem:[%s422 + $0x8] sm:$0xff]
    %v425 = vld [vmem:[%s422 + $0x10] sm:$0xff]
    %v426 = vld [vmem:[%s422 + $0x18] sm:$0xff]
    %v427 = vld [vmem:[%s422 + $0x20] sm:$0xff]
    %v428 = vld [vmem:[%s422 + $0x28] sm:$0xff]
    %v429 = vld [vmem:[%s422 + $0x30] sm:$0xff]
    %v430 = vld [vmem:[%s422 + $0x38] sm:$0xff]
    %v431 = vld [vmem:[%s422 + $0x40] sm:$0xff]
    %v432 = vld [vmem:[%s422 + $0x48] sm:$0xff]
    %v433 = vld [vmem:[%s422 + $0x50] sm:$0xff]
    %v434 = vld [vmem:[%s422 + $0x58] sm:$0xff]
    %v435 = vld [vmem:[%s422 + $0x60] sm:$0xff]
    %v436 = vld [vmem:[%s422 + $0x68] sm:$0xff]
    %v437 = vld [vmem:[%s422 + $0x70] sm:$0xff]
    %v438 = vld [vmem:[%s422 + $0x78] sm:$0xff]
    %v439 = vld [vmem:[%s422 + $0x80] sm:$0xff]
    %v440 = vld [vmem:[%s422 + $0x88] sm:$0xff]
    %v441 = vld [vmem:[%s422 + $0x90] sm:$0xff]
    %v442 = vld [vmem:[%s422 + $0x98] sm:$0xff]
    %v443 = vld [vmem:[%s422 + $0xa0] sm:$0xff]
    %v444 = vld [vmem:[%s422 + $0xa8] sm:$0xff]
    %v445 = vld [vmem:[%s422 + $0xb0] sm:$0xff]
    %v446 = vld [vmem:[%s422 + $0xb8] sm:$0xff]
    %v447 = vld [vmem:[%s422 + $0xc0] sm:$0xff]
    %v448 = vld [vmem:[%s422 + $0xc8] sm:$0xff]
    %v449 = vld [vmem:[%s422 + $0xd0] sm:$0xff]
    %v450 = vld [vmem:[%s422 + $0xd8] sm:$0xff]
    %v451 = vld [vmem:[%s422 + $0xe0] sm:$0xff]
    %v452 = vld [vmem:[%s422 + $0xe8] sm:$0xff]
    %v453 = vld [vmem:[%s422 + $0xf0] sm:$0xff]
    %v454 = vld [vmem:[%s422 + $0xf8] sm:$0xff]
    %v456 = vsel %vm227, %v418, 0
    %v459 = vsel %vm227, %v419, 0
    %v462 = vsel %vm227, %v420, 0
    %v465 = vsel %vm227, %v421, 0
    %467 = vmatprep.subr.mxu0 %v424
    %468 = vmatpush1.msra.mxu0 %v423
    %469 = vmatprep.subr.mxu0 %v428
    %470 = vmatpush1.msra.mxu0 %v427
    %471 = vmatprep.subr.mxu0 %v432
    %472 = vmatpush1.msra.mxu0 %v431
    %473 = vmatprep.subr.mxu0 %v436
    %474 = vmatpush1.msra.mxu0 %v435
    %475 = vmatprep.subr.mxu0 %v440
    %476 = vmatpush1.msra.mxu0 %v439
    %477 = vmatprep.subr.mxu0 %v444
    %478 = vmatpush1.msra.mxu0 %v443
    %479 = vmatprep.subr.mxu0 %v448
    %480 = vmatpush1.msra.mxu0 %v447
    %481 = vmatprep.subr.mxu0 %v452
    %482 = vmatpush1.msra.mxu0 %v451
    %483 = vmatprep.subr.mxu0 0.0
    %484 = vmatpush1.msra.mxu0 0.0
    %485 = vmatprep.subr.mxu0 0.0
    %486 = vmatpush1.msra.mxu0 0.0
    %487 = vmatprep.subr.mxu0 0.0
    %488 = vmatpush1.msra.mxu0 0.0
    %489 = vmatprep.subr.mxu0 0.0
    %490 = vmatpush1.msra.mxu0 0.0
    %491 = vmatprep.subr.mxu0 0.0
    %492 = vmatpush1.msra.mxu0 0.0
    %493 = vmatprep.subr.mxu0 0.0
    %494 = vmatpush1.msra.mxu0 0.0
    %495 = vmatprep.subr.mxu0 0.0
    %496 = vmatpush1.msra.mxu0 0.0
    %497 = vmatprep.subr.mxu0 0.0
    %498 = vmatpush1.msra.mxu0 0.0
    %499 = vmatprep.subr.mxu0 0.0
    %500 = vmatpush1.msra.mxu0 0.0
    %501 = vmatprep.subr.mxu0 0.0
    %502 = vmatpush1.msra.mxu0 0.0
    %503 = vmatprep.subr.mxu0 0.0
    %504 = vmatpush1.msra.mxu0 0.0
    %505 = vmatprep.subr.mxu0 0.0
    %506 = vmatpush1.msra.mxu0 0.0
    %507 = vmatprep.subr.mxu0 0.0
    %508 = vmatpush1.msra.mxu0 0.0
    %509 = vmatprep.subr.mxu0 0.0
    %510 = vmatpush1.msra.mxu0 0.0
    %511 = vmatprep.subr.mxu0 0.0
    %512 = vmatpush1.msra.mxu0 0.0
    %513 = vmatprep.subr.mxu0 0.0
    %514 = vmatpush1.msra.mxu0 0.0
    %515 = vmatprep.subr.mxu0 0.0
    %516 = vmatpush1.msra.mxu0 0.0
    %517 = vmatprep.subr.mxu0 0.0
    %518 = vmatpush1.msra.mxu0 0.0
    %519 = vmatprep.subr.mxu0 0.0
    %520 = vmatpush1.msra.mxu0 0.0
    %521 = vmatprep.subr.mxu0 0.0
    %522 = vmatpush1.msra.mxu0 0.0
    %523 = vmatprep.subr.mxu0 0.0
    %524 = vmatpush1.msra.mxu0 0.0
    %525 = vmatprep.subr.mxu0 0.0
    %526 = vmatpush1.msra.mxu0 0.0
    %527 = vmatprep.subr.mxu0 0.0
    %528 = vmatpush1.msra.mxu0 0.0
    %529 = vmatprep.subr.mxu0 0.0
    %530 = vmatpush1.msra.mxu0 0.0
    %531 = vmatprep.mubr.f32.mxu0 0.0
    %532 = vmatmul.mubr.f32.gmra.mrb[0].mxu0 %v456
    %v533 = vpop.f32.mrb[0].mxu0
    %v534 = vadd.f32 0.0, %v533
    %v535 = vpop.f32.mrb[0].mxu0
    %v536 = vadd.f32 0.0, %v535
    %537 = vmatprep.mubr.f32.mxu0 0.0
    %538 = vmatmul.mubr.f32.gmra.mrb[0].mxu0 %v459
    %v539 = vpop.f32.mrb[0].mxu0
    %v540 = vadd.f32 0.0, %v539
    %v541 = vpop.f32.mrb[0].mxu0
    %v542 = vadd.f32 0.0, %v541
    %543 = vmatprep.mubr.f32.mxu0 0.0
    %544 = vmatmul.mubr.f32.gmra.mrb[0].mxu0 %v462
    %v545 = vpop.f32.mrb[0].mxu0
    %v546 = vadd.f32 0.0, %v545
    %v547 = vpop.f32.mrb[0].mxu0
    %v548 = vadd.f32 0.0, %v547
    %549 = vmatprep.mubr.f32.mxu0 0.0
    %550 = vmatmul.mubr.f32.gmra.mrb[0].mxu0 %v465
    %v551 = vpop.f32.mrb[0].mxu0
    %v552 = vadd.f32 0.0, %v551
    %v553 = vpop.f32.mrb[0].mxu0
    %v554 = vadd.f32 0.0, %v553
    %555 = vdwg.mxu0
    %556 = vmatprep.subr.mxu0 %v426
    %557 = vmatpush1.msra.mxu0 %v425
    %558 = vmatprep.subr.mxu0 %v430
    %559 = vmatpush1.msra.mxu0 %v429
    %560 = vmatprep.subr.mxu0 %v434
    %561 = vmatpush1.msra.mxu0 %v433
    %562 = vmatprep.subr.mxu0 %v438
    %563 = vmatpush1.msra.mxu0 %v437
    %564 = vmatprep.subr.mxu0 %v442
    %565 = vmatpush1.msra.mxu0 %v441
    %566 = vmatprep.subr.mxu0 %v446
    %567 = vmatpush1.msra.mxu0 %v445
    %568 = vmatprep.subr.mxu0 %v450
    %569 = vmatpush1.msra.mxu0 %v449
    %570 = vmatprep.subr.mxu0 %v454
    %571 = vmatpush1.msra.mxu0 %v453
    %572 = vmatprep.subr.mxu0 0.0
    %573 = vmatpush1.msra.mxu0 0.0
    %574 = vmatprep.subr.mxu0 0.0
    %575 = vmatpush1.msra.mxu0 0.0
    %576 = vmatprep.subr.mxu0 0.0
    %577 = vmatpush1.msra.mxu0 0.0
    %578 = vmatprep.subr.mxu0 0.0
    %579 = vmatpush1.msra.mxu0 0.0
    %580 = vmatprep.subr.mxu0 0.0
    %581 = vmatpush1.msra.mxu0 0.0
    %582 = vmatprep.subr.mxu0 0.0
    %583 = vmatpush1.msra.mxu0 0.0
    %584 = vmatprep.subr.mxu0 0.0
    %585 = vmatpush1.msra.mxu0 0.0
    %586 = vmatprep.subr.mxu0 0.0
    %587 = vmatpush1.msra.mxu0 0.0
    %588 = vmatprep.subr.mxu0 0.0
    %589 = vmatpush1.msra.mxu0 0.0
    %590 = vmatprep.subr.mxu0 0.0
    %591 = vmatpush1.msra.mxu0 0.0
    %592 = vmatprep.subr.mxu0 0.0
    %593 = vmatpush1.msra.mxu0 0.0
    %594 = vmatprep.subr.mxu0 0.0
    %595 = vmatpush1.msra.mxu0 0.0
    %596 = vmatprep.subr.mxu0 0.0
    %597 = vmatpush1.msra.mxu0 0.0
    %598 = vmatprep.subr.mxu0 0.0
    %599 = vmatpush1.msra.mxu0 0.0
    %600 = vmatprep.subr.mxu0 0.0
    %601 = vmatpush1.msra.mxu0 0.0
    %602 = vmatprep.subr.mxu0 0.0
    %603 = vmatpush1.msra.mxu0 0.0
    %604 = vmatprep.subr.mxu0 0.0
    %605 = vmatpush1.msra.mxu0 0.0
    %606 = vmatprep.subr.mxu0 0.0
    %607 = vmatpush1.msra.mxu0 0.0
    %608 = vmatprep.subr.mxu0 0.0
    %609 = vmatpush1.msra.mxu0 0.0
    %610 = vmatprep.subr.mxu0 0.0
    %611 = vmatpush1.msra.mxu0 0.0
    %612 = vmatprep.subr.mxu0 0.0
    %613 = vmatpush1.msra.mxu0 0.0
    %614 = vmatprep.subr.mxu0 0.0
    %615 = vmatpush1.msra.mxu0 0.0
    %616 = vmatprep.subr.mxu0 0.0
    %617 = vmatpush1.msra.mxu0 0.0
    %618 = vmatprep.subr.mxu0 0.0
    %619 = vmatpush1.msra.mxu0 0.0
    %620 = vmatprep.mubr.f32.mxu0 0.0
    %621 = vmatmul.mubr.f32.gmra.mrb[0].mxu0 %v456
    %v622 = vpop.f32.mrb[0].mxu0
    %v623 = vadd.f32 0.0, %v622
    %v624 = vpop.f32.mrb[0].mxu0
    %v625 = vadd.f32 0.0, %v624
    %626 = vmatprep.mubr.f32.mxu0 0.0
    %627 = vmatmul.mubr.f32.gmra.mrb[0].mxu0 %v459
    %v628 = vpop.f32.mrb[0].mxu0
    %v629 = vadd.f32 0.0, %v628
    %v630 = vpop.f32.mrb[0].mxu0
    %v631 = vadd.f32 0.0, %v630
    %632 = vmatprep.mubr.f32.mxu0 0.0
    %633 = vmatmul.mubr.f32.gmra.mrb[0].mxu0 %v462
    %v634 = vpop.f32.mrb[0].mxu0
    %v635 = vadd.f32 0.0, %v634
    %v636 = vpop.f32.mrb[0].mxu0
    %v637 = vadd.f32 0.0, %v636
    %638 = vmatprep.mubr.f32.mxu0 0.0
    %639 = vmatmul.mubr.f32.gmra.mrb[0].mxu0 %v465
    %v640 = vpop.f32.mrb[0].mxu0
    %v641 = vadd.f32 0.0, %v640
    %v642 = vpop.f32.mrb[0].mxu0
    %v643 = vadd.f32 0.0, %v642
    %644 = vdwg.mxu0
    %v645 = vadd.f32 %v307, %v534
    %v646 = vadd.f32 %v309, %v536
    %v647 = vadd.f32 %v396, %v623
    %v648 = vadd.f32 %v398, %v625
    %v649 = vadd.f32 %v313, %v540
    %v650 = vadd.f32 %v315, %v542
    %v651 = vadd.f32 %v402, %v629
    %v652 = vadd.f32 %v404, %v631
    %v653 = vadd.f32 %v319, %v546
    %v654 = vadd.f32 %v321, %v548
    %v655 = vadd.f32 %v408, %v635
    %v656 = vadd.f32 %v410, %v637
    %v657 = vadd.f32 %v325, %v552
    %v658 = vadd.f32 %v327, %v554
    %v659 = vadd.f32 %v414, %v641
    %v660 = vadd.f32 %v416, %v643
    %v661 = vld [vmem:[%s0 + $0x2] sm:$0xff]
    %v662 = vld [vmem:[%s0 + $0xa] sm:$0xff]
    %v663 = vld [vmem:[%s0 + $0x1a] sm:$0xff]
    %v664 = vld [vmem:[%s0 + $0x22] sm:$0xff]
    %s665 = scalar_lea.vmem [#allocation3], 512
    %v666 = vld [vmem:[%s665] sm:$0xff]
    %v667 = vld [vmem:[%s665 + $0x8] sm:$0xff]
    %v668 = vld [vmem:[%s665 + $0x10] sm:$0xff]
    %v669 = vld [vmem:[%s665 + $0x18] sm:$0xff]
    %v670 = vld [vmem:[%s665 + $0x20] sm:$0xff]
    %v671 = vld [vmem:[%s665 + $0x28] sm:$0xff]
    %v672 = vld [vmem:[%s665 + $0x30] sm:$0xff]
    %v673 = vld [vmem:[%s665 + $0x38] sm:$0xff]
    %v674 = vld [vmem:[%s665 + $0x40] sm:$0xff]
    %v675 = vld [vmem:[%s665 + $0x48] sm:$0xff]
    %v676 = vld [vmem:[%s665 + $0x50] sm:$0xff]
    %v677 = vld [vmem:[%s665 + $0x58] sm:$0xff]
    %v678 = vld [vmem:[%s665 + $0x60] sm:$0xff]
    %v679 = vld [vmem:[%s665 + $0x68] sm:$0xff]
    %v680 = vld [vmem:[%s665 + $0x70] sm:$0xff]
    %v681 = vld [vmem:[%s665 + $0x78] sm:$0xff]
    %v682 = vld [vmem:[%s665 + $0x80] sm:$0xff]
    %v683 = vld [vmem:[%s665 + $0x88] sm:$0xff]
    %v684 = vld [vmem:[%s665 + $0x90] sm:$0xff]
    %v685 = vld [vmem:[%s665 + $0x98] sm:$0xff]
    %v686 = vld [vmem:[%s665 + $0xa0] sm:$0xff]
    %v687 = vld [vmem:[%s665 + $0xa8] sm:$0xff]
    %v688 = vld [vmem:[%s665 + $0xb0] sm:$0xff]
    %v689 = vld [vmem:[%s665 + $0xb8] sm:$0xff]
    %v690 = vld [vmem:[%s665 + $0xc0] sm:$0xff]
    %v691 = vld [vmem:[%s665 + $0xc8] sm:$0xff]
    %v692 = vld [vmem:[%s665 + $0xd0] sm:$0xff]
    %v693 = vld [vmem:[%s665 + $0xd8] sm:$0xff]
    %v694 = vld [vmem:[%s665 + $0xe0] sm:$0xff]
    %v695 = vld [vmem:[%s665 + $0xe8] sm:$0xff]
    %v696 = vld [vmem:[%s665 + $0xf0] sm:$0xff]
    %v697 = vld [vmem:[%s665 + $0xf8] sm:$0xff]
    %v699 = vsel %vm227, %v661, 0
    %v702 = vsel %vm227, %v662, 0
    %v705 = vsel %vm227, %v663, 0
    %v708 = vsel %vm227, %v664, 0
    %710 = vmatprep.subr.mxu0 %v667
    %711 = vmatpush1.msra.mxu0 %v666
    %712 = vmatprep.subr.mxu0 %v671
    %713 = vmatpush1.msra.mxu0 %v670
    %714 = vmatprep.subr.mxu0 %v675
    %715 = vmatpush1.msra.mxu0 %v674
    %716 = vmatprep.subr.mxu0 %v679
    %717 = vmatpush1.msra.mxu0 %v678
    %718 = vmatprep.subr.mxu0 %v683
    %719 = vmatpush1.msra.mxu0 %v682
    %720 = vmatprep.subr.mxu0 %v687
    %721 = vmatpush1.msra.mxu0 %v686
    %722 = vmatprep.subr.mxu0 %v691
    %723 = vmatpush1.msra.mxu0 %v690
    %724 = vmatprep.subr.mxu0 %v695
    %725 = vmatpush1.msra.mxu0 %v694
    %726 = vmatprep.subr.mxu0 0.0
    %727 = vmatpush1.msra.mxu0 0.0
    %728 = vmatprep.subr.mxu0 0.0
    %729 = vmatpush1.msra.mxu0 0.0
    %730 = vmatprep.subr.mxu0 0.0
    %731 = vmatpush1.msra.mxu0 0.0
    %732 = vmatprep.subr.mxu0 0.0
    %733 = vmatpush1.msra.mxu0 0.0
    %734 = vmatprep.subr.mxu0 0.0
    %735 = vmatpush1.msra.mxu0 0.0
    %736 = vmatprep.subr.mxu0 0.0
    %737 = vmatpush1.msra.mxu0 0.0
    %738 = vmatprep.subr.mxu0 0.0
    %739 = vmatpush1.msra.mxu0 0.0
    %740 = vmatprep.subr.mxu0 0.0
    %741 = vmatpush1.msra.mxu0 0.0
    %742 = vmatprep.subr.mxu0 0.0
    %743 = vmatpush1.msra.mxu0 0.0
    %744 = vmatprep.subr.mxu0 0.0
    %745 = vmatpush1.msra.mxu0 0.0
    %746 = vmatprep.subr.mxu0 0.0
    %747 = vmatpush1.msra.mxu0 0.0
    %748 = vmatprep.subr.mxu0 0.0
    %749 = vmatpush1.msra.mxu0 0.0
    %750 = vmatprep.subr.mxu0 0.0
    %751 = vmatpush1.msra.mxu0 0.0
    %752 = vmatprep.subr.mxu0 0.0
    %753 = vmatpush1.msra.mxu0 0.0
    %754 = vmatprep.subr.mxu0 0.0
    %755 = vmatpush1.msra.mxu0 0.0
    %756 = vmatprep.subr.mxu0 0.0
    %757 = vmatpush1.msra.mxu0 0.0
    %758 = vmatprep.subr.mxu0 0.0
    %759 = vmatpush1.msra.mxu0 0.0
    %760 = vmatprep.subr.mxu0 0.0
    %761 = vmatpush1.msra.mxu0 0.0
    %762 = vmatprep.subr.mxu0 0.0
    %763 = vmatpush1.msra.mxu0 0.0
    %764 = vmatprep.subr.mxu0 0.0
    %765 = vmatpush1.msra.mxu0 0.0
    %766 = vmatprep.subr.mxu0 0.0
    %767 = vmatpush1.msra.mxu0 0.0
    %768 = vmatprep.subr.mxu0 0.0
    %769 = vmatpush1.msra.mxu0 0.0
    %770 = vmatprep.subr.mxu0 0.0
    %771 = vmatpush1.msra.mxu0 0.0
    %772 = vmatprep.subr.mxu0 0.0
    %773 = vmatpush1.msra.mxu0 0.0
    %774 = vmatprep.mubr.f32.mxu0 0.0
    %775 = vmatmul.mubr.f32.gmra.mrb[0].mxu0 %v699
    %v776 = vpop.f32.mrb[0].mxu0
    %v777 = vadd.f32 0.0, %v776
    %v778 = vpop.f32.mrb[0].mxu0
    %v779 = vadd.f32 0.0, %v778
    %780 = vmatprep.mubr.f32.mxu0 0.0
    %781 = vmatmul.mubr.f32.gmra.mrb[0].mxu0 %v702
    %v782 = vpop.f32.mrb[0].mxu0
    %v783 = vadd.f32 0.0, %v782
    %v784 = vpop.f32.mrb[0].mxu0
    %v785 = vadd.f32 0.0, %v784
    %786 = vmatprep.mubr.f32.mxu0 0.0
    %787 = vmatmul.mubr.f32.gmra.mrb[0].mxu0 %v705
    %v788 = vpop.f32.mrb[0].mxu0
    %v789 = vadd.f32 0.0, %v788
    %v790 = vpop.f32.mrb[0].mxu0
    %v791 = vadd.f32 0.0, %v790
    %792 = vmatprep.mubr.f32.mxu0 0.0
    %793 = vmatmul.mubr.f32.gmra.mrb[0].mxu0 %v708
    %v794 = vpop.f32.mrb[0].mxu0
    %v795 = vadd.f32 0.0, %v794
    %v796 = vpop.f32.mrb[0].mxu0
    %v797 = vadd.f32 0.0, %v796
    %798 = vdwg.mxu0
    %799 = vmatprep.subr.mxu0 %v669
    %800 = vmatpush1.msra.mxu0 %v668
    %801 = vmatprep.subr.mxu0 %v673
    %802 = vmatpush1.msra.mxu0 %v672
    %803 = vmatprep.subr.mxu0 %v677
    %804 = vmatpush1.msra.mxu0 %v676
    %805 = vmatprep.subr.mxu0 %v681
    %806 = vmatpush1.msra.mxu0 %v680
    %807 = vmatprep.subr.mxu0 %v685
    %808 = vmatpush1.msra.mxu0 %v684
    %809 = vmatprep.subr.mxu0 %v689
    %810 = vmatpush1.msra.mxu0 %v688
    %811 = vmatprep.subr.mxu0 %v693
    %812 = vmatpush1.msra.mxu0 %v692
    %813 = vmatprep.subr.mxu0 %v697
    %814 = vmatpush1.msra.mxu0 %v696
    %815 = vmatprep.subr.mxu0 0.0
    %816 = vmatpush1.msra.mxu0 0.0
    %817 = vmatprep.subr.mxu0 0.0
    %818 = vmatpush1.msra.mxu0 0.0
    %819 = vmatprep.subr.mxu0 0.0
    %820 = vmatpush1.msra.mxu0 0.0
    %821 = vmatprep.subr.mxu0 0.0
    %822 = vmatpush1.msra.mxu0 0.0
    %823 = vmatprep.subr.mxu0 0.0
    %824 = vmatpush1.msra.mxu0 0.0
    %825 = vmatprep.subr.mxu0 0.0
    %826 = vmatpush1.msra.mxu0 0.0
    %827 = vmatprep.subr.mxu0 0.0
    %828 = vmatpush1.msra.mxu0 0.0
    %829 = vmatprep.subr.mxu0 0.0
    %830 = vmatpush1.msra.mxu0 0.0
    %831 = vmatprep.subr.mxu0 0.0
    %832 = vmatpush1.msra.mxu0 0.0
    %833 = vmatprep.subr.mxu0 0.0
    %834 = vmatpush1.msra.mxu0 0.0
    %835 = vmatprep.subr.mxu0 0.0
    %836 = vmatpush1.msra.mxu0 0.0
    %837 = vmatprep.subr.mxu0 0.0
    %838 = vmatpush1.msra.mxu0 0.0
    %839 = vmatprep.subr.mxu0 0.0
    %840 = vmatpush1.msra.mxu0 0.0
    %841 = vmatprep.subr.mxu0 0.0
    %842 = vmatpush1.msra.mxu0 0.0
    %843 = vmatprep.subr.mxu0 0.0
    %844 = vmatpush1.msra.mxu0 0.0
    %845 = vmatprep.subr.mxu0 0.0
    %846 = vmatpush1.msra.mxu0 0.0
    %847 = vmatprep.subr.mxu0 0.0
    %848 = vmatpush1.msra.mxu0 0.0
    %849 = vmatprep.subr.mxu0 0.0
    %850 = vmatpush1.msra.mxu0 0.0
    %851 = vmatprep.subr.mxu0 0.0
    %852 = vmatpush1.msra.mxu0 0.0
    %853 = vmatprep.subr.mxu0 0.0
    %854 = vmatpush1.msra.mxu0 0.0
    %855 = vmatprep.subr.mxu0 0.0
    %856 = vmatpush1.msra.mxu0 0.0
    %857 = vmatprep.subr.mxu0 0.0
    %858 = vmatpush1.msra.mxu0 0.0
    %859 = vmatprep.subr.mxu0 0.0
    %860 = vmatpush1.msra.mxu0 0.0
    %861 = vmatprep.subr.mxu0 0.0
    %862 = vmatpush1.msra.mxu0 0.0
    %863 = vmatprep.mubr.f32.mxu0 0.0
    %864 = vmatmul.mubr.f32.gmra.mrb[0].mxu0 %v699
    %v865 = vpop.f32.mrb[0].mxu0
    %v866 = vadd.f32 0.0, %v865
    %v867 = vpop.f32.mrb[0].mxu0
    %v868 = vadd.f32 0.0, %v867
    %869 = vmatprep.mubr.f32.mxu0 0.0
    %870 = vmatmul.mubr.f32.gmra.mrb[0].mxu0 %v702
    %v871 = vpop.f32.mrb[0].mxu0
    %v872 = vadd.f32 0.0, %v871
    %v873 = vpop.f32.mrb[0].mxu0
    %v874 = vadd.f32 0.0, %v873
    %875 = vmatprep.mubr.f32.mxu0 0.0
    %876 = vmatmul.mubr.f32.gmra.mrb[0].mxu0 %v705
    %v877 = vpop.f32.mrb[0].mxu0
    %v878 = vadd.f32 0.0, %v877
    %v879 = vpop.f32.mrb[0].mxu0
    %v880 = vadd.f32 0.0, %v879
    %881 = vmatprep.mubr.f32.mxu0 0.0
    %882 = vmatmul.mubr.f32.gmra.mrb[0].mxu0 %v708
    %v883 = vpop.f32.mrb[0].mxu0
    %v884 = vadd.f32 0.0, %v883
    %v885 = vpop.f32.mrb[0].mxu0
    %v886 = vadd.f32 0.0, %v885
    %887 = vdwg.mxu0
    %v888 = vadd.f32 %v645, %v777
    %v889 = vadd.f32 %v646, %v779
    %v890 = vadd.f32 %v647, %v866
    %v891 = vadd.f32 %v648, %v868
    %v892 = vadd.f32 %v649, %v783
    %v893 = vadd.f32 %v650, %v785
    %v894 = vadd.f32 %v651, %v872
    %v895 = vadd.f32 %v652, %v874
    %v896 = vadd.f32 %v653, %v789
    %v897 = vadd.f32 %v654, %v791
    %v898 = vadd.f32 %v655, %v878
    %v899 = vadd.f32 %v656, %v880
    %v900 = vadd.f32 %v657, %v795
    %v901 = vadd.f32 %v658, %v797
    %v902 = vadd.f32 %v659, %v884
    %v903 = vadd.f32 %v660, %v886
    %v904 = vld [vmem:[#allocation8] sm:$0xf]
    %v905 = vld [vmem:[#allocation9] sm:$0xf]
    %v906 = vld [vmem:[%s5] sm:$0xff]
    %v907 = vld [vmem:[%s5 + $0x8] sm:$0xff]
    %v908 = vld [vmem:[%s5 + $0x10] sm:$0xff]
    %v909 = vld [vmem:[%s5 + $0x18] sm:$0xff]
    %v910 = vld [vmem:[%s5 + $0x20] sm:$0xff]
    %v911 = vld [vmem:[%s5 + $0x28] sm:$0xff]
    %v912 = vld [vmem:[%s5 + $0x30] sm:$0xff]
    %v913 = vld [vmem:[%s5 + $0x38] sm:$0xff]
    %v914 = vld [vmem:[%s5 + $0x40] sm:$0xff]
    %v915 = vld [vmem:[%s5 + $0x48] sm:$0xff]
    %v916 = vld [vmem:[%s5 + $0x50] sm:$0xff]
    %v917 = vld [vmem:[%s5 + $0x58] sm:$0xff]
    %v918 = vld [vmem:[%s5 + $0x60] sm:$0xff]
    %v919 = vld [vmem:[%s5 + $0x68] sm:$0xff]
    %v920 = vld [vmem:[%s5 + $0x70] sm:$0xff]
    %v921 = vld [vmem:[%s5 + $0x78] sm:$0xff]
    %v922 = vld [vmem:[%s5 + $0x80] sm:$0xff]
    %v923 = vld [vmem:[%s5 + $0x88] sm:$0xff]
    %v924 = vld [vmem:[%s5 + $0x90] sm:$0xff]
    %v925 = vld [vmem:[%s5 + $0x98] sm:$0xff]
    %v926 = vld [vmem:[%s5 + $0xa0] sm:$0xff]
    %v927 = vld [vmem:[%s5 + $0xa8] sm:$0xff]
    %v928 = vld [vmem:[%s5 + $0xb0] sm:$0xff]
    %v929 = vld [vmem:[%s5 + $0xb8] sm:$0xff]
    %v930 = vld [vmem:[%s5 + $0xc0] sm:$0xff]
    %v931 = vld [vmem:[%s5 + $0xc8] sm:$0xff]
    %v932 = vld [vmem:[%s5 + $0xd0] sm:$0xff]
    %v933 = vld [vmem:[%s5 + $0xd8] sm:$0xff]
    %v934 = vld [vmem:[%s5 + $0xe0] sm:$0xff]
    %v935 = vld [vmem:[%s5 + $0xe8] sm:$0xff]
    %v936 = vld [vmem:[%s5 + $0xf0] sm:$0xff]
    %v937 = vld [vmem:[%s5 + $0xf8] sm:$0xff]
    %v938 = vld [vmem:[%s5 + $0x100] sm:$0xff]
    %v939 = vld [vmem:[%s5 + $0x108] sm:$0xff]
    %v940 = vld [vmem:[%s5 + $0x110] sm:$0xff]
    %v941 = vld [vmem:[%s5 + $0x118] sm:$0xff]
    %v942 = vld [vmem:[%s5 + $0x120] sm:$0xff]
    %v943 = vld [vmem:[%s5 + $0x128] sm:$0xff]
    %v944 = vld [vmem:[%s5 + $0x130] sm:$0xff]
    %v945 = vld [vmem:[%s5 + $0x138] sm:$0xff]
    %v946 = vld [vmem:[%s5 + $0x140] sm:$0xff]
    %v947 = vld [vmem:[%s5 + $0x148] sm:$0xff]
    %v948 = vld [vmem:[%s5 + $0x150] sm:$0xff]
    %v949 = vld [vmem:[%s5 + $0x158] sm:$0xff]
    %v950 = vld [vmem:[%s5 + $0x160] sm:$0xff]
    %v951 = vld [vmem:[%s5 + $0x168] sm:$0xff]
    %v952 = vld [vmem:[%s5 + $0x170] sm:$0xff]
    %v953 = vld [vmem:[%s5 + $0x178] sm:$0xff]
    %v954 = vld [vmem:[%s5 + $0x180] sm:$0xff]
    %v955 = vld [vmem:[%s5 + $0x188] sm:$0xff]
    %v956 = vld [vmem:[%s5 + $0x190] sm:$0xff]
    %v957 = vld [vmem:[%s5 + $0x198] sm:$0xff]
    %v958 = vld [vmem:[%s5 + $0x1a0] sm:$0xff]
    %v959 = vld [vmem:[%s5 + $0x1a8] sm:$0xff]
    %v960 = vld [vmem:[%s5 + $0x1b0] sm:$0xff]
    %v961 = vld [vmem:[%s5 + $0x1b8] sm:$0xff]
    %v962 = vld [vmem:[%s5 + $0x1c0] sm:$0xff]
    %v963 = vld [vmem:[%s5 + $0x1c8] sm:$0xff]
    %v964 = vld [vmem:[%s5 + $0x1d0] sm:$0xff]
    %v965 = vld [vmem:[%s5 + $0x1d8] sm:$0xff]
    %v966 = vld [vmem:[%s5 + $0x1e0] sm:$0xff]
    %v967 = vld [vmem:[%s5 + $0x1e8] sm:$0xff]
    %v968 = vld [vmem:[%s5 + $0x1f0] sm:$0xff]
    %v969 = vld [vmem:[%s5 + $0x1f8] sm:$0xff]
    %970 = vmatprep.subr.mxu0 0.0
    %971 = vmatpush1.msra.mxu0 %v906
    %972 = vmatprep.subr.mxu0 0.0
    %973 = vmatpush1.msra.mxu0 %v907
    %974 = vmatprep.subr.mxu0 0.0
    %975 = vmatpush1.msra.mxu0 %v908
    %976 = vmatprep.subr.mxu0 0.0
    %977 = vmatpush1.msra.mxu0 %v909
    %978 = vmatprep.subr.mxu0 0.0
    %979 = vmatpush1.msra.mxu0 %v910
    %980 = vmatprep.subr.mxu0 0.0
    %981 = vmatpush1.msra.mxu0 %v911
    %982 = vmatprep.subr.mxu0 0.0
    %983 = vmatpush1.msra.mxu0 %v912
    %984 = vmatprep.subr.mxu0 0.0
    %985 = vmatpush1.msra.mxu0 %v913
    %986 = vmatprep.subr.mxu0 0.0
    %987 = vmatpush1.msra.mxu0 %v914
    %988 = vmatprep.subr.mxu0 0.0
    %989 = vmatpush1.msra.mxu0 %v915
    %990 = vmatprep.subr.mxu0 0.0
    %991 = vmatpush1.msra.mxu0 %v916
    %992 = vmatprep.subr.mxu0 0.0
    %993 = vmatpush1.msra.mxu0 %v917
    %994 = vmatprep.subr.mxu0 0.0
    %995 = vmatpush1.msra.mxu0 %v918
    %996 = vmatprep.subr.mxu0 0.0
    %997 = vmatpush1.msra.mxu0 %v919
    %998 = vmatprep.subr.mxu0 0.0
    %999 = vmatpush1.msra.mxu0 %v920
    %1000 = vmatprep.subr.mxu0 0.0
    %1001 = vmatpush1.msra.mxu0 %v921
    %1002 = vmatprep.subr.mxu0 0.0
    %1003 = vmatpush1.msra.mxu0 %v922
    %1004 = vmatprep.subr.mxu0 0.0
    %1005 = vmatpush1.msra.mxu0 %v923
    %1006 = vmatprep.subr.mxu0 0.0
    %1007 = vmatpush1.msra.mxu0 %v924
    %1008 = vmatprep.subr.mxu0 0.0
    %1009 = vmatpush1.msra.mxu0 %v925
    %1010 = vmatprep.subr.mxu0 0.0
    %1011 = vmatpush1.msra.mxu0 %v926
    %1012 = vmatprep.subr.mxu0 0.0
    %1013 = vmatpush1.msra.mxu0 %v927
    %1014 = vmatprep.subr.mxu0 0.0
    %1015 = vmatpush1.msra.mxu0 %v928
    %1016 = vmatprep.subr.mxu0 0.0
    %1017 = vmatpush1.msra.mxu0 %v929
    %1018 = vmatprep.subr.mxu0 0.0
    %1019 = vmatpush1.msra.mxu0 %v930
    %1020 = vmatprep.subr.mxu0 0.0
    %1021 = vmatpush1.msra.mxu0 %v931
    %1022 = vmatprep.subr.mxu0 0.0
    %1023 = vmatpush1.msra.mxu0 %v932
    %1024 = vmatprep.subr.mxu0 0.0
    %1025 = vmatpush1.msra.mxu0 %v933
    %1026 = vmatprep.subr.mxu0 0.0
    %1027 = vmatpush1.msra.mxu0 %v934
    %1028 = vmatprep.subr.mxu0 0.0
    %1029 = vmatpush1.msra.mxu0 %v935
    %1030 = vmatprep.subr.mxu0 0.0
    %1031 = vmatpush1.msra.mxu0 %v936
    %1032 = vmatprep.subr.mxu0 0.0
    %1033 = vmatpush1.msra.mxu0 %v937
    %1034 = vmatprep.mubr.f32.mxu0 %v889
    %1035 = vmatmul.mubr.f32.gmra.mrb[0].mxu0 %v888
    %v1036 = vpop.f32.mrb[0].mxu0
    %v1037 = vadd.f32 0.0, %v1036
    %v1038 = vpop.f32.mrb[0].mxu0
    %1039 = vmatprep.mubr.f32.mxu0 %v893
    %1040 = vmatmul.mubr.f32.gmra.mrb[0].mxu0 %v892
    %v1041 = vpop.f32.mrb[0].mxu0
    %v1042 = vadd.f32 0.0, %v1041
    %v1043 = vpop.f32.mrb[0].mxu0
    %1044 = vmatprep.mubr.f32.mxu0 %v897
    %1045 = vmatmul.mubr.f32.gmra.mrb[0].mxu0 %v896
    %v1046 = vpop.f32.mrb[0].mxu0
    %v1047 = vadd.f32 0.0, %v1046
    %v1048 = vpop.f32.mrb[0].mxu0
    %1049 = vmatprep.mubr.f32.mxu0 %v901
    %1050 = vmatmul.mubr.f32.gmra.mrb[0].mxu0 %v900
    %v1051 = vpop.f32.mrb[0].mxu0
    %v1052 = vadd.f32 0.0, %v1051
    %v1053 = vpop.f32.mrb[0].mxu0
    %1054 = vdwg.mxu0
    %1055 = vmatprep.subr.mxu0 0.0
    %1056 = vmatpush1.msra.mxu0 %v938
    %1057 = vmatprep.subr.mxu0 0.0
    %1058 = vmatpush1.msra.mxu0 %v939
    %1059 = vmatprep.subr.mxu0 0.0
    %1060 = vmatpush1.msra.mxu0 %v940
    %1061 = vmatprep.subr.mxu0 0.0
    %1062 = vmatpush1.msra.mxu0 %v941
    %1063 = vmatprep.subr.mxu0 0.0
    %1064 = vmatpush1.msra.mxu0 %v942
    %1065 = vmatprep.subr.mxu0 0.0
    %1066 = vmatpush1.msra.mxu0 %v943
    %1067 = vmatprep.subr.mxu0 0.0
    %1068 = vmatpush1.msra.mxu0 %v944
    %1069 = vmatprep.subr.mxu0 0.0
    %1070 = vmatpush1.msra.mxu0 %v945
    %1071 = vmatprep.subr.mxu0 0.0
    %1072 = vmatpush1.msra.mxu0 %v946
    %1073 = vmatprep.subr.mxu0 0.0
    %1074 = vmatpush1.msra.mxu0 %v947
    %1075 = vmatprep.subr.mxu0 0.0
    %1076 = vmatpush1.msra.mxu0 %v948
    %1077 = vmatprep.subr.mxu0 0.0
    %1078 = vmatpush1.msra.mxu0 %v949
    %1079 = vmatprep.subr.mxu0 0.0
    %1080 = vmatpush1.msra.mxu0 %v950
    %1081 = vmatprep.subr.mxu0 0.0
    %1082 = vmatpush1.msra.mxu0 %v951
    %1083 = vmatprep.subr.mxu0 0.0
    %1084 = vmatpush1.msra.mxu0 %v952
    %1085 = vmatprep.subr.mxu0 0.0
    %1086 = vmatpush1.msra.mxu0 %v953
    %1087 = vmatprep.subr.mxu0 0.0
    %1088 = vmatpush1.msra.mxu0 %v954
    %1089 = vmatprep.subr.mxu0 0.0
    %1090 = vmatpush1.msra.mxu0 %v955
    %1091 = vmatprep.subr.mxu0 0.0
    %1092 = vmatpush1.msra.mxu0 %v956
    %1093 = vmatprep.subr.mxu0 0.0
    %1094 = vmatpush1.msra.mxu0 %v957
    %1095 = vmatprep.subr.mxu0 0.0
    %1096 = vmatpush1.msra.mxu0 %v958
    %1097 = vmatprep.subr.mxu0 0.0
    %1098 = vmatpush1.msra.mxu0 %v959
    %1099 = vmatprep.subr.mxu0 0.0
    %1100 = vmatpush1.msra.mxu0 %v960
    %1101 = vmatprep.subr.mxu0 0.0
    %1102 = vmatpush1.msra.mxu0 %v961
    %1103 = vmatprep.subr.mxu0 0.0
    %1104 = vmatpush1.msra.mxu0 %v962
    %1105 = vmatprep.subr.mxu0 0.0
    %1106 = vmatpush1.msra.mxu0 %v963
    %1107 = vmatprep.subr.mxu0 0.0
    %1108 = vmatpush1.msra.mxu0 %v964
    %1109 = vmatprep.subr.mxu0 0.0
    %1110 = vmatpush1.msra.mxu0 %v965
    %1111 = vmatprep.subr.mxu0 0.0
    %1112 = vmatpush1.msra.mxu0 %v966
    %1113 = vmatprep.subr.mxu0 0.0
    %1114 = vmatpush1.msra.mxu0 %v967
    %1115 = vmatprep.subr.mxu0 0.0
    %1116 = vmatpush1.msra.mxu0 %v968
    %1117 = vmatprep.subr.mxu0 0.0
    %1118 = vmatpush1.msra.mxu0 %v969
    %1119 = vmatprep.mubr.f32.mxu0 %v891
    %1120 = vmatmul.mubr.f32.gmra.mrb[0].mxu0 %v890
    %v1121 = vpop.f32.mrb[0].mxu0
    %v1122 = vadd.f32 %v1037, %v1121
    %v1123 = vpop.f32.mrb[0].mxu0
    %1124 = vmatprep.mubr.f32.mxu0 %v895
    %1125 = vmatmul.mubr.f32.gmra.mrb[0].mxu0 %v894
    %v1126 = vpop.f32.mrb[0].mxu0
    %v1127 = vadd.f32 %v1042, %v1126
    %v1128 = vpop.f32.mrb[0].mxu0
    %1129 = vmatprep.mubr.f32.mxu0 %v899
    %1130 = vmatmul.mubr.f32.gmra.mrb[0].mxu0 %v898
    %v1131 = vpop.f32.mrb[0].mxu0
    %v1132 = vadd.f32 %v1047, %v1131
    %v1133 = vpop.f32.mrb[0].mxu0
    %1134 = vmatprep.mubr.f32.mxu0 %v903
    %1135 = vmatmul.mubr.f32.gmra.mrb[0].mxu0 %v902
    %v1136 = vpop.f32.mrb[0].mxu0
    %v1137 = vadd.f32 %v1052, %v1136
    %v1138 = vpop.f32.mrb[0].mxu0
    %1139 = vdwg.mxu0
    %v1140 = vmul.f32 %v888, %v888
    %v1141 = vmul.f32 %v889, %v889
    %v1142 = vmul.f32 %v890, %v890
    %v1143 = vmul.f32 %v891, %v891
    %v1144 = vmul.f32 %v892, %v892
    %v1145 = vmul.f32 %v893, %v893
    %v1146 = vmul.f32 %v894, %v894
    %v1147 = vmul.f32 %v895, %v895
    %v1148 = vmul.f32 %v896, %v896
    %v1149 = vmul.f32 %v897, %v897
    %v1150 = vmul.f32 %v898, %v898
    %v1151 = vmul.f32 %v899, %v899
    %v1152 = vmul.f32 %v900, %v900
    %v1153 = vmul.f32 %v901, %v901
    %v1154 = vmul.f32 %v902, %v902
    %v1155 = vmul.f32 %v903, %v903
    %1156 = vmatprep.subr.mxu0 0.0
    %1157 = vmatpush1.msra.mxu0 %v906
    %1158 = vmatprep.subr.mxu0 0.0
    %1159 = vmatpush1.msra.mxu0 %v907
    %1160 = vmatprep.subr.mxu0 0.0
    %1161 = vmatpush1.msra.mxu0 %v908
    %1162 = vmatprep.subr.mxu0 0.0
    %1163 = vmatpush1.msra.mxu0 %v909
    %1164 = vmatprep.subr.mxu0 0.0
    %1165 = vmatpush1.msra.mxu0 %v910
    %1166 = vmatprep.subr.mxu0 0.0
    %1167 = vmatpush1.msra.mxu0 %v911
    %1168 = vmatprep.subr.mxu0 0.0
    %1169 = vmatpush1.msra.mxu0 %v912
    %1170 = vmatprep.subr.mxu0 0.0
    %1171 = vmatpush1.msra.mxu0 %v913
    %1172 = vmatprep.subr.mxu0 0.0
    %1173 = vmatpush1.msra.mxu0 %v914
    %1174 = vmatprep.subr.mxu0 0.0
    %1175 = vmatpush1.msra.mxu0 %v915
    %1176 = vmatprep.subr.mxu0 0.0
    %1177 = vmatpush1.msra.mxu0 %v916
    %1178 = vmatprep.subr.mxu0 0.0
    %1179 = vmatpush1.msra.mxu0 %v917
    %1180 = vmatprep.subr.mxu0 0.0
    %1181 = vmatpush1.msra.mxu0 %v918
    %1182 = vmatprep.subr.mxu0 0.0
    %1183 = vmatpush1.msra.mxu0 %v919
    %1184 = vmatprep.subr.mxu0 0.0
    %1185 = vmatpush1.msra.mxu0 %v920
    %1186 = vmatprep.subr.mxu0 0.0
    %1187 = vmatpush1.msra.mxu0 %v921
    %1188 = vmatprep.subr.mxu0 0.0
    %1189 = vmatpush1.msra.mxu0 %v922
    %1190 = vmatprep.subr.mxu0 0.0
    %1191 = vmatpush1.msra.mxu0 %v923
    %1192 = vmatprep.subr.mxu0 0.0
    %1193 = vmatpush1.msra.mxu0 %v924
    %1194 = vmatprep.subr.mxu0 0.0
    %1195 = vmatpush1.msra.mxu0 %v925
    %1196 = vmatprep.subr.mxu0 0.0
    %1197 = vmatpush1.msra.mxu0 %v926
    %1198 = vmatprep.subr.mxu0 0.0
    %1199 = vmatpush1.msra.mxu0 %v927
    %1200 = vmatprep.subr.mxu0 0.0
    %1201 = vmatpush1.msra.mxu0 %v928
    %1202 = vmatprep.subr.mxu0 0.0
    %1203 = vmatpush1.msra.mxu0 %v929
    %1204 = vmatprep.subr.mxu0 0.0
    %1205 = vmatpush1.msra.mxu0 %v930
    %1206 = vmatprep.subr.mxu0 0.0
    %1207 = vmatpush1.msra.mxu0 %v931
    %1208 = vmatprep.subr.mxu0 0.0
    %1209 = vmatpush1.msra.mxu0 %v932
    %1210 = vmatprep.subr.mxu0 0.0
    %1211 = vmatpush1.msra.mxu0 %v933
    %1212 = vmatprep.subr.mxu0 0.0
    %1213 = vmatpush1.msra.mxu0 %v934
    %1214 = vmatprep.subr.mxu0 0.0
    %1215 = vmatpush1.msra.mxu0 %v935
    %1216 = vmatprep.subr.mxu0 0.0
    %1217 = vmatpush1.msra.mxu0 %v936
    %1218 = vmatprep.subr.mxu0 0.0
    %1219 = vmatpush1.msra.mxu0 %v937
    %1220 = vmatprep.mubr.f32.mxu0 %v1141
    %1221 = vmatmul.mubr.f32.gmra.mrb[0].mxu0 %v1140
    %v1222 = vpop.f32.mrb[0].mxu0
    %v1223 = vadd.f32 0.0, %v1222
    %v1224 = vpop.f32.mrb[0].mxu0
    %1225 = vmatprep.mubr.f32.mxu0 %v1145
    %1226 = vmatmul.mubr.f32.gmra.mrb[0].mxu0 %v1144
    %v1227 = vpop.f32.mrb[0].mxu0
    %v1228 = vadd.f32 0.0, %v1227
    %v1229 = vpop.f32.mrb[0].mxu0
    %1230 = vmatprep.mubr.f32.mxu0 %v1149
    %1231 = vmatmul.mubr.f32.gmra.mrb[0].mxu0 %v1148
    %v1232 = vpop.f32.mrb[0].mxu0
    %v1233 = vadd.f32 0.0, %v1232
    %v1234 = vpop.f32.mrb[0].mxu0
    %1235 = vmatprep.mubr.f32.mxu0 %v1153
    %1236 = vmatmul.mubr.f32.gmra.mrb[0].mxu0 %v1152
    %v1237 = vpop.f32.mrb[0].mxu0
    %v1238 = vadd.f32 0.0, %v1237
    %v1239 = vpop.f32.mrb[0].mxu0
    %1240 = vdwg.mxu0
    %1241 = vmatprep.subr.mxu0 0.0
    %1242 = vmatpush1.msra.mxu0 %v938
    %1243 = vmatprep.subr.mxu0 0.0
    %1244 = vmatpush1.msra.mxu0 %v939
    %1245 = vmatprep.subr.mxu0 0.0
    %1246 = vmatpush1.msra.mxu0 %v940
    %1247 = vmatprep.subr.mxu0 0.0
    %1248 = vmatpush1.msra.mxu0 %v941
    %1249 = vmatprep.subr.mxu0 0.0
    %1250 = vmatpush1.msra.mxu0 %v942
    %1251 = vmatprep.subr.mxu0 0.0
    %1252 = vmatpush1.msra.mxu0 %v943
    %1253 = vmatprep.subr.mxu0 0.0
    %1254 = vmatpush1.msra.mxu0 %v944
    %1255 = vmatprep.subr.mxu0 0.0
    %1256 = vmatpush1.msra.mxu0 %v945
    %1257 = vmatprep.subr.mxu0 0.0
    %1258 = vmatpush1.msra.mxu0 %v946
    %1259 = vmatprep.subr.mxu0 0.0
    %1260 = vmatpush1.msra.mxu0 %v947
    %1261 = vmatprep.subr.mxu0 0.0
    %1262 = vmatpush1.msra.mxu0 %v948
    %1263 = vmatprep.subr.mxu0 0.0
    %1264 = vmatpush1.msra.mxu0 %v949
    %1265 = vmatprep.subr.mxu0 0.0
    %1266 = vmatpush1.msra.mxu0 %v950
    %1267 = vmatprep.subr.mxu0 0.0
    %1268 = vmatpush1.msra.mxu0 %v951
    %1269 = vmatprep.subr.mxu0 0.0
    %1270 = vmatpush1.msra.mxu0 %v952
    %1271 = vmatprep.subr.mxu0 0.0
    %1272 = vmatpush1.msra.mxu0 %v953
    %1273 = vmatprep.subr.mxu0 0.0
    %1274 = vmatpush1.msra.mxu0 %v954
    %1275 = vmatprep.subr.mxu0 0.0
    %1276 = vmatpush1.msra.mxu0 %v955
    %1277 = vmatprep.subr.mxu0 0.0
    %1278 = vmatpush1.msra.mxu0 %v956
    %1279 = vmatprep.subr.mxu0 0.0
    %1280 = vmatpush1.msra.mxu0 %v957
    %1281 = vmatprep.subr.mxu0 0.0
    %1282 = vmatpush1.msra.mxu0 %v958
    %1283 = vmatprep.subr.mxu0 0.0
    %1284 = vmatpush1.msra.mxu0 %v959
    %1285 = vmatprep.subr.mxu0 0.0
    %1286 = vmatpush1.msra.mxu0 %v960
    %1287 = vmatprep.subr.mxu0 0.0
    %1288 = vmatpush1.msra.mxu0 %v961
    %1289 = vmatprep.subr.mxu0 0.0
    %1290 = vmatpush1.msra.mxu0 %v962
    %1291 = vmatprep.subr.mxu0 0.0
    %1292 = vmatpush1.msra.mxu0 %v963
    %1293 = vmatprep.subr.mxu0 0.0
    %1294 = vmatpush1.msra.mxu0 %v964
    %1295 = vmatprep.subr.mxu0 0.0
    %1296 = vmatpush1.msra.mxu0 %v965
    %1297 = vmatprep.subr.mxu0 0.0
    %1298 = vmatpush1.msra.mxu0 %v966
    %1299 = vmatprep.subr.mxu0 0.0
    %1300 = vmatpush1.msra.mxu0 %v967
    %1301 = vmatprep.subr.mxu0 0.0
    %1302 = vmatpush1.msra.mxu0 %v968
    %1303 = vmatprep.subr.mxu0 0.0
    %1304 = vmatpush1.msra.mxu0 %v969
    %1305 = vmatprep.mubr.f32.mxu0 %v1143
    %1306 = vmatmul.mubr.f32.gmra.mrb[0].mxu0 %v1142
    %v1307 = vpop.f32.mrb[0].mxu0
    %v1308 = vadd.f32 %v1223, %v1307
    %v1309 = vpop.f32.mrb[0].mxu0
    %1310 = vmatprep.mubr.f32.mxu0 %v1147
    %1311 = vmatmul.mubr.f32.gmra.mrb[0].mxu0 %v1146
    %v1312 = vpop.f32.mrb[0].mxu0
    %v1313 = vadd.f32 %v1228, %v1312
    %v1314 = vpop.f32.mrb[0].mxu0
    %1315 = vmatprep.mubr.f32.mxu0 %v1151
    %1316 = vmatmul.mubr.f32.gmra.mrb[0].mxu0 %v1150
    %v1317 = vpop.f32.mrb[0].mxu0
    %v1318 = vadd.f32 %v1233, %v1317
    %v1319 = vpop.f32.mrb[0].mxu0
    %1320 = vmatprep.mubr.f32.mxu0 %v1155
    %1321 = vmatmul.mubr.f32.gmra.mrb[0].mxu0 %v1154
    %v1322 = vpop.f32.mrb[0].mxu0
    %v1323 = vadd.f32 %v1238, %v1322
    %v1324 = vpop.f32.mrb[0].mxu0
    %1325 = vdwg.mxu0
    %vm1326 = vcmask 261120
    %v1327 = vsel %vm1326, %v1122, 0.0
    %v1328 = vsel %vm1326, %v1127, 0.0
    %v1329 = vadd.f32 %v1327, %v1328
    %v1330 = vrot.slane %v1329, 4
    %v1331 = vadd.f32 %v1329, %v1330
    %v1332 = vrot.slane %v1331, 2
    %v1333 = vadd.f32 %v1331, %v1332
    %v1334 = vrot.slane %v1333, 1
    %v1335 = vadd.f32 %v1333, %v1334
    %v1336 = vsel %vm1326, %v1132, 0.0
    %v1337 = vsel %vm1326, %v1137, 0.0
    %v1338 = vadd.f32 %v1336, %v1337
    %v1339 = vrot.slane %v1338, 4
    %v1340 = vadd.f32 %v1338, %v1339
    %v1341 = vrot.slane %v1340, 2
    %v1342 = vadd.f32 %v1340, %v1341
    %v1343 = vrot.slane %v1342, 1
    %v1344 = vadd.f32 %v1342, %v1343
    %v1345 = vsel %vm1326, %v1308, 0.0
    %v1346 = vsel %vm1326, %v1313, 0.0
    %v1347 = vadd.f32 %v1345, %v1346
    %v1348 = vrot.slane %v1347, 4
    %v1349 = vadd.f32 %v1347, %v1348
    %v1350 = vrot.slane %v1349, 2
    %v1351 = vadd.f32 %v1349, %v1350
    %v1352 = vrot.slane %v1351, 1
    %v1353 = vadd.f32 %v1351, %v1352
    %v1354 = vsel %vm1326, %v1318, 0.0
    %v1355 = vsel %vm1326, %v1323, 0.0
    %v1356 = vadd.f32 %v1354, %v1355
    %v1357 = vrot.slane %v1356, 4
    %v1358 = vadd.f32 %v1356, %v1357
    %v1359 = vrot.slane %v1358, 2
    %v1360 = vadd.f32 %v1358, %v1359
    %v1361 = vrot.slane %v1360, 1
    %v1362 = vadd.f32 %v1360, %v1361
    %v1363 = vrcp.pop 256.0
    %v1364 = vmul.f32 %v1335, %v1363
    %v1365 = vmul.f32 %v1344, %v1363
    %v1366 = vmul.f32 %v1353, %v1363
    %v1367 = vmul.f32 %v1362, %v1363
    %v1368 = vmul.f32 %v1364, %v1364
    %v1369 = vmul.f32 %v1365, %v1365
    %v1370 = vsub.f32 %v1366, %v1368
    %v1371 = vsub.f32 %v1367, %v1369
    %v1372 = vadd.f32 %v1370, 1e-05
    %v1373 = vadd.f32 %v1371, 1e-05
    %v1374 = vrsqrt.pop %v1372
    %v1375 = vrsqrt.pop %v1373
    %vm1378 = vcmask 1041409
    %v1379 = vsel %vm1378, %v1365, %v1364
    %vm1383 = vcmask 1043459
    %v1384 = vsel %vm1383, %v1375, %v1374
    %vm1386 = vcmask 1041408
    %v1387 = vsel %vm1386, %v1379, %v1384
    %v1388 = vld [vmem:[#allocation11] sm:$0xff]
    %v1389 = vld [vmem:[#allocation11 + $0x8] sm:$0xff]
    %v1390 = vld [vmem:[#allocation11 + $0x10] sm:$0xff]
    %v1391 = vld [vmem:[#allocation11 + $0x18] sm:$0xff]
    %v1392 = vld [vmem:[#allocation11 + $0x20] sm:$0xff]
    %v1393 = vld [vmem:[#allocation11 + $0x28] sm:$0xff]
    %v1394 = vld [vmem:[#allocation11 + $0x30] sm:$0xff]
    %v1395 = vld [vmem:[#allocation11 + $0x38] sm:$0xff]
    %v1396 = vld [vmem:[#allocation11 + $0x40] sm:$0xff]
    %v1397 = vld [vmem:[#allocation11 + $0x48] sm:$0xff]
    %v1398 = vld [vmem:[#allocation11 + $0x50] sm:$0xff]
    %v1399 = vld [vmem:[#allocation11 + $0x58] sm:$0xff]
    %v1400 = vld [vmem:[#allocation11 + $0x60] sm:$0xff]
    %v1401 = vld [vmem:[#allocation11 + $0x68] sm:$0xff]
    %v1402 = vld [vmem:[#allocation11 + $0x70] sm:$0xff]
    %v1403 = vld [vmem:[#allocation11 + $0x78] sm:$0xff]
    %v1405 = vsel %vm1326, %v1387, 0
    %1407 = vmatprep.subr.mxu0 %v1389
    %1408 = vmatpush1.msra.mxu0 %v1388
    %1409 = vmatprep.subr.mxu0 %v1393
    %1410 = vmatpush1.msra.mxu0 %v1392
    %1411 = vmatprep.subr.mxu0 %v1397
    %1412 = vmatpush1.msra.mxu0 %v1396
    %1413 = vmatprep.subr.mxu0 %v1401
    %1414 = vmatpush1.msra.mxu0 %v1400
    %1415 = vmatprep.subr.mxu0 0.0
    %1416 = vmatpush1.msra.mxu0 0.0
    %1417 = vmatprep.subr.mxu0 0.0
    %1418 = vmatpush1.msra.mxu0 0.0
    %1419 = vmatprep.subr.mxu0 0.0
    %1420 = vmatpush1.msra.mxu0 0.0
    %1421 = vmatprep.subr.mxu0 0.0
    %1422 = vmatpush1.msra.mxu0 0.0
    %1423 = vmatprep.subr.mxu0 0.0
    %1424 = vmatpush1.msra.mxu0 0.0
    %1425 = vmatprep.subr.mxu0 0.0
    %1426 = vmatpush1.msra.mxu0 0.0
    %1427 = vmatprep.subr.mxu0 0.0
    %1428 = vmatpush1.msra.mxu0 0.0
    %1429 = vmatprep.subr.mxu0 0.0
    %1430 = vmatpush1.msra.mxu0 0.0
    %1431 = vmatprep.subr.mxu0 0.0
    %1432 = vmatpush1.msra.mxu0 0.0
    %1433 = vmatprep.subr.mxu0 0.0
    %1434 = vmatpush1.msra.mxu0 0.0
    %1435 = vmatprep.subr.mxu0 0.0
    %1436 = vmatpush1.msra.mxu0 0.0
    %1437 = vmatprep.subr.mxu0 0.0
    %1438 = vmatpush1.msra.mxu0 0.0
    %1439 = vmatprep.subr.mxu0 0.0
    %1440 = vmatpush1.msra.mxu0 0.0
    %1441 = vmatprep.subr.mxu0 0.0
    %1442 = vmatpush1.msra.mxu0 0.0
    %1443 = vmatprep.subr.mxu0 0.0
    %1444 = vmatpush1.msra.mxu0 0.0
    %1445 = vmatprep.subr.mxu0 0.0
    %1446 = vmatpush1.msra.mxu0 0.0
    %1447 = vmatprep.subr.mxu0 0.0
    %1448 = vmatpush1.msra.mxu0 0.0
    %1449 = vmatprep.subr.mxu0 0.0
    %1450 = vmatpush1.msra.mxu0 0.0
    %1451 = vmatprep.subr.mxu0 0.0
    %1452 = vmatpush1.msra.mxu0 0.0
    %1453 = vmatprep.subr.mxu0 0.0
    %1454 = vmatpush1.msra.mxu0 0.0
    %1455 = vmatprep.subr.mxu0 0.0
    %1456 = vmatpush1.msra.mxu0 0.0
    %1457 = vmatprep.subr.mxu0 0.0
    %1458 = vmatpush1.msra.mxu0 0.0
    %1459 = vmatprep.subr.mxu0 0.0
    %1460 = vmatpush1.msra.mxu0 0.0
    %1461 = vmatprep.subr.mxu0 0.0
    %1462 = vmatpush1.msra.mxu0 0.0
    %1463 = vmatprep.subr.mxu0 0.0
    %1464 = vmatpush1.msra.mxu0 0.0
    %1465 = vmatprep.subr.mxu0 0.0
    %1466 = vmatpush1.msra.mxu0 0.0
    %1467 = vmatprep.subr.mxu0 0.0
    %1468 = vmatpush1.msra.mxu0 0.0
    %1469 = vmatprep.subr.mxu0 0.0
    %1470 = vmatpush1.msra.mxu0 0.0
    %1471 = vmatprep.mubr.f32.mxu0 0.0
    %1472 = vmatmul.mubr.f32.gmra.mrb[0].mxu0 %v1405
    %v1473 = vpop.f32.mrb[0].mxu0
    %v1474 = vadd.f32 0.0, %v1473
    %v1475 = vpop.f32.mrb[0].mxu0
    %v1476 = vadd.f32 0.0, %v1475
    %1477 = vdwg.mxu0
    %1478 = vmatprep.subr.mxu0 %v1391
    %1479 = vmatpush1.msra.mxu0 %v1390
    %1480 = vmatprep.subr.mxu0 %v1395
    %1481 = vmatpush1.msra.mxu0 %v1394
    %1482 = vmatprep.subr.mxu0 %v1399
    %1483 = vmatpush1.msra.mxu0 %v1398
    %1484 = vmatprep.subr.mxu0 %v1403
    %1485 = vmatpush1.msra.mxu0 %v1402
    %1486 = vmatprep.subr.mxu0 0.0
    %1487 = vmatpush1.msra.mxu0 0.0
    %1488 = vmatprep.subr.mxu0 0.0
    %1489 = vmatpush1.msra.mxu0 0.0
    %1490 = vmatprep.subr.mxu0 0.0
    %1491 = vmatpush1.msra.mxu0 0.0
    %1492 = vmatprep.subr.mxu0 0.0
    %1493 = vmatpush1.msra.mxu0 0.0
    %1494 = vmatprep.subr.mxu0 0.0
    %1495 = vmatpush1.msra.mxu0 0.0
    %1496 = vmatprep.subr.mxu0 0.0
    %1497 = vmatpush1.msra.mxu0 0.0
    %1498 = vmatprep.subr.mxu0 0.0
    %1499 = vmatpush1.msra.mxu0 0.0
    %1500 = vmatprep.subr.mxu0 0.0
    %1501 = vmatpush1.msra.mxu0 0.0
    %1502 = vmatprep.subr.mxu0 0.0
    %1503 = vmatpush1.msra.mxu0 0.0
    %1504 = vmatprep.subr.mxu0 0.0
    %1505 = vmatpush1.msra.mxu0 0.0
    %1506 = vmatprep.subr.mxu0 0.0
    %1507 = vmatpush1.msra.mxu0 0.0
    %1508 = vmatprep.subr.mxu0 0.0
    %1509 = vmatpush1.msra.mxu0 0.0
    %1510 = vmatprep.subr.mxu0 0.0
    %1511 = vmatpush1.msra.mxu0 0.0
    %1512 = vmatprep.subr.mxu0 0.0
    %1513 = vmatpush1.msra.mxu0 0.0
    %1514 = vmatprep.subr.mxu0 0.0
    %1515 = vmatpush1.msra.mxu0 0.0
    %1516 = vmatprep.subr.mxu0 0.0
    %1517 = vmatpush1.msra.mxu0 0.0
    %1518 = vmatprep.subr.mxu0 0.0
    %1519 = vmatpush1.msra.mxu0 0.0
    %1520 = vmatprep.subr.mxu0 0.0
    %1521 = vmatpush1.msra.mxu0 0.0
    %1522 = vmatprep.subr.mxu0 0.0
    %1523 = vmatpush1.msra.mxu0 0.0
    %1524 = vmatprep.subr.mxu0 0.0
    %1525 = vmatpush1.msra.mxu0 0.0
    %1526 = vmatprep.subr.mxu0 0.0
    %1527 = vmatpush1.msra.mxu0 0.0
    %1528 = vmatprep.subr.mxu0 0.0
    %1529 = vmatpush1.msra.mxu0 0.0
    %1530 = vmatprep.subr.mxu0 0.0
    %1531 = vmatpush1.msra.mxu0 0.0
    %1532 = vmatprep.subr.mxu0 0.0
    %1533 = vmatpush1.msra.mxu0 0.0
    %1534 = vmatprep.subr.mxu0 0.0
    %1535 = vmatpush1.msra.mxu0 0.0
    %1536 = vmatprep.subr.mxu0 0.0
    %1537 = vmatpush1.msra.mxu0 0.0
    %1538 = vmatprep.subr.mxu0 0.0
    %1539 = vmatpush1.msra.mxu0 0.0
    %1540 = vmatprep.subr.mxu0 0.0
    %1541 = vmatpush1.msra.mxu0 0.0
    %1542 = vmatprep.mubr.f32.mxu0 0.0
    %1543 = vmatmul.mubr.f32.gmra.mrb[0].mxu0 %v1405
    %v1544 = vpop.f32.mrb[0].mxu0
    %v1545 = vadd.f32 0.0, %v1544
    %v1546 = vpop.f32.mrb[0].mxu0
    %v1547 = vadd.f32 0.0, %v1546
    %1548 = vdwg.mxu0
    %v1550 = vlaneseq
    %v1551 = vshrl.u32 %v1550, 7
    %v1552 = vsub.s32 0, %v1551
    %v1553 = vrot.slane %v904, %v1552
    %v1554 = vlaneseq
    %v1555 = vshrl.u32 %v1554, 7
    %v1556 = vsub.s32 1, %v1555
    %v1557 = vrot.slane %v904, %v1556
    %v1558 = vlaneseq
    %v1559 = vshrl.u32 %v1558, 7
    %v1560 = vsub.s32 2, %v1559
    %v1561 = vrot.slane %v904, %v1560
    %v1562 = vlaneseq
    %v1563 = vshrl.u32 %v1562, 7
    %v1564 = vsub.s32 3, %v1563
    %v1565 = vrot.slane %v904, %v1564
    %v1570 = vmul.f32 %v1474, %v1553
    %v1571 = vmul.f32 %v1476, %v1557
    %v1572 = vmul.f32 %v1545, %v1561
    %v1573 = vmul.f32 %v1547, %v1565
    %v1578 = vrot.slane %v1570, 2
    %v1579 = vrot.slane %v1571, 2
    %v1580 = vrot.slane %v1572, 2
    %v1581 = vrot.slane %v1573, 2
    %v1586 = vmul.f32 %v1474, %v1578
    %v1587 = vmul.f32 %v1476, %v1579
    %v1588 = vmul.f32 %v1545, %v1580
    %v1589 = vmul.f32 %v1547, %v1581
    %v1591 = vlaneseq
    %v1592 = vshrl.u32 %v1591, 7
    %v1593 = vsub.s32 0, %v1592
    %v1594 = vrot.slane %v905, %v1593
    %v1595 = vlaneseq
    %v1596 = vshrl.u32 %v1595, 7
    %v1597 = vsub.s32 1, %v1596
    %v1598 = vrot.slane %v905, %v1597
    %v1599 = vlaneseq
    %v1600 = vshrl.u32 %v1599, 7
    %v1601 = vsub.s32 2, %v1600
    %v1602 = vrot.slane %v905, %v1601
    %v1603 = vlaneseq
    %v1604 = vshrl.u32 %v1603, 7
    %v1605 = vsub.s32 3, %v1604
    %v1606 = vrot.slane %v905, %v1605
    %v1611 = vsub.f32 %v1594, %v1586
    %v1612 = vsub.f32 %v1598, %v1587
    %v1613 = vsub.f32 %v1602, %v1588
    %v1614 = vsub.f32 %v1606, %v1589
    %v1615 = vcombine.low %v1570, %v1571
    %v1616 = vcombine.low %v1572, %v1573
    %v1618 = vunpack.c.l.s4 1966171168
    %v1619 = vunpack.c.0.s8 %v1618
    %v1620 = vlaneseq
    %v1621 = vshrl.u32 %v1620, 7
    %v1622 = vsub.s32 %v1619, %v1621
    %v1623 = vrot.slane %v1615, %v1622
    %v1625 = vunpack.c.l.s4 1966171168
    %v1626 = vunpack.c.0.s8 %v1625
    %v1627 = vlaneseq
    %v1628 = vshrl.u32 %v1627, 7
    %v1629 = vsub.s32 %v1626, %v1628
    %v1630 = vrot.slane %v1616, %v1629
    %v1631 = vcombine.low %v1623, %v1630
    %v1632 = vcombine.high %v1623, %v1630
    %v1634 = vunpack.c.l.s4 1966171168
    %v1635 = vunpack.c.0.s8 %v1634
    %v1636 = vlaneseq
    %v1637 = vshrl.u32 %v1636, 7
    %v1638 = vsub.s32 %v1635, %v1637
    %v1639 = vrot.slane %v1631, %v1638
    %v1641 = vunpack.c.l.s4 1966171168
    %v1642 = vunpack.c.0.s8 %v1641
    %v1643 = vlaneseq
    %v1644 = vshrl.u32 %v1643, 7
    %v1645 = vsub.s32 %v1642, %v1644
    %v1646 = vrot.slane %v1632, %v1645
    %v1647 = vcombine.high %v1639, %v1639
    %v1648 = vcombine.high %v1646, %v1646
    %v1649 = vlaneseq
    %v1650 = vshrl.u32 %v1649, 7
    %v1651 = vsub.s32 0, %v1650
    %v1652 = vrot.slane %v1647, %v1651
    %v1653 = vlaneseq
    %v1654 = vshrl.u32 %v1653, 7
    %v1655 = vsub.s32 1, %v1654
    %v1656 = vrot.slane %v1647, %v1655
    %v1657 = vlaneseq
    %v1658 = vshrl.u32 %v1657, 7
    %v1659 = vsub.s32 2, %v1658
    %v1660 = vrot.slane %v1647, %v1659
    %v1661 = vlaneseq
    %v1662 = vshrl.u32 %v1661, 7
    %v1663 = vsub.s32 3, %v1662
    %v1664 = vrot.slane %v1647, %v1663
    %v1665 = vlaneseq
    %v1666 = vshrl.u32 %v1665, 7
    %v1667 = vsub.s32 0, %v1666
    %v1668 = vrot.slane %v1648, %v1667
    %v1669 = vlaneseq
    %v1670 = vshrl.u32 %v1669, 7
    %v1671 = vsub.s32 1, %v1670
    %v1672 = vrot.slane %v1648, %v1671
    %v1673 = vlaneseq
    %v1674 = vshrl.u32 %v1673, 7
    %v1675 = vsub.s32 2, %v1674
    %v1676 = vrot.slane %v1648, %v1675
    %v1677 = vlaneseq
    %v1678 = vshrl.u32 %v1677, 7
    %v1679 = vsub.s32 3, %v1678
    %v1680 = vrot.slane %v1648, %v1679
    %v1689 = vmul.f32 %v888, %v1652
    %v1690 = vmul.f32 %v889, %v1656
    %v1691 = vmul.f32 %v890, %v1660
    %v1692 = vmul.f32 %v891, %v1664
    %v1693 = vmul.f32 %v892, %v1652
    %v1694 = vmul.f32 %v893, %v1656
    %v1695 = vmul.f32 %v894, %v1660
    %v1696 = vmul.f32 %v895, %v1664
    %v1697 = vmul.f32 %v896, %v1668
    %v1698 = vmul.f32 %v897, %v1672
    %v1699 = vmul.f32 %v898, %v1676
    %v1700 = vmul.f32 %v899, %v1680
    %v1701 = vmul.f32 %v900, %v1668
    %v1702 = vmul.f32 %v901, %v1672
    %v1703 = vmul.f32 %v902, %v1676
    %v1704 = vmul.f32 %v903, %v1680
    %v1709 = vcombine.low %v1611, %v1612
    %v1710 = vcombine.low %v1613, %v1614
    %v1712 = vunpack.c.l.s4 1966171168
    %v1713 = vunpack.c.0.s8 %v1712
    %v1714 = vlaneseq
    %v1715 = vshrl.u32 %v1714, 7
    %v1716 = vsub.s32 %v1713, %v1715
    %v1717 = vrot.slane %v1709, %v1716
    %v1719 = vunpack.c.l.s4 1966171168
    %v1720 = vunpack.c.0.s8 %v1719
    %v1721 = vlaneseq
    %v1722 = vshrl.u32 %v1721, 7
    %v1723 = vsub.s32 %v1720, %v1722
    %v1724 = vrot.slane %v1710, %v1723
    %v1725 = vcombine.low %v1717, %v1724
    %v1726 = vcombine.high %v1717, %v1724
    %v1728 = vunpack.c.l.s4 1966171168
    %v1729 = vunpack.c.0.s8 %v1728
    %v1730 = vlaneseq
    %v1731 = vshrl.u32 %v1730, 7
    %v1732 = vsub.s32 %v1729, %v1731
    %v1733 = vrot.slane %v1725, %v1732
    %v1735 = vunpack.c.l.s4 1966171168
    %v1736 = vunpack.c.0.s8 %v1735
    %v1737 = vlaneseq
    %v1738 = vshrl.u32 %v1737, 7
    %v1739 = vsub.s32 %v1736, %v1738
    %v1740 = vrot.slane %v1726, %v1739
    %v1741 = vlaneseq
    %v1742 = vshrl.u32 %v1741, 7
    %v1743 = vsub.s32 0, %v1742
    %v1744 = vrot.slane %v1733, %v1743
    %v1745 = vlaneseq
    %v1746 = vshrl.u32 %v1745, 7
    %v1747 = vsub.s32 1, %v1746
    %v1748 = vrot.slane %v1733, %v1747
    %v1749 = vlaneseq
    %v1750 = vshrl.u32 %v1749, 7
    %v1751 = vsub.s32 2, %v1750
    %v1752 = vrot.slane %v1733, %v1751
    %v1753 = vlaneseq
    %v1754 = vshrl.u32 %v1753, 7
    %v1755 = vsub.s32 3, %v1754
    %v1756 = vrot.slane %v1733, %v1755
    %v1757 = vlaneseq
    %v1758 = vshrl.u32 %v1757, 7
    %v1759 = vsub.s32 0, %v1758
    %v1760 = vrot.slane %v1740, %v1759
    %v1761 = vlaneseq
    %v1762 = vshrl.u32 %v1761, 7
    %v1763 = vsub.s32 1, %v1762
    %v1764 = vrot.slane %v1740, %v1763
    %v1765 = vlaneseq
    %v1766 = vshrl.u32 %v1765, 7
    %v1767 = vsub.s32 2, %v1766
    %v1768 = vrot.slane %v1740, %v1767
    %v1769 = vlaneseq
    %v1770 = vshrl.u32 %v1769, 7
    %v1771 = vsub.s32 3, %v1770
    %v1772 = vrot.slane %v1740, %v1771
    %v1781 = vadd.f32 %v1689, %v1744
    %v1782 = vadd.f32 %v1690, %v1748
    %v1783 = vadd.f32 %v1691, %v1752
    %v1784 = vadd.f32 %v1692, %v1756
    %v1785 = vadd.f32 %v1693, %v1744
    %v1786 = vadd.f32 %v1694, %v1748
    %v1787 = vadd.f32 %v1695, %v1752
    %v1788 = vadd.f32 %v1696, %v1756
    %v1789 = vadd.f32 %v1697, %v1760
    %v1790 = vadd.f32 %v1698, %v1764
    %v1791 = vadd.f32 %v1699, %v1768
    %v1792 = vadd.f32 %v1700, %v1772
    %v1793 = vadd.f32 %v1701, %v1760
    %v1794 = vadd.f32 %v1702, %v1764
    %v1795 = vadd.f32 %v1703, %v1768
    %v1796 = vadd.f32 %v1704, %v1772
    %v1797 = vmax.f32 %v1781, 0.0
    %v1798 = vmax.f32 %v1782, 0.0
    %v1799 = vmax.f32 %v1783, 0.0
    %v1800 = vmax.f32 %v1784, 0.0
    %v1801 = vmax.f32 %v1785, 0.0
    %v1802 = vmax.f32 %v1786, 0.0
    %v1803 = vmax.f32 %v1787, 0.0
    %v1804 = vmax.f32 %v1788, 0.0
    %v1805 = vmax.f32 %v1789, 0.0
    %v1806 = vmax.f32 %v1790, 0.0
    %v1807 = vmax.f32 %v1791, 0.0
    %v1808 = vmax.f32 %v1792, 0.0
    %v1809 = vmax.f32 %v1793, 0.0
    %v1810 = vmax.f32 %v1794, 0.0
    %v1811 = vmax.f32 %v1795, 0.0
    %v1812 = vmax.f32 %v1796, 0.0
    %v1813 = vlaneseq
    %vm1814 = vcmp.ge.s32.totalorder %v1813, 0
    %vm1815 = vcmp.lt.s32.totalorder %v1813, 512
    %vm1816 = vmand %vm1814, %vm1815
    %1817 = vst.msk [vmem:[#allocation2] ss:$8 sm:$0xf] %vm1816, 0.0
    %1818 = vst.msk [vmem:[#allocation2] ss:$8 sm:$0x0] %vm1816, 0.0
    %s1819 = scalar_lea.vmem [#allocation2], 96
    %1820 = vst.msk [vmem:[%s1819] ss:$8 sm:$0xf] %vm1816, 0.0
    %1821 = vst.msk [vmem:[%s1819] ss:$8 sm:$0x0] %vm1816, 0.0
    %s1822 = scalar_lea.vmem [#allocation2], 65
    %1823 = vst.msk [vmem:[%s1822] ss:$8 sm:$0xf] %vm1816, 0.0
    %1824 = vst.msk [vmem:[%s1822] ss:$8 sm:$0x0] %vm1816, 0.0
    %s1825 = scalar_lea.vmem [#allocation2], 161
    %1826 = vst.msk [vmem:[%s1825] ss:$8 sm:$0xf] %vm1816, 0.0
    %1827 = vst.msk [vmem:[%s1825] ss:$8 sm:$0x0] %vm1816, 0.0
    %vm1844 = vcmask 1040384
    %v1845 = vrot.slane %v1797, 7
    %v1846 = vrot.slane %v1798, 7
    %v1847 = vrot.slane %v1799, 7
    %v1848 = vrot.slane %v1800, 7
    %v1849 = vrot.slane %v1801, 7
    %v1850 = vsel %vm1844, %v1845, %v1849
    %v1851 = vrot.slane %v1802, 7
    %v1852 = vsel %vm1844, %v1846, %v1851
    %v1853 = vrot.slane %v1803, 7
    %v1854 = vsel %vm1844, %v1847, %v1853
    %v1855 = vrot.slane %v1804, 7
    %v1856 = vsel %vm1844, %v1848, %v1855
    %v1857 = vrot.slane %v1805, 7
    %v1858 = vrot.slane %v1806, 7
    %v1859 = vrot.slane %v1807, 7
    %v1860 = vrot.slane %v1808, 7
    %v1861 = vrot.slane %v1809, 7
    %v1862 = vsel %vm1844, %v1857, %v1861
    %v1863 = vrot.slane %v1810, 7
    %v1864 = vsel %vm1844, %v1858, %v1863
    %v1865 = vrot.slane %v1811, 7
    %v1866 = vsel %vm1844, %v1859, %v1865
    %v1867 = vrot.slane %v1812, 7
    %v1868 = vsel %vm1844, %v1860, %v1867
    %1893 = vst [vmem:[#allocation2] sm:$0xfe] %v1845
    %1894 = vst [vmem:[#allocation2 + $0x8] sm:$0xfe] %v1846
    %1895 = vst [vmem:[#allocation2 + $0x10] sm:$0xfe] %v1847
    %1896 = vst [vmem:[#allocation2 + $0x18] sm:$0xfe] %v1848
    %1897 = vst [vmem:[#allocation2 + $0x20] sm:$0xff] %v1850
    %1898 = vst [vmem:[#allocation2 + $0x28] sm:$0xff] %v1852
    %1899 = vst [vmem:[#allocation2 + $0x30] sm:$0xff] %v1854
    %1900 = vst [vmem:[#allocation2 + $0x38] sm:$0xff] %v1856
    %1901 = vst [vmem:[#allocation2 + $0x40] sm:$0x1] %v1849
    %1902 = vst [vmem:[#allocation2 + $0x48] sm:$0x1] %v1851
    %1903 = vst [vmem:[#allocation2 + $0x50] sm:$0x1] %v1853
    %1904 = vst [vmem:[#allocation2 + $0x58] sm:$0x1] %v1855
    %1905 = vst [vmem:[#allocation2 + $0x60] sm:$0xfe] %v1857
    %1906 = vst [vmem:[#allocation2 + $0x68] sm:$0xfe] %v1858
    %1907 = vst [vmem:[#allocation2 + $0x70] sm:$0xfe] %v1859
    %1908 = vst [vmem:[#allocation2 + $0x78] sm:$0xfe] %v1860
    %1909 = vst [vmem:[#allocation2 + $0x80] sm:$0xff] %v1862
    %1910 = vst [vmem:[#allocation2 + $0x88] sm:$0xff] %v1864
    %1911 = vst [vmem:[#allocation2 + $0x90] sm:$0xff] %v1866
    %1912 = vst [vmem:[#allocation2 + $0x98] sm:$0xff] %v1868
    %1913 = vst [vmem:[#allocation2 + $0xa0] sm:$0x1] %v1861
    %1914 = vst [vmem:[#allocation2 + $0xa8] sm:$0x1] %v1863
    %1915 = vst [vmem:[#allocation2 + $0xb0] sm:$0x1] %v1865
    %1916 = vst [vmem:[#allocation2 + $0xb8] sm:$0x1] %v1867
    %v1917 = vld [vmem:[#allocation14] sm:$0xf]
    %v1918 = vld [vmem:[#allocation2] sm:$0xff]
    %v1919 = vld [vmem:[#allocation2 + $0x8] sm:$0xff]
    %v1920 = vld [vmem:[#allocation2 + $0x10] sm:$0xff]
    %v1921 = vld [vmem:[#allocation2 + $0x18] sm:$0xff]
    %v1922 = vld [vmem:[#allocation2 + $0x20] sm:$0xff]
    %v1923 = vld [vmem:[#allocation2 + $0x28] sm:$0xff]
    %v1924 = vld [vmem:[#allocation2 + $0x30] sm:$0xff]
    %v1925 = vld [vmem:[#allocation2 + $0x38] sm:$0xff]
    %v1926 = vld [vmem:[#allocation2 + $0x60] sm:$0xff]
    %v1927 = vld [vmem:[#allocation2 + $0x68] sm:$0xff]
    %v1928 = vld [vmem:[#allocation2 + $0x70] sm:$0xff]
    %v1929 = vld [vmem:[#allocation2 + $0x78] sm:$0xff]
    %v1930 = vld [vmem:[#allocation2 + $0x80] sm:$0xff]
    %v1931 = vld [vmem:[#allocation2 + $0x88] sm:$0xff]
    %v1932 = vld [vmem:[#allocation2 + $0x90] sm:$0xff]
    %v1933 = vld [vmem:[#allocation2 + $0x98] sm:$0xff]
    %v1934 = vld [vmem:[#allocation12] sm:$0xff]
    %v1935 = vld [vmem:[#allocation12 + $0x8] sm:$0xff]
    %v1936 = vld [vmem:[#allocation12 + $0x10] sm:$0xff]
    %v1937 = vld [vmem:[#allocation12 + $0x18] sm:$0xff]
    %v1938 = vld [vmem:[#allocation12 + $0x20] sm:$0xff]
    %v1939 = vld [vmem:[#allocation12 + $0x28] sm:$0xff]
    %v1940 = vld [vmem:[#allocation12 + $0x30] sm:$0xff]
    %v1941 = vld [vmem:[#allocation12 + $0x38] sm:$0xff]
    %v1942 = vld [vmem:[#allocation12 + $0x40] sm:$0xff]
    %v1943 = vld [vmem:[#allocation12 + $0x48] sm:$0xff]
    %v1944 = vld [vmem:[#allocation12 + $0x50] sm:$0xff]
    %v1945 = vld [vmem:[#allocation12 + $0x58] sm:$0xff]
    %v1946 = vld [vmem:[#allocation12 + $0x60] sm:$0xff]
    %v1947 = vld [vmem:[#allocation12 + $0x68] sm:$0xff]
    %v1948 = vld [vmem:[#allocation12 + $0x70] sm:$0xff]
    %v1949 = vld [vmem:[#allocation12 + $0x78] sm:$0xff]
    %v1950 = vld [vmem:[#allocation12 + $0x80] sm:$0xff]
    %v1951 = vld [vmem:[#allocation12 + $0x88] sm:$0xff]
    %v1952 = vld [vmem:[#allocation12 + $0x90] sm:$0xff]
    %v1953 = vld [vmem:[#allocation12 + $0x98] sm:$0xff]
    %v1954 = vld [vmem:[#allocation12 + $0xa0] sm:$0xff]
    %v1955 = vld [vmem:[#allocation12 + $0xa8] sm:$0xff]
    %v1956 = vld [vmem:[#allocation12 + $0xb0] sm:$0xff]
    %v1957 = vld [vmem:[#allocation12 + $0xb8] sm:$0xff]
    %v1958 = vld [vmem:[#allocation12 + $0xc0] sm:$0xff]
    %v1959 = vld [vmem:[#allocation12 + $0xc8] sm:$0xff]
    %v1960 = vld [vmem:[#allocation12 + $0xd0] sm:$0xff]
    %v1961 = vld [vmem:[#allocation12 + $0xd8] sm:$0xff]
    %v1962 = vld [vmem:[#allocation12 + $0xe0] sm:$0xff]
    %v1963 = vld [vmem:[#allocation12 + $0xe8] sm:$0xff]
    %v1964 = vld [vmem:[#allocation12 + $0xf0] sm:$0xff]
    %v1965 = vld [vmem:[#allocation12 + $0xf8] sm:$0xff]
    %v1966 = vld [vmem:[#allocation12 + $0x100] sm:$0xff]
    %v1967 = vld [vmem:[#allocation12 + $0x108] sm:$0xff]
    %v1968 = vld [vmem:[#allocation12 + $0x110] sm:$0xff]
    %v1969 = vld [vmem:[#allocation12 + $0x118] sm:$0xff]
    %v1970 = vld [vmem:[#allocation12 + $0x120] sm:$0xff]
    %v1971 = vld [vmem:[#allocation12 + $0x128] sm:$0xff]
    %v1972 = vld [vmem:[#allocation12 + $0x130] sm:$0xff]
    %v1973 = vld [vmem:[#allocation12 + $0x138] sm:$0xff]
    %v1974 = vld [vmem:[#allocation12 + $0x140] sm:$0xff]
    %v1975 = vld [vmem:[#allocation12 + $0x148] sm:$0xff]
    %v1976 = vld [vmem:[#allocation12 + $0x150] sm:$0xff]
    %v1977 = vld [vmem:[#allocation12 + $0x158] sm:$0xff]
    %v1978 = vld [vmem:[#allocation12 + $0x160] sm:$0xff]
    %v1979 = vld [vmem:[#allocation12 + $0x168] sm:$0xff]
    %v1980 = vld [vmem:[#allocation12 + $0x170] sm:$0xff]
    %v1981 = vld [vmem:[#allocation12 + $0x178] sm:$0xff]
    %v1982 = vld [vmem:[#allocation12 + $0x180] sm:$0xff]
    %v1983 = vld [vmem:[#allocation12 + $0x188] sm:$0xff]
    %v1984 = vld [vmem:[#allocation12 + $0x190] sm:$0xff]
    %v1985 = vld [vmem:[#allocation12 + $0x198] sm:$0xff]
    %v1986 = vld [vmem:[#allocation12 + $0x1a0] sm:$0xff]
    %v1987 = vld [vmem:[#allocation12 + $0x1a8] sm:$0xff]
    %v1988 = vld [vmem:[#allocation12 + $0x1b0] sm:$0xff]
    %v1989 = vld [vmem:[#allocation12 + $0x1b8] sm:$0xff]
    %v1990 = vld [vmem:[#allocation12 + $0x1c0] sm:$0xff]
    %v1991 = vld [vmem:[#allocation12 + $0x1c8] sm:$0xff]
    %v1992 = vld [vmem:[#allocation12 + $0x1d0] sm:$0xff]
    %v1993 = vld [vmem:[#allocation12 + $0x1d8] sm:$0xff]
    %v1994 = vld [vmem:[#allocation12 + $0x1e0] sm:$0xff]
    %v1995 = vld [vmem:[#allocation12 + $0x1e8] sm:$0xff]
    %v1996 = vld [vmem:[#allocation12 + $0x1f0] sm:$0xff]
    %v1997 = vld [vmem:[#allocation12 + $0x1f8] sm:$0xff]
    %v1998 = vld [vmem:[#allocation12 + $0x200] sm:$0xff]
    %v1999 = vld [vmem:[#allocation12 + $0x208] sm:$0xff]
    %v2000 = vld [vmem:[#allocation12 + $0x210] sm:$0xff]
    %v2001 = vld [vmem:[#allocation12 + $0x218] sm:$0xff]
    %v2002 = vld [vmem:[#allocation12 + $0x220] sm:$0xff]
    %v2003 = vld [vmem:[#allocation12 + $0x228] sm:$0xff]
    %v2004 = vld [vmem:[#allocation12 + $0x230] sm:$0xff]
    %v2005 = vld [vmem:[#allocation12 + $0x238] sm:$0xff]
    %v2006 = vld [vmem:[#allocation12 + $0x240] sm:$0xff]
    %v2007 = vld [vmem:[#allocation12 + $0x248] sm:$0xff]
    %v2008 = vld [vmem:[#allocation12 + $0x250] sm:$0xff]
    %v2009 = vld [vmem:[#allocation12 + $0x258] sm:$0xff]
    %v2010 = vld [vmem:[#allocation12 + $0x260] sm:$0xff]
    %v2011 = vld [vmem:[#allocation12 + $0x268] sm:$0xff]
    %v2012 = vld [vmem:[#allocation12 + $0x270] sm:$0xff]
    %v2013 = vld [vmem:[#allocation12 + $0x278] sm:$0xff]
    %v2014 = vld [vmem:[#allocation12 + $0x280] sm:$0xff]
    %v2015 = vld [vmem:[#allocation12 + $0x288] sm:$0xff]
    %v2016 = vld [vmem:[#allocation12 + $0x290] sm:$0xff]
    %v2017 = vld [vmem:[#allocation12 + $0x298] sm:$0xff]
    %v2018 = vld [vmem:[#allocation12 + $0x2a0] sm:$0xff]
    %v2019 = vld [vmem:[#allocation12 + $0x2a8] sm:$0xff]
    %v2020 = vld [vmem:[#allocation12 + $0x2b0] sm:$0xff]
    %v2021 = vld [vmem:[#allocation12 + $0x2b8] sm:$0xff]
    %v2022 = vld [vmem:[#allocation12 + $0x2c0] sm:$0xff]
    %v2023 = vld [vmem:[#allocation12 + $0x2c8] sm:$0xff]
    %v2024 = vld [vmem:[#allocation12 + $0x2d0] sm:$0xff]
    %v2025 = vld [vmem:[#allocation12 + $0x2d8] sm:$0xff]
    %v2026 = vld [vmem:[#allocation12 + $0x2e0] sm:$0xff]
    %v2027 = vld [vmem:[#allocation12 + $0x2e8] sm:$0xff]
    %v2028 = vld [vmem:[#allocation12 + $0x2f0] sm:$0xff]
    %v2029 = vld [vmem:[#allocation12 + $0x2f8] sm:$0xff]
    %v2030 = vld [vmem:[#allocation12 + $0x300] sm:$0xff]
    %v2031 = vld [vmem:[#allocation12 + $0x308] sm:$0xff]
    %v2032 = vld [vmem:[#allocation12 + $0x310] sm:$0xff]
    %v2033 = vld [vmem:[#allocation12 + $0x318] sm:$0xff]
    %v2034 = vld [vmem:[#allocation12 + $0x320] sm:$0xff]
    %v2035 = vld [vmem:[#allocation12 + $0x328] sm:$0xff]
    %v2036 = vld [vmem:[#allocation12 + $0x330] sm:$0xff]
    %v2037 = vld [vmem:[#allocation12 + $0x338] sm:$0xff]
    %v2038 = vld [vmem:[#allocation12 + $0x340] sm:$0xff]
    %v2039 = vld [vmem:[#allocation12 + $0x348] sm:$0xff]
    %v2040 = vld [vmem:[#allocation12 + $0x350] sm:$0xff]
    %v2041 = vld [vmem:[#allocation12 + $0x358] sm:$0xff]
    %v2042 = vld [vmem:[#allocation12 + $0x360] sm:$0xff]
    %v2043 = vld [vmem:[#allocation12 + $0x368] sm:$0xff]
    %v2044 = vld [vmem:[#allocation12 + $0x370] sm:$0xff]
    %v2045 = vld [vmem:[#allocation12 + $0x378] sm:$0xff]
    %v2046 = vld [vmem:[#allocation12 + $0x380] sm:$0xff]
    %v2047 = vld [vmem:[#allocation12 + $0x388] sm:$0xff]
    %v2048 = vld [vmem:[#allocation12 + $0x390] sm:$0xff]
    %v2049 = vld [vmem:[#allocation12 + $0x398] sm:$0xff]
    %v2050 = vld [vmem:[#allocation12 + $0x3a0] sm:$0xff]
    %v2051 = vld [vmem:[#allocation12 + $0x3a8] sm:$0xff]
    %v2052 = vld [vmem:[#allocation12 + $0x3b0] sm:$0xff]
    %v2053 = vld [vmem:[#allocation12 + $0x3b8] sm:$0xff]
    %v2054 = vld [vmem:[#allocation12 + $0x3c0] sm:$0xff]
    %v2055 = vld [vmem:[#allocation12 + $0x3c8] sm:$0xff]
    %v2056 = vld [vmem:[#allocation12 + $0x3d0] sm:$0xff]
    %v2057 = vld [vmem:[#allocation12 + $0x3d8] sm:$0xff]
    %v2058 = vld [vmem:[#allocation12 + $0x3e0] sm:$0xff]
    %v2059 = vld [vmem:[#allocation12 + $0x3e8] sm:$0xff]
    %v2060 = vld [vmem:[#allocation12 + $0x3f0] sm:$0xff]
    %v2061 = vld [vmem:[#allocation12 + $0x3f8] sm:$0xff]
    %v2062 = vld [vmem:[#allocation12 + $0x400] sm:$0xff]
    %v2063 = vld [vmem:[#allocation12 + $0x408] sm:$0xff]
    %v2064 = vld [vmem:[#allocation12 + $0x410] sm:$0xff]
    %v2065 = vld [vmem:[#allocation12 + $0x418] sm:$0xff]
    %v2066 = vld [vmem:[#allocation12 + $0x420] sm:$0xff]
    %v2067 = vld [vmem:[#allocation12 + $0x428] sm:$0xff]
    %v2068 = vld [vmem:[#allocation12 + $0x430] sm:$0xff]
    %v2069 = vld [vmem:[#allocation12 + $0x438] sm:$0xff]
    %v2070 = vld [vmem:[#allocation12 + $0x440] sm:$0xff]
    %v2071 = vld [vmem:[#allocation12 + $0x448] sm:$0xff]
    %v2072 = vld [vmem:[#allocation12 + $0x450] sm:$0xff]
    %v2073 = vld [vmem:[#allocation12 + $0x458] sm:$0xff]
    %v2074 = vld [vmem:[#allocation12 + $0x460] sm:$0xff]
    %v2075 = vld [vmem:[#allocation12 + $0x468] sm:$0xff]
    %v2076 = vld [vmem:[#allocation12 + $0x470] sm:$0xff]
    %v2077 = vld [vmem:[#allocation12 + $0x478] sm:$0xff]
    %v2078 = vld [vmem:[#allocation12 + $0x480] sm:$0xff]
    %v2079 = vld [vmem:[#allocation12 + $0x488] sm:$0xff]
    %v2080 = vld [vmem:[#allocation12 + $0x490] sm:$0xff]
    %v2081 = vld [vmem:[#allocation12 + $0x498] sm:$0xff]
    %v2082 = vld [vmem:[#allocation12 + $0x4a0] sm:$0xff]
    %v2083 = vld [vmem:[#allocation12 + $0x4a8] sm:$0xff]
    %v2084 = vld [vmem:[#allocation12 + $0x4b0] sm:$0xff]
    %v2085 = vld [vmem:[#allocation12 + $0x4b8] sm:$0xff]
    %v2086 = vld [vmem:[#allocation12 + $0x4c0] sm:$0xff]
    %v2087 = vld [vmem:[#allocation12 + $0x4c8] sm:$0xff]
    %v2088 = vld [vmem:[#allocation12 + $0x4d0] sm:$0xff]
    %v2089 = vld [vmem:[#allocation12 + $0x4d8] sm:$0xff]
    %v2090 = vld [vmem:[#allocation12 + $0x4e0] sm:$0xff]
    %v2091 = vld [vmem:[#allocation12 + $0x4e8] sm:$0xff]
    %v2092 = vld [vmem:[#allocation12 + $0x4f0] sm:$0xff]
    %v2093 = vld [vmem:[#allocation12 + $0x4f8] sm:$0xff]
    %v2094 = vld [vmem:[#allocation12 + $0x500] sm:$0xff]
    %v2095 = vld [vmem:[#allocation12 + $0x508] sm:$0xff]
    %v2096 = vld [vmem:[#allocation12 + $0x510] sm:$0xff]
    %v2097 = vld [vmem:[#allocation12 + $0x518] sm:$0xff]
    %v2098 = vld [vmem:[#allocation12 + $0x520] sm:$0xff]
    %v2099 = vld [vmem:[#allocation12 + $0x528] sm:$0xff]
    %v2100 = vld [vmem:[#allocation12 + $0x530] sm:$0xff]
    %v2101 = vld [vmem:[#allocation12 + $0x538] sm:$0xff]
    %v2102 = vld [vmem:[#allocation12 + $0x540] sm:$0xff]
    %v2103 = vld [vmem:[#allocation12 + $0x548] sm:$0xff]
    %v2104 = vld [vmem:[#allocation12 + $0x550] sm:$0xff]
    %v2105 = vld [vmem:[#allocation12 + $0x558] sm:$0xff]
    %v2106 = vld [vmem:[#allocation12 + $0x560] sm:$0xff]
    %v2107 = vld [vmem:[#allocation12 + $0x568] sm:$0xff]
    %v2108 = vld [vmem:[#allocation12 + $0x570] sm:$0xff]
    %v2109 = vld [vmem:[#allocation12 + $0x578] sm:$0xff]
    %v2110 = vld [vmem:[#allocation12 + $0x580] sm:$0xff]
    %v2111 = vld [vmem:[#allocation12 + $0x588] sm:$0xff]
    %v2112 = vld [vmem:[#allocation12 + $0x590] sm:$0xff]
    %v2113 = vld [vmem:[#allocation12 + $0x598] sm:$0xff]
    %v2114 = vld [vmem:[#allocation12 + $0x5a0] sm:$0xff]
    %v2115 = vld [vmem:[#allocation12 + $0x5a8] sm:$0xff]
    %v2116 = vld [vmem:[#allocation12 + $0x5b0] sm:$0xff]
    %v2117 = vld [vmem:[#allocation12 + $0x5b8] sm:$0xff]
    %v2118 = vld [vmem:[#allocation12 + $0x5c0] sm:$0xff]
    %v2119 = vld [vmem:[#allocation12 + $0x5c8] sm:$0xff]
    %v2120 = vld [vmem:[#allocation12 + $0x5d0] sm:$0xff]
    %v2121 = vld [vmem:[#allocation12 + $0x5d8] sm:$0xff]
    %v2122 = vld [vmem:[#allocation12 + $0x5e0] sm:$0xff]
    %v2123 = vld [vmem:[#allocation12 + $0x5e8] sm:$0xff]
    %v2124 = vld [vmem:[#allocation12 + $0x5f0] sm:$0xff]
    %v2125 = vld [vmem:[#allocation12 + $0x5f8] sm:$0xff]
    %v2126 = vld [vmem:[#allocation12 + $0x600] sm:$0xff]
    %v2127 = vld [vmem:[#allocation12 + $0x608] sm:$0xff]
    %v2128 = vld [vmem:[#allocation12 + $0x610] sm:$0xff]
    %v2129 = vld [vmem:[#allocation12 + $0x618] sm:$0xff]
    %v2130 = vld [vmem:[#allocation12 + $0x620] sm:$0xff]
    %v2131 = vld [vmem:[#allocation12 + $0x628] sm:$0xff]
    %v2132 = vld [vmem:[#allocation12 + $0x630] sm:$0xff]
    %v2133 = vld [vmem:[#allocation12 + $0x638] sm:$0xff]
    %v2134 = vld [vmem:[#allocation12 + $0x640] sm:$0xff]
    %v2135 = vld [vmem:[#allocation12 + $0x648] sm:$0xff]
    %v2136 = vld [vmem:[#allocation12 + $0x650] sm:$0xff]
    %v2137 = vld [vmem:[#allocation12 + $0x658] sm:$0xff]
    %v2138 = vld [vmem:[#allocation12 + $0x660] sm:$0xff]
    %v2139 = vld [vmem:[#allocation12 + $0x668] sm:$0xff]
    %v2140 = vld [vmem:[#allocation12 + $0x670] sm:$0xff]
    %v2141 = vld [vmem:[#allocation12 + $0x678] sm:$0xff]
    %v2142 = vld [vmem:[#allocation12 + $0x680] sm:$0xff]
    %v2143 = vld [vmem:[#allocation12 + $0x688] sm:$0xff]
    %v2144 = vld [vmem:[#allocation12 + $0x690] sm:$0xff]
    %v2145 = vld [vmem:[#allocation12 + $0x698] sm:$0xff]
    %v2146 = vld [vmem:[#allocation12 + $0x6a0] sm:$0xff]
    %v2147 = vld [vmem:[#allocation12 + $0x6a8] sm:$0xff]
    %v2148 = vld [vmem:[#allocation12 + $0x6b0] sm:$0xff]
    %v2149 = vld [vmem:[#allocation12 + $0x6b8] sm:$0xff]
    %v2150 = vld [vmem:[#allocation12 + $0x6c0] sm:$0xff]
    %v2151 = vld [vmem:[#allocation12 + $0x6c8] sm:$0xff]
    %v2152 = vld [vmem:[#allocation12 + $0x6d0] sm:$0xff]
    %v2153 = vld [vmem:[#allocation12 + $0x6d8] sm:$0xff]
    %v2154 = vld [vmem:[#allocation12 + $0x6e0] sm:$0xff]
    %v2155 = vld [vmem:[#allocation12 + $0x6e8] sm:$0xff]
    %v2156 = vld [vmem:[#allocation12 + $0x6f0] sm:$0xff]
    %v2157 = vld [vmem:[#allocation12 + $0x6f8] sm:$0xff]
    %v2158 = vld [vmem:[#allocation12 + $0x700] sm:$0xff]
    %v2159 = vld [vmem:[#allocation12 + $0x708] sm:$0xff]
    %v2160 = vld [vmem:[#allocation12 + $0x710] sm:$0xff]
    %v2161 = vld [vmem:[#allocation12 + $0x718] sm:$0xff]
    %v2162 = vld [vmem:[#allocation12 + $0x720] sm:$0xff]
    %v2163 = vld [vmem:[#allocation12 + $0x728] sm:$0xff]
    %v2164 = vld [vmem:[#allocation12 + $0x730] sm:$0xff]
    %v2165 = vld [vmem:[#allocation12 + $0x738] sm:$0xff]
    %v2166 = vld [vmem:[#allocation12 + $0x740] sm:$0xff]
    %v2167 = vld [vmem:[#allocation12 + $0x748] sm:$0xff]
    %v2168 = vld [vmem:[#allocation12 + $0x750] sm:$0xff]
    %v2169 = vld [vmem:[#allocation12 + $0x758] sm:$0xff]
    %v2170 = vld [vmem:[#allocation12 + $0x760] sm:$0xff]
    %v2171 = vld [vmem:[#allocation12 + $0x768] sm:$0xff]
    %v2172 = vld [vmem:[#allocation12 + $0x770] sm:$0xff]
    %v2173 = vld [vmem:[#allocation12 + $0x778] sm:$0xff]
    %v2174 = vld [vmem:[#allocation12 + $0x780] sm:$0xff]
    %v2175 = vld [vmem:[#allocation12 + $0x788] sm:$0xff]
    %v2176 = vld [vmem:[#allocation12 + $0x790] sm:$0xff]
    %v2177 = vld [vmem:[#allocation12 + $0x798] sm:$0xff]
    %v2178 = vld [vmem:[#allocation12 + $0x7a0] sm:$0xff]
    %v2179 = vld [vmem:[#allocation12 + $0x7a8] sm:$0xff]
    %v2180 = vld [vmem:[#allocation12 + $0x7b0] sm:$0xff]
    %v2181 = vld [vmem:[#allocation12 + $0x7b8] sm:$0xff]
    %v2182 = vld [vmem:[#allocation12 + $0x7c0] sm:$0xff]
    %v2183 = vld [vmem:[#allocation12 + $0x7c8] sm:$0xff]
    %v2184 = vld [vmem:[#allocation12 + $0x7d0] sm:$0xff]
    %v2185 = vld [vmem:[#allocation12 + $0x7d8] sm:$0xff]
    %v2186 = vld [vmem:[#allocation12 + $0x7e0] sm:$0xff]
    %v2187 = vld [vmem:[#allocation12 + $0x7e8] sm:$0xff]
    %v2188 = vld [vmem:[#allocation12 + $0x7f0] sm:$0xff]
    %v2189 = vld [vmem:[#allocation12 + $0x7f8] sm:$0xff]
    %v2191 = vlaneseq
    %v2192 = vshrl.u32 %v2191, 7
    %v2193 = vsub.s32 0, %v2192
    %v2194 = vrot.slane %v1917, %v2193
    %v2195 = vlaneseq
    %v2196 = vshrl.u32 %v2195, 7
    %v2197 = vsub.s32 1, %v2196
    %v2198 = vrot.slane %v1917, %v2197
    %v2199 = vlaneseq
    %v2200 = vshrl.u32 %v2199, 7
    %v2201 = vsub.s32 2, %v2200
    %v2202 = vrot.slane %v1917, %v2201
    %v2203 = vlaneseq
    %v2204 = vshrl.u32 %v2203, 7
    %v2205 = vsub.s32 3, %v2204
    %v2206 = vrot.slane %v1917, %v2205
    %2211 = vmatprep.subr.mxu0 %v1935
    %2212 = vmatpush1.msra.mxu0 %v1934
    %2213 = vmatprep.subr.mxu0 %v1939
    %2214 = vmatpush1.msra.mxu0 %v1938
    %2215 = vmatprep.subr.mxu0 %v1943
    %2216 = vmatpush1.msra.mxu0 %v1942
    %2217 = vmatprep.subr.mxu0 %v1947
    %2218 = vmatpush1.msra.mxu0 %v1946
    %2219 = vmatprep.subr.mxu0 %v1951
    %2220 = vmatpush1.msra.mxu0 %v1950
    %2221 = vmatprep.subr.mxu0 %v1955
    %2222 = vmatpush1.msra.mxu0 %v1954
    %2223 = vmatprep.subr.mxu0 %v1959
    %2224 = vmatpush1.msra.mxu0 %v1958
    %2225 = vmatprep.subr.mxu0 %v1963
    %2226 = vmatpush1.msra.mxu0 %v1962
    %2227 = vmatprep.subr.mxu0 %v1967
    %2228 = vmatpush1.msra.mxu0 %v1966
    %2229 = vmatprep.subr.mxu0 %v1971
    %2230 = vmatpush1.msra.mxu0 %v1970
    %2231 = vmatprep.subr.mxu0 %v1975
    %2232 = vmatpush1.msra.mxu0 %v1974
    %2233 = vmatprep.subr.mxu0 %v1979
    %2234 = vmatpush1.msra.mxu0 %v1978
    %2235 = vmatprep.subr.mxu0 %v1983
    %2236 = vmatpush1.msra.mxu0 %v1982
    %2237 = vmatprep.subr.mxu0 %v1987
    %2238 = vmatpush1.msra.mxu0 %v1986
    %2239 = vmatprep.subr.mxu0 %v1991
    %2240 = vmatpush1.msra.mxu0 %v1990
    %2241 = vmatprep.subr.mxu0 %v1995
    %2242 = vmatpush1.msra.mxu0 %v1994
    %2243 = vmatprep.subr.mxu0 %v1999
    %2244 = vmatpush1.msra.mxu0 %v1998
    %2245 = vmatprep.subr.mxu0 %v2003
    %2246 = vmatpush1.msra.mxu0 %v2002
    %2247 = vmatprep.subr.mxu0 %v2007
    %2248 = vmatpush1.msra.mxu0 %v2006
    %2249 = vmatprep.subr.mxu0 %v2011
    %2250 = vmatpush1.msra.mxu0 %v2010
    %2251 = vmatprep.subr.mxu0 %v2015
    %2252 = vmatpush1.msra.mxu0 %v2014
    %2253 = vmatprep.subr.mxu0 %v2019
    %2254 = vmatpush1.msra.mxu0 %v2018
    %2255 = vmatprep.subr.mxu0 %v2023
    %2256 = vmatpush1.msra.mxu0 %v2022
    %2257 = vmatprep.subr.mxu0 %v2027
    %2258 = vmatpush1.msra.mxu0 %v2026
    %2259 = vmatprep.subr.mxu0 %v2031
    %2260 = vmatpush1.msra.mxu0 %v2030
    %2261 = vmatprep.subr.mxu0 %v2035
    %2262 = vmatpush1.msra.mxu0 %v2034
    %2263 = vmatprep.subr.mxu0 %v2039
    %2264 = vmatpush1.msra.mxu0 %v2038
    %2265 = vmatprep.subr.mxu0 %v2043
    %2266 = vmatpush1.msra.mxu0 %v2042
    %2267 = vmatprep.subr.mxu0 %v2047
    %2268 = vmatpush1.msra.mxu0 %v2046
    %2269 = vmatprep.subr.mxu0 %v2051
    %2270 = vmatpush1.msra.mxu0 %v2050
    %2271 = vmatprep.subr.mxu0 %v2055
    %2272 = vmatpush1.msra.mxu0 %v2054
    %2273 = vmatprep.subr.mxu0 %v2059
    %2274 = vmatpush1.msra.mxu0 %v2058
    %2275 = vmatprep.mubr.f32.mxu0 %v1919
    %2276 = vmatmul.mubr.f32.gmra.mrb[0].mxu0 %v1918
    %v2277 = vpop.f32.mrb[0].mxu0
    %v2278 = vadd.f32 %v2194, %v2277
    %v2279 = vpop.f32.mrb[0].mxu0
    %v2280 = vadd.f32 %v2198, %v2279
    %2281 = vmatprep.mubr.f32.mxu0 %v1923
    %2282 = vmatmul.mubr.f32.gmra.mrb[0].mxu0 %v1922
    %v2283 = vpop.f32.mrb[0].mxu0
    %v2284 = vadd.f32 %v2194, %v2283
    %v2285 = vpop.f32.mrb[0].mxu0
    %v2286 = vadd.f32 %v2198, %v2285
    %2287 = vmatprep.mubr.f32.mxu0 %v1927
    %2288 = vmatmul.mubr.f32.gmra.mrb[0].mxu0 %v1926
    %v2289 = vpop.f32.mrb[0].mxu0
    %v2290 = vadd.f32 %v2194, %v2289
    %v2291 = vpop.f32.mrb[0].mxu0
    %v2292 = vadd.f32 %v2198, %v2291
    %2293 = vmatprep.mubr.f32.mxu0 %v1931
    %2294 = vmatmul.mubr.f32.gmra.mrb[0].mxu0 %v1930
    %v2295 = vpop.f32.mrb[0].mxu0
    %v2296 = vadd.f32 %v2194, %v2295
    %v2297 = vpop.f32.mrb[0].mxu0
    %v2298 = vadd.f32 %v2198, %v2297
    %2299 = vdwg.mxu0
    %2300 = vmatprep.subr.mxu0 %v2063
    %2301 = vmatpush1.msra.mxu0 %v2062
    %2302 = vmatprep.subr.mxu0 %v2067
    %2303 = vmatpush1.msra.mxu0 %v2066
    %2304 = vmatprep.subr.mxu0 %v2071
    %2305 = vmatpush1.msra.mxu0 %v2070
    %2306 = vmatprep.subr.mxu0 %v2075
    %2307 = vmatpush1.msra.mxu0 %v2074
    %2308 = vmatprep.subr.mxu0 %v2079
    %2309 = vmatpush1.msra.mxu0 %v2078
    %2310 = vmatprep.subr.mxu0 %v2083
    %2311 = vmatpush1.msra.mxu0 %v2082
    %2312 = vmatprep.subr.mxu0 %v2087
    %2313 = vmatpush1.msra.mxu0 %v2086
    %2314 = vmatprep.subr.mxu0 %v2091
    %2315 = vmatpush1.msra.mxu0 %v2090
    %2316 = vmatprep.subr.mxu0 %v2095
    %2317 = vmatpush1.msra.mxu0 %v2094
    %2318 = vmatprep.subr.mxu0 %v2099
    %2319 = vmatpush1.msra.mxu0 %v2098
    %2320 = vmatprep.subr.mxu0 %v2103
    %2321 = vmatpush1.msra.mxu0 %v2102
    %2322 = vmatprep.subr.mxu0 %v2107
    %2323 = vmatpush1.msra.mxu0 %v2106
    %2324 = vmatprep.subr.mxu0 %v2111
    %2325 = vmatpush1.msra.mxu0 %v2110
    %2326 = vmatprep.subr.mxu0 %v2115
    %2327 = vmatpush1.msra.mxu0 %v2114
    %2328 = vmatprep.subr.mxu0 %v2119
    %2329 = vmatpush1.msra.mxu0 %v2118
    %2330 = vmatprep.subr.mxu0 %v2123
    %2331 = vmatpush1.msra.mxu0 %v2122
    %2332 = vmatprep.subr.mxu0 %v2127
    %2333 = vmatpush1.msra.mxu0 %v2126
    %2334 = vmatprep.subr.mxu0 %v2131
    %2335 = vmatpush1.msra.mxu0 %v2130
    %2336 = vmatprep.subr.mxu0 %v2135
    %2337 = vmatpush1.msra.mxu0 %v2134
    %2338 = vmatprep.subr.mxu0 %v2139
    %2339 = vmatpush1.msra.mxu0 %v2138
    %2340 = vmatprep.subr.mxu0 %v2143
    %2341 = vmatpush1.msra.mxu0 %v2142
    %2342 = vmatprep.subr.mxu0 %v2147
    %2343 = vmatpush1.msra.mxu0 %v2146
    %2344 = vmatprep.subr.mxu0 %v2151
    %2345 = vmatpush1.msra.mxu0 %v2150
    %2346 = vmatprep.subr.mxu0 %v2155
    %2347 = vmatpush1.msra.mxu0 %v2154
    %2348 = vmatprep.subr.mxu0 %v2159
    %2349 = vmatpush1.msra.mxu0 %v2158
    %2350 = vmatprep.subr.mxu0 %v2163
    %2351 = vmatpush1.msra.mxu0 %v2162
    %2352 = vmatprep.subr.mxu0 %v2167
    %2353 = vmatpush1.msra.mxu0 %v2166
    %2354 = vmatprep.subr.mxu0 %v2171
    %2355 = vmatpush1.msra.mxu0 %v2170
    %2356 = vmatprep.subr.mxu0 %v2175
    %2357 = vmatpush1.msra.mxu0 %v2174
    %2358 = vmatprep.subr.mxu0 %v2179
    %2359 = vmatpush1.msra.mxu0 %v2178
    %2360 = vmatprep.subr.mxu0 %v2183
    %2361 = vmatpush1.msra.mxu0 %v2182
    %2362 = vmatprep.subr.mxu0 %v2187
    %2363 = vmatpush1.msra.mxu0 %v2186
    %2364 = vmatprep.mubr.f32.mxu0 %v1921
    %2365 = vmatmul.mubr.f32.gmra.mrb[0].mxu0 %v1920
    %v2366 = vpop.f32.mrb[0].mxu0
    %v2367 = vadd.f32 %v2278, %v2366
    %v2368 = vpop.f32.mrb[0].mxu0
    %v2369 = vadd.f32 %v2280, %v2368
    %2370 = vmatprep.mubr.f32.mxu0 %v1925
    %2371 = vmatmul.mubr.f32.gmra.mrb[0].mxu0 %v1924
    %v2372 = vpop.f32.mrb[0].mxu0
    %v2373 = vadd.f32 %v2284, %v2372
    %v2374 = vpop.f32.mrb[0].mxu0
    %v2375 = vadd.f32 %v2286, %v2374
    %2376 = vmatprep.mubr.f32.mxu0 %v1929
    %2377 = vmatmul.mubr.f32.gmra.mrb[0].mxu0 %v1928
    %v2378 = vpop.f32.mrb[0].mxu0
    %v2379 = vadd.f32 %v2290, %v2378
    %v2380 = vpop.f32.mrb[0].mxu0
    %v2381 = vadd.f32 %v2292, %v2380
    %2382 = vmatprep.mubr.f32.mxu0 %v1933
    %2383 = vmatmul.mubr.f32.gmra.mrb[0].mxu0 %v1932
    %v2384 = vpop.f32.mrb[0].mxu0
    %v2385 = vadd.f32 %v2296, %v2384
    %v2386 = vpop.f32.mrb[0].mxu0
    %v2387 = vadd.f32 %v2298, %v2386
    %2388 = vdwg.mxu0
    %2389 = vmatprep.subr.mxu0 %v1937
    %2390 = vmatpush1.msra.mxu0 %v1936
    %2391 = vmatprep.subr.mxu0 %v1941
    %2392 = vmatpush1.msra.mxu0 %v1940
    %2393 = vmatprep.subr.mxu0 %v1945
    %2394 = vmatpush1.msra.mxu0 %v1944
    %2395 = vmatprep.subr.mxu0 %v1949
    %2396 = vmatpush1.msra.mxu0 %v1948
    %2397 = vmatprep.subr.mxu0 %v1953
    %2398 = vmatpush1.msra.mxu0 %v1952
    %2399 = vmatprep.subr.mxu0 %v1957
    %2400 = vmatpush1.msra.mxu0 %v1956
    %2401 = vmatprep.subr.mxu0 %v1961
    %2402 = vmatpush1.msra.mxu0 %v1960
    %2403 = vmatprep.subr.mxu0 %v1965
    %2404 = vmatpush1.msra.mxu0 %v1964
    %2405 = vmatprep.subr.mxu0 %v1969
    %2406 = vmatpush1.msra.mxu0 %v1968
    %2407 = vmatprep.subr.mxu0 %v1973
    %2408 = vmatpush1.msra.mxu0 %v1972
    %2409 = vmatprep.subr.mxu0 %v1977
    %2410 = vmatpush1.msra.mxu0 %v1976
    %2411 = vmatprep.subr.mxu0 %v1981
    %2412 = vmatpush1.msra.mxu0 %v1980
    %2413 = vmatprep.subr.mxu0 %v1985
    %2414 = vmatpush1.msra.mxu0 %v1984
    %2415 = vmatprep.subr.mxu0 %v1989
    %2416 = vmatpush1.msra.mxu0 %v1988
    %2417 = vmatprep.subr.mxu0 %v1993
    %2418 = vmatpush1.msra.mxu0 %v1992
    %2419 = vmatprep.subr.mxu0 %v1997
    %2420 = vmatpush1.msra.mxu0 %v1996
    %2421 = vmatprep.subr.mxu0 %v2001
    %2422 = vmatpush1.msra.mxu0 %v2000
    %2423 = vmatprep.subr.mxu0 %v2005
    %2424 = vmatpush1.msra.mxu0 %v2004
    %2425 = vmatprep.subr.mxu0 %v2009
    %2426 = vmatpush1.msra.mxu0 %v2008
    %2427 = vmatprep.subr.mxu0 %v2013
    %2428 = vmatpush1.msra.mxu0 %v2012
    %2429 = vmatprep.subr.mxu0 %v2017
    %2430 = vmatpush1.msra.mxu0 %v2016
    %2431 = vmatprep.subr.mxu0 %v2021
    %2432 = vmatpush1.msra.mxu0 %v2020
    %2433 = vmatprep.subr.mxu0 %v2025
    %2434 = vmatpush1.msra.mxu0 %v2024
    %2435 = vmatprep.subr.mxu0 %v2029
    %2436 = vmatpush1.msra.mxu0 %v2028
    %2437 = vmatprep.subr.mxu0 %v2033
    %2438 = vmatpush1.msra.mxu0 %v2032
    %2439 = vmatprep.subr.mxu0 %v2037
    %2440 = vmatpush1.msra.mxu0 %v2036
    %2441 = vmatprep.subr.mxu0 %v2041
    %2442 = vmatpush1.msra.mxu0 %v2040
    %2443 = vmatprep.subr.mxu0 %v2045
    %2444 = vmatpush1.msra.mxu0 %v2044
    %2445 = vmatprep.subr.mxu0 %v2049
    %2446 = vmatpush1.msra.mxu0 %v2048
    %2447 = vmatprep.subr.mxu0 %v2053
    %2448 = vmatpush1.msra.mxu0 %v2052
    %2449 = vmatprep.subr.mxu0 %v2057
    %2450 = vmatpush1.msra.mxu0 %v2056
    %2451 = vmatprep.subr.mxu0 %v2061
    %2452 = vmatpush1.msra.mxu0 %v2060
    %2453 = vmatprep.mubr.f32.mxu0 %v1919
    %2454 = vmatmul.mubr.f32.gmra.mrb[0].mxu0 %v1918
    %v2455 = vpop.f32.mrb[0].mxu0
    %v2456 = vadd.f32 %v2202, %v2455
    %v2457 = vpop.f32.mrb[0].mxu0
    %v2458 = vadd.f32 %v2206, %v2457
    %2459 = vmatprep.mubr.f32.mxu0 %v1923
    %2460 = vmatmul.mubr.f32.gmra.mrb[0].mxu0 %v1922
    %v2461 = vpop.f32.mrb[0].mxu0
    %v2462 = vadd.f32 %v2202, %v2461
    %v2463 = vpop.f32.mrb[0].mxu0
    %v2464 = vadd.f32 %v2206, %v2463
    %2465 = vmatprep.mubr.f32.mxu0 %v1927
    %2466 = vmatmul.mubr.f32.gmra.mrb[0].mxu0 %v1926
    %v2467 = vpop.f32.mrb[0].mxu0
    %v2468 = vadd.f32 %v2202, %v2467
    %v2469 = vpop.f32.mrb[0].mxu0
    %v2470 = vadd.f32 %v2206, %v2469
    %2471 = vmatprep.mubr.f32.mxu0 %v1931
    %2472 = vmatmul.mubr.f32.gmra.mrb[0].mxu0 %v1930
    %v2473 = vpop.f32.mrb[0].mxu0
    %v2474 = vadd.f32 %v2202, %v2473
    %v2475 = vpop.f32.mrb[0].mxu0
    %v2476 = vadd.f32 %v2206, %v2475
    %2477 = vdwg.mxu0
    %2478 = vmatprep.subr.mxu0 %v2065
    %2479 = vmatpush1.msra.mxu0 %v2064
    %2480 = vmatprep.subr.mxu0 %v2069
    %2481 = vmatpush1.msra.mxu0 %v2068
    %2482 = vmatprep.subr.mxu0 %v2073
    %2483 = vmatpush1.msra.mxu0 %v2072
    %2484 = vmatprep.subr.mxu0 %v2077
    %2485 = vmatpush1.msra.mxu0 %v2076
    %2486 = vmatprep.subr.mxu0 %v2081
    %2487 = vmatpush1.msra.mxu0 %v2080
    %2488 = vmatprep.subr.mxu0 %v2085
    %2489 = vmatpush1.msra.mxu0 %v2084
    %2490 = vmatprep.subr.mxu0 %v2089
    %2491 = vmatpush1.msra.mxu0 %v2088
    %2492 = vmatprep.subr.mxu0 %v2093
    %2493 = vmatpush1.msra.mxu0 %v2092
    %2494 = vmatprep.subr.mxu0 %v2097
    %2495 = vmatpush1.msra.mxu0 %v2096
    %2496 = vmatprep.subr.mxu0 %v2101
    %2497 = vmatpush1.msra.mxu0 %v2100
    %2498 = vmatprep.subr.mxu0 %v2105
    %2499 = vmatpush1.msra.mxu0 %v2104
    %2500 = vmatprep.subr.mxu0 %v2109
    %2501 = vmatpush1.msra.mxu0 %v2108
    %2502 = vmatprep.subr.mxu0 %v2113
    %2503 = vmatpush1.msra.mxu0 %v2112
    %2504 = vmatprep.subr.mxu0 %v2117
    %2505 = vmatpush1.msra.mxu0 %v2116
    %2506 = vmatprep.subr.mxu0 %v2121
    %2507 = vmatpush1.msra.mxu0 %v2120
    %2508 = vmatprep.subr.mxu0 %v2125
    %2509 = vmatpush1.msra.mxu0 %v2124
    %2510 = vmatprep.subr.mxu0 %v2129
    %2511 = vmatpush1.msra.mxu0 %v2128
    %2512 = vmatprep.subr.mxu0 %v2133
    %2513 = vmatpush1.msra.mxu0 %v2132
    %2514 = vmatprep.subr.mxu0 %v2137
    %2515 = vmatpush1.msra.mxu0 %v2136
    %2516 = vmatprep.subr.mxu0 %v2141
    %2517 = vmatpush1.msra.mxu0 %v2140
    %2518 = vmatprep.subr.mxu0 %v2145
    %2519 = vmatpush1.msra.mxu0 %v2144
    %2520 = vmatprep.subr.mxu0 %v2149
    %2521 = vmatpush1.msra.mxu0 %v2148
    %2522 = vmatprep.subr.mxu0 %v2153
    %2523 = vmatpush1.msra.mxu0 %v2152
    %2524 = vmatprep.subr.mxu0 %v2157
    %2525 = vmatpush1.msra.mxu0 %v2156
    %2526 = vmatprep.subr.mxu0 %v2161
    %2527 = vmatpush1.msra.mxu0 %v2160
    %2528 = vmatprep.subr.mxu0 %v2165
    %2529 = vmatpush1.msra.mxu0 %v2164
    %2530 = vmatprep.subr.mxu0 %v2169
    %2531 = vmatpush1.msra.mxu0 %v2168
    %2532 = vmatprep.subr.mxu0 %v2173
    %2533 = vmatpush1.msra.mxu0 %v2172
    %2534 = vmatprep.subr.mxu0 %v2177
    %2535 = vmatpush1.msra.mxu0 %v2176
    %2536 = vmatprep.subr.mxu0 %v2181
    %2537 = vmatpush1.msra.mxu0 %v2180
    %2538 = vmatprep.subr.mxu0 %v2185
    %2539 = vmatpush1.msra.mxu0 %v2184
    %2540 = vmatprep.subr.mxu0 %v2189
    %2541 = vmatpush1.msra.mxu0 %v2188
    %2542 = vmatprep.mubr.f32.mxu0 %v1921
    %2543 = vmatmul.mubr.f32.gmra.mrb[0].mxu0 %v1920
    %v2544 = vpop.f32.mrb[0].mxu0
    %v2545 = vadd.f32 %v2456, %v2544
    %v2546 = vpop.f32.mrb[0].mxu0
    %v2547 = vadd.f32 %v2458, %v2546
    %2548 = vmatprep.mubr.f32.mxu0 %v1925
    %2549 = vmatmul.mubr.f32.gmra.mrb[0].mxu0 %v1924
    %v2550 = vpop.f32.mrb[0].mxu0
    %v2551 = vadd.f32 %v2462, %v2550
    %v2552 = vpop.f32.mrb[0].mxu0
    %v2553 = vadd.f32 %v2464, %v2552
    %2554 = vmatprep.mubr.f32.mxu0 %v1929
    %2555 = vmatmul.mubr.f32.gmra.mrb[0].mxu0 %v1928
    %v2556 = vpop.f32.mrb[0].mxu0
    %v2557 = vadd.f32 %v2468, %v2556
    %v2558 = vpop.f32.mrb[0].mxu0
    %v2559 = vadd.f32 %v2470, %v2558
    %2560 = vmatprep.mubr.f32.mxu0 %v1933
    %2561 = vmatmul.mubr.f32.gmra.mrb[0].mxu0 %v1932
    %v2562 = vpop.f32.mrb[0].mxu0
    %v2563 = vadd.f32 %v2474, %v2562
    %v2564 = vpop.f32.mrb[0].mxu0
    %v2565 = vadd.f32 %v2476, %v2564
    %2566 = vdwg.mxu0
    %v2567 = vld [vmem:[#allocation2] sm:$0xfe]
    %v2568 = vld [vmem:[#allocation2 + $0x8] sm:$0xfe]
    %v2569 = vld [vmem:[#allocation2 + $0x10] sm:$0xfe]
    %v2570 = vld [vmem:[#allocation2 + $0x18] sm:$0xfe]
    %v2571 = vld [vmem:[#allocation2 + $0x20] sm:$0xff]
    %v2572 = vld [vmem:[#allocation2 + $0x28] sm:$0xff]
    %v2573 = vld [vmem:[#allocation2 + $0x30] sm:$0xff]
    %v2574 = vld [vmem:[#allocation2 + $0x38] sm:$0xff]
    %v2575 = vld [vmem:[#allocation2 + $0x40] sm:$0x1]
    %v2576 = vld [vmem:[#allocation2 + $0x48] sm:$0x1]
    %v2577 = vld [vmem:[#allocation2 + $0x50] sm:$0x1]
    %v2578 = vld [vmem:[#allocation2 + $0x58] sm:$0x1]
    %v2579 = vld [vmem:[#allocation2 + $0x60] sm:$0xfe]
    %v2580 = vld [vmem:[#allocation2 + $0x68] sm:$0xfe]
    %v2581 = vld [vmem:[#allocation2 + $0x70] sm:$0xfe]
    %v2582 = vld [vmem:[#allocation2 + $0x78] sm:$0xfe]
    %v2583 = vld [vmem:[#allocation2 + $0x80] sm:$0xff]
    %v2584 = vld [vmem:[#allocation2 + $0x88] sm:$0xff]
    %v2585 = vld [vmem:[#allocation2 + $0x90] sm:$0xff]
    %v2586 = vld [vmem:[#allocation2 + $0x98] sm:$0xff]
    %v2587 = vld [vmem:[#allocation2 + $0xa0] sm:$0x1]
    %v2588 = vld [vmem:[#allocation2 + $0xa8] sm:$0x1]
    %v2589 = vld [vmem:[#allocation2 + $0xb0] sm:$0x1]
    %v2590 = vld [vmem:[#allocation2 + $0xb8] sm:$0x1]
    %vm2615 = vcmask 1046528
    %v2616 = vrot.slane %v2567, 1
    %v2617 = vrot.slane %v2571, 1
    %v2618 = vsel %vm2615, %v2616, %v2617
    %v2619 = vrot.slane %v2568, 1
    %v2620 = vrot.slane %v2572, 1
    %v2621 = vsel %vm2615, %v2619, %v2620
    %v2622 = vrot.slane %v2569, 1
    %v2623 = vrot.slane %v2573, 1
    %v2624 = vsel %vm2615, %v2622, %v2623
    %v2625 = vrot.slane %v2570, 1
    %v2626 = vrot.slane %v2574, 1
    %v2627 = vsel %vm2615, %v2625, %v2626
    %v2628 = vrot.slane %v2575, 1
    %v2629 = vsel %vm2615, %v2617, %v2628
    %v2630 = vrot.slane %v2576, 1
    %v2631 = vsel %vm2615, %v2620, %v2630
    %v2632 = vrot.slane %v2577, 1
    %v2633 = vsel %vm2615, %v2623, %v2632
    %v2634 = vrot.slane %v2578, 1
    %v2635 = vsel %vm2615, %v2626, %v2634
    %v2636 = vrot.slane %v2579, 1
    %v2637 = vrot.slane %v2583, 1
    %v2638 = vsel %vm2615, %v2636, %v2637
    %v2639 = vrot.slane %v2580, 1
    %v2640 = vrot.slane %v2584, 1
    %v2641 = vsel %vm2615, %v2639, %v2640
    %v2642 = vrot.slane %v2581, 1
    %v2643 = vrot.slane %v2585, 1
    %v2644 = vsel %vm2615, %v2642, %v2643
    %v2645 = vrot.slane %v2582, 1
    %v2646 = vrot.slane %v2586, 1
    %v2647 = vsel %vm2615, %v2645, %v2646
    %v2648 = vrot.slane %v2587, 1
    %v2649 = vsel %vm2615, %v2637, %v2648
    %v2650 = vrot.slane %v2588, 1
    %v2651 = vsel %vm2615, %v2640, %v2650
    %v2652 = vrot.slane %v2589, 1
    %v2653 = vsel %vm2615, %v2643, %v2652
    %v2654 = vrot.slane %v2590, 1
    %v2655 = vsel %vm2615, %v2646, %v2654
    %s2672 = scalar_lea.vmem [#allocation12], 2048
    %v2673 = vld [vmem:[%s2672] sm:$0xff]
    %v2674 = vld [vmem:[%s2672 + $0x8] sm:$0xff]
    %v2675 = vld [vmem:[%s2672 + $0x10] sm:$0xff]
    %v2676 = vld [vmem:[%s2672 + $0x18] sm:$0xff]
    %v2677 = vld [vmem:[%s2672 + $0x20] sm:$0xff]
    %v2678 = vld [vmem:[%s2672 + $0x28] sm:$0xff]
    %v2679 = vld [vmem:[%s2672 + $0x30] sm:$0xff]
    %v2680 = vld [vmem:[%s2672 + $0x38] sm:$0xff]
    %v2681 = vld [vmem:[%s2672 + $0x40] sm:$0xff]
    %v2682 = vld [vmem:[%s2672 + $0x48] sm:$0xff]
    %v2683 = vld [vmem:[%s2672 + $0x50] sm:$0xff]
    %v2684 = vld [vmem:[%s2672 + $0x58] sm:$0xff]
    %v2685 = vld [vmem:[%s2672 + $0x60] sm:$0xff]
    %v2686 = vld [vmem:[%s2672 + $0x68] sm:$0xff]
    %v2687 = vld [vmem:[%s2672 + $0x70] sm:$0xff]
    %v2688 = vld [vmem:[%s2672 + $0x78] sm:$0xff]
    %v2689 = vld [vmem:[%s2672 + $0x80] sm:$0xff]
    %v2690 = vld [vmem:[%s2672 + $0x88] sm:$0xff]
    %v2691 = vld [vmem:[%s2672 + $0x90] sm:$0xff]
    %v2692 = vld [vmem:[%s2672 + $0x98] sm:$0xff]
    %v2693 = vld [vmem:[%s2672 + $0xa0] sm:$0xff]
    %v2694 = vld [vmem:[%s2672 + $0xa8] sm:$0xff]
    %v2695 = vld [vmem:[%s2672 + $0xb0] sm:$0xff]
    %v2696 = vld [vmem:[%s2672 + $0xb8] sm:$0xff]
    %v2697 = vld [vmem:[%s2672 + $0xc0] sm:$0xff]
    %v2698 = vld [vmem:[%s2672 + $0xc8] sm:$0xff]
    %v2699 = vld [vmem:[%s2672 + $0xd0] sm:$0xff]
    %v2700 = vld [vmem:[%s2672 + $0xd8] sm:$0xff]
    %v2701 = vld [vmem:[%s2672 + $0xe0] sm:$0xff]
    %v2702 = vld [vmem:[%s2672 + $0xe8] sm:$0xff]
    %v2703 = vld [vmem:[%s2672 + $0xf0] sm:$0xff]
    %v2704 = vld [vmem:[%s2672 + $0xf8] sm:$0xff]
    %v2705 = vld [vmem:[%s2672 + $0x100] sm:$0xff]
    %v2706 = vld [vmem:[%s2672 + $0x108] sm:$0xff]
    %v2707 = vld [vmem:[%s2672 + $0x110] sm:$0xff]
    %v2708 = vld [vmem:[%s2672 + $0x118] sm:$0xff]
    %v2709 = vld [vmem:[%s2672 + $0x120] sm:$0xff]
    %v2710 = vld [vmem:[%s2672 + $0x128] sm:$0xff]
    %v2711 = vld [vmem:[%s2672 + $0x130] sm:$0xff]
    %v2712 = vld [vmem:[%s2672 + $0x138] sm:$0xff]
    %v2713 = vld [vmem:[%s2672 + $0x140] sm:$0xff]
    %v2714 = vld [vmem:[%s2672 + $0x148] sm:$0xff]
    %v2715 = vld [vmem:[%s2672 + $0x150] sm:$0xff]
    %v2716 = vld [vmem:[%s2672 + $0x158] sm:$0xff]
    %v2717 = vld [vmem:[%s2672 + $0x160] sm:$0xff]
    %v2718 = vld [vmem:[%s2672 + $0x168] sm:$0xff]
    %v2719 = vld [vmem:[%s2672 + $0x170] sm:$0xff]
    %v2720 = vld [vmem:[%s2672 + $0x178] sm:$0xff]
    %v2721 = vld [vmem:[%s2672 + $0x180] sm:$0xff]
    %v2722 = vld [vmem:[%s2672 + $0x188] sm:$0xff]
    %v2723 = vld [vmem:[%s2672 + $0x190] sm:$0xff]
    %v2724 = vld [vmem:[%s2672 + $0x198] sm:$0xff]
    %v2725 = vld [vmem:[%s2672 + $0x1a0] sm:$0xff]
    %v2726 = vld [vmem:[%s2672 + $0x1a8] sm:$0xff]
    %v2727 = vld [vmem:[%s2672 + $0x1b0] sm:$0xff]
    %v2728 = vld [vmem:[%s2672 + $0x1b8] sm:$0xff]
    %v2729 = vld [vmem:[%s2672 + $0x1c0] sm:$0xff]
    %v2730 = vld [vmem:[%s2672 + $0x1c8] sm:$0xff]
    %v2731 = vld [vmem:[%s2672 + $0x1d0] sm:$0xff]
    %v2732 = vld [vmem:[%s2672 + $0x1d8] sm:$0xff]
    %v2733 = vld [vmem:[%s2672 + $0x1e0] sm:$0xff]
    %v2734 = vld [vmem:[%s2672 + $0x1e8] sm:$0xff]
    %v2735 = vld [vmem:[%s2672 + $0x1f0] sm:$0xff]
    %v2736 = vld [vmem:[%s2672 + $0x1f8] sm:$0xff]
    %v2737 = vld [vmem:[%s2672 + $0x200] sm:$0xff]
    %v2738 = vld [vmem:[%s2672 + $0x208] sm:$0xff]
    %v2739 = vld [vmem:[%s2672 + $0x210] sm:$0xff]
    %v2740 = vld [vmem:[%s2672 + $0x218] sm:$0xff]
    %v2741 = vld [vmem:[%s2672 + $0x220] sm:$0xff]
    %v2742 = vld [vmem:[%s2672 + $0x228] sm:$0xff]
    %v2743 = vld [vmem:[%s2672 + $0x230] sm:$0xff]
    %v2744 = vld [vmem:[%s2672 + $0x238] sm:$0xff]
    %v2745 = vld [vmem:[%s2672 + $0x240] sm:$0xff]
    %v2746 = vld [vmem:[%s2672 + $0x248] sm:$0xff]
    %v2747 = vld [vmem:[%s2672 + $0x250] sm:$0xff]
    %v2748 = vld [vmem:[%s2672 + $0x258] sm:$0xff]
    %v2749 = vld [vmem:[%s2672 + $0x260] sm:$0xff]
    %v2750 = vld [vmem:[%s2672 + $0x268] sm:$0xff]
    %v2751 = vld [vmem:[%s2672 + $0x270] sm:$0xff]
    %v2752 = vld [vmem:[%s2672 + $0x278] sm:$0xff]
    %v2753 = vld [vmem:[%s2672 + $0x280] sm:$0xff]
    %v2754 = vld [vmem:[%s2672 + $0x288] sm:$0xff]
    %v2755 = vld [vmem:[%s2672 + $0x290] sm:$0xff]
    %v2756 = vld [vmem:[%s2672 + $0x298] sm:$0xff]
    %v2757 = vld [vmem:[%s2672 + $0x2a0] sm:$0xff]
    %v2758 = vld [vmem:[%s2672 + $0x2a8] sm:$0xff]
    %v2759 = vld [vmem:[%s2672 + $0x2b0] sm:$0xff]
    %v2760 = vld [vmem:[%s2672 + $0x2b8] sm:$0xff]
    %v2761 = vld [vmem:[%s2672 + $0x2c0] sm:$0xff]
    %v2762 = vld [vmem:[%s2672 + $0x2c8] sm:$0xff]
    %v2763 = vld [vmem:[%s2672 + $0x2d0] sm:$0xff]
    %v2764 = vld [vmem:[%s2672 + $0x2d8] sm:$0xff]
    %v2765 = vld [vmem:[%s2672 + $0x2e0] sm:$0xff]
    %v2766 = vld [vmem:[%s2672 + $0x2e8] sm:$0xff]
    %v2767 = vld [vmem:[%s2672 + $0x2f0] sm:$0xff]
    %v2768 = vld [vmem:[%s2672 + $0x2f8] sm:$0xff]
    %v2769 = vld [vmem:[%s2672 + $0x300] sm:$0xff]
    %v2770 = vld [vmem:[%s2672 + $0x308] sm:$0xff]
    %v2771 = vld [vmem:[%s2672 + $0x310] sm:$0xff]
    %v2772 = vld [vmem:[%s2672 + $0x318] sm:$0xff]
    %v2773 = vld [vmem:[%s2672 + $0x320] sm:$0xff]
    %v2774 = vld [vmem:[%s2672 + $0x328] sm:$0xff]
    %v2775 = vld [vmem:[%s2672 + $0x330] sm:$0xff]
    %v2776 = vld [vmem:[%s2672 + $0x338] sm:$0xff]
    %v2777 = vld [vmem:[%s2672 + $0x340] sm:$0xff]
    %v2778 = vld [vmem:[%s2672 + $0x348] sm:$0xff]
    %v2779 = vld [vmem:[%s2672 + $0x350] sm:$0xff]
    %v2780 = vld [vmem:[%s2672 + $0x358] sm:$0xff]
    %v2781 = vld [vmem:[%s2672 + $0x360] sm:$0xff]
    %v2782 = vld [vmem:[%s2672 + $0x368] sm:$0xff]
    %v2783 = vld [vmem:[%s2672 + $0x370] sm:$0xff]
    %v2784 = vld [vmem:[%s2672 + $0x378] sm:$0xff]
    %v2785 = vld [vmem:[%s2672 + $0x380] sm:$0xff]
    %v2786 = vld [vmem:[%s2672 + $0x388] sm:$0xff]
    %v2787 = vld [vmem:[%s2672 + $0x390] sm:$0xff]
    %v2788 = vld [vmem:[%s2672 + $0x398] sm:$0xff]
    %v2789 = vld [vmem:[%s2672 + $0x3a0] sm:$0xff]
    %v2790 = vld [vmem:[%s2672 + $0x3a8] sm:$0xff]
    %v2791 = vld [vmem:[%s2672 + $0x3b0] sm:$0xff]
    %v2792 = vld [vmem:[%s2672 + $0x3b8] sm:$0xff]
    %v2793 = vld [vmem:[%s2672 + $0x3c0] sm:$0xff]
    %v2794 = vld [vmem:[%s2672 + $0x3c8] sm:$0xff]
    %v2795 = vld [vmem:[%s2672 + $0x3d0] sm:$0xff]
    %v2796 = vld [vmem:[%s2672 + $0x3d8] sm:$0xff]
    %v2797 = vld [vmem:[%s2672 + $0x3e0] sm:$0xff]
    %v2798 = vld [vmem:[%s2672 + $0x3e8] sm:$0xff]
    %v2799 = vld [vmem:[%s2672 + $0x3f0] sm:$0xff]
    %v2800 = vld [vmem:[%s2672 + $0x3f8] sm:$0xff]
    %v2801 = vld [vmem:[%s2672 + $0x400] sm:$0xff]
    %v2802 = vld [vmem:[%s2672 + $0x408] sm:$0xff]
    %v2803 = vld [vmem:[%s2672 + $0x410] sm:$0xff]
    %v2804 = vld [vmem:[%s2672 + $0x418] sm:$0xff]
    %v2805 = vld [vmem:[%s2672 + $0x420] sm:$0xff]
    %v2806 = vld [vmem:[%s2672 + $0x428] sm:$0xff]
    %v2807 = vld [vmem:[%s2672 + $0x430] sm:$0xff]
    %v2808 = vld [vmem:[%s2672 + $0x438] sm:$0xff]
    %v2809 = vld [vmem:[%s2672 + $0x440] sm:$0xff]
    %v2810 = vld [vmem:[%s2672 + $0x448] sm:$0xff]
    %v2811 = vld [vmem:[%s2672 + $0x450] sm:$0xff]
    %v2812 = vld [vmem:[%s2672 + $0x458] sm:$0xff]
    %v2813 = vld [vmem:[%s2672 + $0x460] sm:$0xff]
    %v2814 = vld [vmem:[%s2672 + $0x468] sm:$0xff]
    %v2815 = vld [vmem:[%s2672 + $0x470] sm:$0xff]
    %v2816 = vld [vmem:[%s2672 + $0x478] sm:$0xff]
    %v2817 = vld [vmem:[%s2672 + $0x480] sm:$0xff]
    %v2818 = vld [vmem:[%s2672 + $0x488] sm:$0xff]
    %v2819 = vld [vmem:[%s2672 + $0x490] sm:$0xff]
    %v2820 = vld [vmem:[%s2672 + $0x498] sm:$0xff]
    %v2821 = vld [vmem:[%s2672 + $0x4a0] sm:$0xff]
    %v2822 = vld [vmem:[%s2672 + $0x4a8] sm:$0xff]
    %v2823 = vld [vmem:[%s2672 + $0x4b0] sm:$0xff]
    %v2824 = vld [vmem:[%s2672 + $0x4b8] sm:$0xff]
    %v2825 = vld [vmem:[%s2672 + $0x4c0] sm:$0xff]
    %v2826 = vld [vmem:[%s2672 + $0x4c8] sm:$0xff]
    %v2827 = vld [vmem:[%s2672 + $0x4d0] sm:$0xff]
    %v2828 = vld [vmem:[%s2672 + $0x4d8] sm:$0xff]
    %v2829 = vld [vmem:[%s2672 + $0x4e0] sm:$0xff]
    %v2830 = vld [vmem:[%s2672 + $0x4e8] sm:$0xff]
    %v2831 = vld [vmem:[%s2672 + $0x4f0] sm:$0xff]
    %v2832 = vld [vmem:[%s2672 + $0x4f8] sm:$0xff]
    %v2833 = vld [vmem:[%s2672 + $0x500] sm:$0xff]
    %v2834 = vld [vmem:[%s2672 + $0x508] sm:$0xff]
    %v2835 = vld [vmem:[%s2672 + $0x510] sm:$0xff]
    %v2836 = vld [vmem:[%s2672 + $0x518] sm:$0xff]
    %v2837 = vld [vmem:[%s2672 + $0x520] sm:$0xff]
    %v2838 = vld [vmem:[%s2672 + $0x528] sm:$0xff]
    %v2839 = vld [vmem:[%s2672 + $0x530] sm:$0xff]
    %v2840 = vld [vmem:[%s2672 + $0x538] sm:$0xff]
    %v2841 = vld [vmem:[%s2672 + $0x540] sm:$0xff]
    %v2842 = vld [vmem:[%s2672 + $0x548] sm:$0xff]
    %v2843 = vld [vmem:[%s2672 + $0x550] sm:$0xff]
    %v2844 = vld [vmem:[%s2672 + $0x558] sm:$0xff]
    %v2845 = vld [vmem:[%s2672 + $0x560] sm:$0xff]
    %v2846 = vld [vmem:[%s2672 + $0x568] sm:$0xff]
    %v2847 = vld [vmem:[%s2672 + $0x570] sm:$0xff]
    %v2848 = vld [vmem:[%s2672 + $0x578] sm:$0xff]
    %v2849 = vld [vmem:[%s2672 + $0x580] sm:$0xff]
    %v2850 = vld [vmem:[%s2672 + $0x588] sm:$0xff]
    %v2851 = vld [vmem:[%s2672 + $0x590] sm:$0xff]
    %v2852 = vld [vmem:[%s2672 + $0x598] sm:$0xff]
    %v2853 = vld [vmem:[%s2672 + $0x5a0] sm:$0xff]
    %v2854 = vld [vmem:[%s2672 + $0x5a8] sm:$0xff]
    %v2855 = vld [vmem:[%s2672 + $0x5b0] sm:$0xff]
    %v2856 = vld [vmem:[%s2672 + $0x5b8] sm:$0xff]
    %v2857 = vld [vmem:[%s2672 + $0x5c0] sm:$0xff]
    %v2858 = vld [vmem:[%s2672 + $0x5c8] sm:$0xff]
    %v2859 = vld [vmem:[%s2672 + $0x5d0] sm:$0xff]
    %v2860 = vld [vmem:[%s2672 + $0x5d8] sm:$0xff]
    %v2861 = vld [vmem:[%s2672 + $0x5e0] sm:$0xff]
    %v2862 = vld [vmem:[%s2672 + $0x5e8] sm:$0xff]
    %v2863 = vld [vmem:[%s2672 + $0x5f0] sm:$0xff]
    %v2864 = vld [vmem:[%s2672 + $0x5f8] sm:$0xff]
    %v2865 = vld [vmem:[%s2672 + $0x600] sm:$0xff]
    %v2866 = vld [vmem:[%s2672 + $0x608] sm:$0xff]
    %v2867 = vld [vmem:[%s2672 + $0x610] sm:$0xff]
    %v2868 = vld [vmem:[%s2672 + $0x618] sm:$0xff]
    %v2869 = vld [vmem:[%s2672 + $0x620] sm:$0xff]
    %v2870 = vld [vmem:[%s2672 + $0x628] sm:$0xff]
    %v2871 = vld [vmem:[%s2672 + $0x630] sm:$0xff]
    %v2872 = vld [vmem:[%s2672 + $0x638] sm:$0xff]
    %v2873 = vld [vmem:[%s2672 + $0x640] sm:$0xff]
    %v2874 = vld [vmem:[%s2672 + $0x648] sm:$0xff]
    %v2875 = vld [vmem:[%s2672 + $0x650] sm:$0xff]
    %v2876 = vld [vmem:[%s2672 + $0x658] sm:$0xff]
    %v2877 = vld [vmem:[%s2672 + $0x660] sm:$0xff]
    %v2878 = vld [vmem:[%s2672 + $0x668] sm:$0xff]
    %v2879 = vld [vmem:[%s2672 + $0x670] sm:$0xff]
    %v2880 = vld [vmem:[%s2672 + $0x678] sm:$0xff]
    %v2881 = vld [vmem:[%s2672 + $0x680] sm:$0xff]
    %v2882 = vld [vmem:[%s2672 + $0x688] sm:$0xff]
    %v2883 = vld [vmem:[%s2672 + $0x690] sm:$0xff]
    %v2884 = vld [vmem:[%s2672 + $0x698] sm:$0xff]
    %v2885 = vld [vmem:[%s2672 + $0x6a0] sm:$0xff]
    %v2886 = vld [vmem:[%s2672 + $0x6a8] sm:$0xff]
    %v2887 = vld [vmem:[%s2672 + $0x6b0] sm:$0xff]
    %v2888 = vld [vmem:[%s2672 + $0x6b8] sm:$0xff]
    %v2889 = vld [vmem:[%s2672 + $0x6c0] sm:$0xff]
    %v2890 = vld [vmem:[%s2672 + $0x6c8] sm:$0xff]
    %v2891 = vld [vmem:[%s2672 + $0x6d0] sm:$0xff]
    %v2892 = vld [vmem:[%s2672 + $0x6d8] sm:$0xff]
    %v2893 = vld [vmem:[%s2672 + $0x6e0] sm:$0xff]
    %v2894 = vld [vmem:[%s2672 + $0x6e8] sm:$0xff]
    %v2895 = vld [vmem:[%s2672 + $0x6f0] sm:$0xff]
    %v2896 = vld [vmem:[%s2672 + $0x6f8] sm:$0xff]
    %v2897 = vld [vmem:[%s2672 + $0x700] sm:$0xff]
    %v2898 = vld [vmem:[%s2672 + $0x708] sm:$0xff]
    %v2899 = vld [vmem:[%s2672 + $0x710] sm:$0xff]
    %v2900 = vld [vmem:[%s2672 + $0x718] sm:$0xff]
    %v2901 = vld [vmem:[%s2672 + $0x720] sm:$0xff]
    %v2902 = vld [vmem:[%s2672 + $0x728] sm:$0xff]
    %v2903 = vld [vmem:[%s2672 + $0x730] sm:$0xff]
    %v2904 = vld [vmem:[%s2672 + $0x738] sm:$0xff]
    %v2905 = vld [vmem:[%s2672 + $0x740] sm:$0xff]
    %v2906 = vld [vmem:[%s2672 + $0x748] sm:$0xff]
    %v2907 = vld [vmem:[%s2672 + $0x750] sm:$0xff]
    %v2908 = vld [vmem:[%s2672 + $0x758] sm:$0xff]
    %v2909 = vld [vmem:[%s2672 + $0x760] sm:$0xff]
    %v2910 = vld [vmem:[%s2672 + $0x768] sm:$0xff]
    %v2911 = vld [vmem:[%s2672 + $0x770] sm:$0xff]
    %v2912 = vld [vmem:[%s2672 + $0x778] sm:$0xff]
    %v2913 = vld [vmem:[%s2672 + $0x780] sm:$0xff]
    %v2914 = vld [vmem:[%s2672 + $0x788] sm:$0xff]
    %v2915 = vld [vmem:[%s2672 + $0x790] sm:$0xff]
    %v2916 = vld [vmem:[%s2672 + $0x798] sm:$0xff]
    %v2917 = vld [vmem:[%s2672 + $0x7a0] sm:$0xff]
    %v2918 = vld [vmem:[%s2672 + $0x7a8] sm:$0xff]
    %v2919 = vld [vmem:[%s2672 + $0x7b0] sm:$0xff]
    %v2920 = vld [vmem:[%s2672 + $0x7b8] sm:$0xff]
    %v2921 = vld [vmem:[%s2672 + $0x7c0] sm:$0xff]
    %v2922 = vld [vmem:[%s2672 + $0x7c8] sm:$0xff]
    %v2923 = vld [vmem:[%s2672 + $0x7d0] sm:$0xff]
    %v2924 = vld [vmem:[%s2672 + $0x7d8] sm:$0xff]
    %v2925 = vld [vmem:[%s2672 + $0x7e0] sm:$0xff]
    %v2926 = vld [vmem:[%s2672 + $0x7e8] sm:$0xff]
    %v2927 = vld [vmem:[%s2672 + $0x7f0] sm:$0xff]
    %v2928 = vld [vmem:[%s2672 + $0x7f8] sm:$0xff]
    %2929 = vmatprep.subr.mxu0 %v2674
    %2930 = vmatpush1.msra.mxu0 %v2673
    %2931 = vmatprep.subr.mxu0 %v2678
    %2932 = vmatpush1.msra.mxu0 %v2677
    %2933 = vmatprep.subr.mxu0 %v2682
    %2934 = vmatpush1.msra.mxu0 %v2681
    %2935 = vmatprep.subr.mxu0 %v2686
    %2936 = vmatpush1.msra.mxu0 %v2685
    %2937 = vmatprep.subr.mxu0 %v2690
    %2938 = vmatpush1.msra.mxu0 %v2689
    %2939 = vmatprep.subr.mxu0 %v2694
    %2940 = vmatpush1.msra.mxu0 %v2693
    %2941 = vmatprep.subr.mxu0 %v2698
    %2942 = vmatpush1.msra.mxu0 %v2697
    %2943 = vmatprep.subr.mxu0 %v2702
    %2944 = vmatpush1.msra.mxu0 %v2701
    %2945 = vmatprep.subr.mxu0 %v2706
    %2946 = vmatpush1.msra.mxu0 %v2705
    %2947 = vmatprep.subr.mxu0 %v2710
    %2948 = vmatpush1.msra.mxu0 %v2709
    %2949 = vmatprep.subr.mxu0 %v2714
    %2950 = vmatpush1.msra.mxu0 %v2713
    %2951 = vmatprep.subr.mxu0 %v2718
    %2952 = vmatpush1.msra.mxu0 %v2717
    %2953 = vmatprep.subr.mxu0 %v2722
    %2954 = vmatpush1.msra.mxu0 %v2721
    %2955 = vmatprep.subr.mxu0 %v2726
    %2956 = vmatpush1.msra.mxu0 %v2725
    %2957 = vmatprep.subr.mxu0 %v2730
    %2958 = vmatpush1.msra.mxu0 %v2729
    %2959 = vmatprep.subr.mxu0 %v2734
    %2960 = vmatpush1.msra.mxu0 %v2733
    %2961 = vmatprep.subr.mxu0 %v2738
    %2962 = vmatpush1.msra.mxu0 %v2737
    %2963 = vmatprep.subr.mxu0 %v2742
    %2964 = vmatpush1.msra.mxu0 %v2741
    %2965 = vmatprep.subr.mxu0 %v2746
    %2966 = vmatpush1.msra.mxu0 %v2745
    %2967 = vmatprep.subr.mxu0 %v2750
    %2968 = vmatpush1.msra.mxu0 %v2749
    %2969 = vmatprep.subr.mxu0 %v2754
    %2970 = vmatpush1.msra.mxu0 %v2753
    %2971 = vmatprep.subr.mxu0 %v2758
    %2972 = vmatpush1.msra.mxu0 %v2757
    %2973 = vmatprep.subr.mxu0 %v2762
    %2974 = vmatpush1.msra.mxu0 %v2761
    %2975 = vmatprep.subr.mxu0 %v2766
    %2976 = vmatpush1.msra.mxu0 %v2765
    %2977 = vmatprep.subr.mxu0 %v2770
    %2978 = vmatpush1.msra.mxu0 %v2769
    %2979 = vmatprep.subr.mxu0 %v2774
    %2980 = vmatpush1.msra.mxu0 %v2773
    %2981 = vmatprep.subr.mxu0 %v2778
    %2982 = vmatpush1.msra.mxu0 %v2777
    %2983 = vmatprep.subr.mxu0 %v2782
    %2984 = vmatpush1.msra.mxu0 %v2781
    %2985 = vmatprep.subr.mxu0 %v2786
    %2986 = vmatpush1.msra.mxu0 %v2785
    %2987 = vmatprep.subr.mxu0 %v2790
    %2988 = vmatpush1.msra.mxu0 %v2789
    %2989 = vmatprep.subr.mxu0 %v2794
    %2990 = vmatpush1.msra.mxu0 %v2793
    %2991 = vmatprep.subr.mxu0 %v2798
    %2992 = vmatpush1.msra.mxu0 %v2797
    %2993 = vmatprep.mubr.f32.mxu0 %v2621
    %2994 = vmatmul.mubr.f32.gmra.mrb[0].mxu0 %v2618
    %v2995 = vpop.f32.mrb[0].mxu0
    %v2996 = vadd.f32 0.0, %v2995
    %v2997 = vpop.f32.mrb[0].mxu0
    %v2998 = vadd.f32 0.0, %v2997
    %2999 = vmatprep.mubr.f32.mxu0 %v2631
    %3000 = vmatmul.mubr.f32.gmra.mrb[0].mxu0 %v2629
    %v3001 = vpop.f32.mrb[0].mxu0
    %v3002 = vadd.f32 0.0, %v3001
    %v3003 = vpop.f32.mrb[0].mxu0
    %v3004 = vadd.f32 0.0, %v3003
    %3005 = vmatprep.mubr.f32.mxu0 %v2641
    %3006 = vmatmul.mubr.f32.gmra.mrb[0].mxu0 %v2638
    %v3007 = vpop.f32.mrb[0].mxu0
    %v3008 = vadd.f32 0.0, %v3007
    %v3009 = vpop.f32.mrb[0].mxu0
    %v3010 = vadd.f32 0.0, %v3009
    %3011 = vmatprep.mubr.f32.mxu0 %v2651
    %3012 = vmatmul.mubr.f32.gmra.mrb[0].mxu0 %v2649
    %v3013 = vpop.f32.mrb[0].mxu0
    %v3014 = vadd.f32 0.0, %v3013
    %v3015 = vpop.f32.mrb[0].mxu0
    %v3016 = vadd.f32 0.0, %v3015
    %3017 = vdwg.mxu0
    %3018 = vmatprep.subr.mxu0 %v2802
    %3019 = vmatpush1.msra.mxu0 %v2801
    %3020 = vmatprep.subr.mxu0 %v2806
    %3021 = vmatpush1.msra.mxu0 %v2805
    %3022 = vmatprep.subr.mxu0 %v2810
    %3023 = vmatpush1.msra.mxu0 %v2809
    %3024 = vmatprep.subr.mxu0 %v2814
    %3025 = vmatpush1.msra.mxu0 %v2813
    %3026 = vmatprep.subr.mxu0 %v2818
    %3027 = vmatpush1.msra.mxu0 %v2817
    %3028 = vmatprep.subr.mxu0 %v2822
    %3029 = vmatpush1.msra.mxu0 %v2821
    %3030 = vmatprep.subr.mxu0 %v2826
    %3031 = vmatpush1.msra.mxu0 %v2825
    %3032 = vmatprep.subr.mxu0 %v2830
    %3033 = vmatpush1.msra.mxu0 %v2829
    %3034 = vmatprep.subr.mxu0 %v2834
    %3035 = vmatpush1.msra.mxu0 %v2833
    %3036 = vmatprep.subr.mxu0 %v2838
    %3037 = vmatpush1.msra.mxu0 %v2837
    %3038 = vmatprep.subr.mxu0 %v2842
    %3039 = vmatpush1.msra.mxu0 %v2841
    %3040 = vmatprep.subr.mxu0 %v2846
    %3041 = vmatpush1.msra.mxu0 %v2845
    %3042 = vmatprep.subr.mxu0 %v2850
    %3043 = vmatpush1.msra.mxu0 %v2849
    %3044 = vmatprep.subr.mxu0 %v2854
    %3045 = vmatpush1.msra.mxu0 %v2853
    %3046 = vmatprep.subr.mxu0 %v2858
    %3047 = vmatpush1.msra.mxu0 %v2857
    %3048 = vmatprep.subr.mxu0 %v2862
    %3049 = vmatpush1.msra.mxu0 %v2861
    %3050 = vmatprep.subr.mxu0 %v2866
    %3051 = vmatpush1.msra.mxu0 %v2865
    %3052 = vmatprep.subr.mxu0 %v2870
    %3053 = vmatpush1.msra.mxu0 %v2869
    %3054 = vmatprep.subr.mxu0 %v2874
    %3055 = vmatpush1.msra.mxu0 %v2873
    %3056 = vmatprep.subr.mxu0 %v2878
    %3057 = vmatpush1.msra.mxu0 %v2877
    %3058 = vmatprep.subr.mxu0 %v2882
    %3059 = vmatpush1.msra.mxu0 %v2881
    %3060 = vmatprep.subr.mxu0 %v2886
    %3061 = vmatpush1.msra.mxu0 %v2885
    %3062 = vmatprep.subr.mxu0 %v2890
    %3063 = vmatpush1.msra.mxu0 %v2889
    %3064 = vmatprep.subr.mxu0 %v2894
    %3065 = vmatpush1.msra.mxu0 %v2893
    %3066 = vmatprep.subr.mxu0 %v2898
    %3067 = vmatpush1.msra.mxu0 %v2897
    %3068 = vmatprep.subr.mxu0 %v2902
    %3069 = vmatpush1.msra.mxu0 %v2901
    %3070 = vmatprep.subr.mxu0 %v2906
    %3071 = vmatpush1.msra.mxu0 %v2905
    %3072 = vmatprep.subr.mxu0 %v2910
    %3073 = vmatpush1.msra.mxu0 %v2909
    %3074 = vmatprep.subr.mxu0 %v2914
    %3075 = vmatpush1.msra.mxu0 %v2913
    %3076 = vmatprep.subr.mxu0 %v2918
    %3077 = vmatpush1.msra.mxu0 %v2917
    %3078 = vmatprep.subr.mxu0 %v2922
    %3079 = vmatpush1.msra.mxu0 %v2921
    %3080 = vmatprep.subr.mxu0 %v2926
    %3081 = vmatpush1.msra.mxu0 %v2925
    %3082 = vmatprep.mubr.f32.mxu0 %v2627
    %3083 = vmatmul.mubr.f32.gmra.mrb[0].mxu0 %v2624
    %v3084 = vpop.f32.mrb[0].mxu0
    %v3085 = vadd.f32 %v2996, %v3084
    %v3086 = vpop.f32.mrb[0].mxu0
    %v3087 = vadd.f32 %v2998, %v3086
    %3088 = vmatprep.mubr.f32.mxu0 %v2635
    %3089 = vmatmul.mubr.f32.gmra.mrb[0].mxu0 %v2633
    %v3090 = vpop.f32.mrb[0].mxu0
    %v3091 = vadd.f32 %v3002, %v3090
    %v3092 = vpop.f32.mrb[0].mxu0
    %v3093 = vadd.f32 %v3004, %v3092
    %3094 = vmatprep.mubr.f32.mxu0 %v2647
    %3095 = vmatmul.mubr.f32.gmra.mrb[0].mxu0 %v2644
    %v3096 = vpop.f32.mrb[0].mxu0
    %v3097 = vadd.f32 %v3008, %v3096
    %v3098 = vpop.f32.mrb[0].mxu0
    %v3099 = vadd.f32 %v3010, %v3098
    %3100 = vmatprep.mubr.f32.mxu0 %v2655
    %3101 = vmatmul.mubr.f32.gmra.mrb[0].mxu0 %v2653
    %v3102 = vpop.f32.mrb[0].mxu0
    %v3103 = vadd.f32 %v3014, %v3102
    %v3104 = vpop.f32.mrb[0].mxu0
    %v3105 = vadd.f32 %v3016, %v3104
    %3106 = vdwg.mxu0
    %3107 = vmatprep.subr.mxu0 %v2676
    %3108 = vmatpush1.msra.mxu0 %v2675
    %3109 = vmatprep.subr.mxu0 %v2680
    %3110 = vmatpush1.msra.mxu0 %v2679
    %3111 = vmatprep.subr.mxu0 %v2684
    %3112 = vmatpush1.msra.mxu0 %v2683
    %3113 = vmatprep.subr.mxu0 %v2688
    %3114 = vmatpush1.msra.mxu0 %v2687
    %3115 = vmatprep.subr.mxu0 %v2692
    %3116 = vmatpush1.msra.mxu0 %v2691
    %3117 = vmatprep.subr.mxu0 %v2696
    %3118 = vmatpush1.msra.mxu0 %v2695
    %3119 = vmatprep.subr.mxu0 %v2700
    %3120 = vmatpush1.msra.mxu0 %v2699
    %3121 = vmatprep.subr.mxu0 %v2704
    %3122 = vmatpush1.msra.mxu0 %v2703
    %3123 = vmatprep.subr.mxu0 %v2708
    %3124 = vmatpush1.msra.mxu0 %v2707
    %3125 = vmatprep.subr.mxu0 %v2712
    %3126 = vmatpush1.msra.mxu0 %v2711
    %3127 = vmatprep.subr.mxu0 %v2716
    %3128 = vmatpush1.msra.mxu0 %v2715
    %3129 = vmatprep.subr.mxu0 %v2720
    %3130 = vmatpush1.msra.mxu0 %v2719
    %3131 = vmatprep.subr.mxu0 %v2724
    %3132 = vmatpush1.msra.mxu0 %v2723
    %3133 = vmatprep.subr.mxu0 %v2728
    %3134 = vmatpush1.msra.mxu0 %v2727
    %3135 = vmatprep.subr.mxu0 %v2732
    %3136 = vmatpush1.msra.mxu0 %v2731
    %3137 = vmatprep.subr.mxu0 %v2736
    %3138 = vmatpush1.msra.mxu0 %v2735
    %3139 = vmatprep.subr.mxu0 %v2740
    %3140 = vmatpush1.msra.mxu0 %v2739
    %3141 = vmatprep.subr.mxu0 %v2744
    %3142 = vmatpush1.msra.mxu0 %v2743
    %3143 = vmatprep.subr.mxu0 %v2748
    %3144 = vmatpush1.msra.mxu0 %v2747
    %3145 = vmatprep.subr.mxu0 %v2752
    %3146 = vmatpush1.msra.mxu0 %v2751
    %3147 = vmatprep.subr.mxu0 %v2756
    %3148 = vmatpush1.msra.mxu0 %v2755
    %3149 = vmatprep.subr.mxu0 %v2760
    %3150 = vmatpush1.msra.mxu0 %v2759
    %3151 = vmatprep.subr.mxu0 %v2764
    %3152 = vmatpush1.msra.mxu0 %v2763
    %3153 = vmatprep.subr.mxu0 %v2768
    %3154 = vmatpush1.msra.mxu0 %v2767
    %3155 = vmatprep.subr.mxu0 %v2772
    %3156 = vmatpush1.msra.mxu0 %v2771
    %3157 = vmatprep.subr.mxu0 %v2776
    %3158 = vmatpush1.msra.mxu0 %v2775
    %3159 = vmatprep.subr.mxu0 %v2780
    %3160 = vmatpush1.msra.mxu0 %v2779
    %3161 = vmatprep.subr.mxu0 %v2784
    %3162 = vmatpush1.msra.mxu0 %v2783
    %3163 = vmatprep.subr.mxu0 %v2788
    %3164 = vmatpush1.msra.mxu0 %v2787
    %3165 = vmatprep.subr.mxu0 %v2792
    %3166 = vmatpush1.msra.mxu0 %v2791
    %3167 = vmatprep.subr.mxu0 %v2796
    %3168 = vmatpush1.msra.mxu0 %v2795
    %3169 = vmatprep.subr.mxu0 %v2800
    %3170 = vmatpush1.msra.mxu0 %v2799
    %3171 = vmatprep.mubr.f32.mxu0 %v2621
    %3172 = vmatmul.mubr.f32.gmra.mrb[0].mxu0 %v2618
    %v3173 = vpop.f32.mrb[0].mxu0
    %v3174 = vadd.f32 0.0, %v3173
    %v3175 = vpop.f32.mrb[0].mxu0
    %v3176 = vadd.f32 0.0, %v3175
    %3177 = vmatprep.mubr.f32.mxu0 %v2631
    %3178 = vmatmul.mubr.f32.gmra.mrb[0].mxu0 %v2629
    %v3179 = vpop.f32.mrb[0].mxu0
    %v3180 = vadd.f32 0.0, %v3179
    %v3181 = vpop.f32.mrb[0].mxu0
    %v3182 = vadd.f32 0.0, %v3181
    %3183 = vmatprep.mubr.f32.mxu0 %v2641
    %3184 = vmatmul.mubr.f32.gmra.mrb[0].mxu0 %v2638
    %v3185 = vpop.f32.mrb[0].mxu0
    %v3186 = vadd.f32 0.0, %v3185
    %v3187 = vpop.f32.mrb[0].mxu0
    %v3188 = vadd.f32 0.0, %v3187
    %3189 = vmatprep.mubr.f32.mxu0 %v2651
    %3190 = vmatmul.mubr.f32.gmra.mrb[0].mxu0 %v2649
    %v3191 = vpop.f32.mrb[0].mxu0
    %v3192 = vadd.f32 0.0, %v3191
    %v3193 = vpop.f32.mrb[0].mxu0
    %v3194 = vadd.f32 0.0, %v3193
    %3195 = vdwg.mxu0
    %3196 = vmatprep.subr.mxu0 %v2804
    %3197 = vmatpush1.msra.mxu0 %v2803
    %3198 = vmatprep.subr.mxu0 %v2808
    %3199 = vmatpush1.msra.mxu0 %v2807
    %3200 = vmatprep.subr.mxu0 %v2812
    %3201 = vmatpush1.msra.mxu0 %v2811
    %3202 = vmatprep.subr.mxu0 %v2816
    %3203 = vmatpush1.msra.mxu0 %v2815
    %3204 = vmatprep.subr.mxu0 %v2820
    %3205 = vmatpush1.msra.mxu0 %v2819
    %3206 = vmatprep.subr.mxu0 %v2824
    %3207 = vmatpush1.msra.mxu0 %v2823
    %3208 = vmatprep.subr.mxu0 %v2828
    %3209 = vmatpush1.msra.mxu0 %v2827
    %3210 = vmatprep.subr.mxu0 %v2832
    %3211 = vmatpush1.msra.mxu0 %v2831
    %3212 = vmatprep.subr.mxu0 %v2836
    %3213 = vmatpush1.msra.mxu0 %v2835
    %3214 = vmatprep.subr.mxu0 %v2840
    %3215 = vmatpush1.msra.mxu0 %v2839
    %3216 = vmatprep.subr.mxu0 %v2844
    %3217 = vmatpush1.msra.mxu0 %v2843
    %3218 = vmatprep.subr.mxu0 %v2848
    %3219 = vmatpush1.msra.mxu0 %v2847
    %3220 = vmatprep.subr.mxu0 %v2852
    %3221 = vmatpush1.msra.mxu0 %v2851
    %3222 = vmatprep.subr.mxu0 %v2856
    %3223 = vmatpush1.msra.mxu0 %v2855
    %3224 = vmatprep.subr.mxu0 %v2860
    %3225 = vmatpush1.msra.mxu0 %v2859
    %3226 = vmatprep.subr.mxu0 %v2864
    %3227 = vmatpush1.msra.mxu0 %v2863
    %3228 = vmatprep.subr.mxu0 %v2868
    %3229 = vmatpush1.msra.mxu0 %v2867
    %3230 = vmatprep.subr.mxu0 %v2872
    %3231 = vmatpush1.msra.mxu0 %v2871
    %3232 = vmatprep.subr.mxu0 %v2876
    %3233 = vmatpush1.msra.mxu0 %v2875
    %3234 = vmatprep.subr.mxu0 %v2880
    %3235 = vmatpush1.msra.mxu0 %v2879
    %3236 = vmatprep.subr.mxu0 %v2884
    %3237 = vmatpush1.msra.mxu0 %v2883
    %3238 = vmatprep.subr.mxu0 %v2888
    %3239 = vmatpush1.msra.mxu0 %v2887
    %3240 = vmatprep.subr.mxu0 %v2892
    %3241 = vmatpush1.msra.mxu0 %v2891
    %3242 = vmatprep.subr.mxu0 %v2896
    %3243 = vmatpush1.msra.mxu0 %v2895
    %3244 = vmatprep.subr.mxu0 %v2900
    %3245 = vmatpush1.msra.mxu0 %v2899
    %3246 = vmatprep.subr.mxu0 %v2904
    %3247 = vmatpush1.msra.mxu0 %v2903
    %3248 = vmatprep.subr.mxu0 %v2908
    %3249 = vmatpush1.msra.mxu0 %v2907
    %3250 = vmatprep.subr.mxu0 %v2912
    %3251 = vmatpush1.msra.mxu0 %v2911
    %3252 = vmatprep.subr.mxu0 %v2916
    %3253 = vmatpush1.msra.mxu0 %v2915
    %3254 = vmatprep.subr.mxu0 %v2920
    %3255 = vmatpush1.msra.mxu0 %v2919
    %3256 = vmatprep.subr.mxu0 %v2924
    %3257 = vmatpush1.msra.mxu0 %v2923
    %3258 = vmatprep.subr.mxu0 %v2928
    %3259 = vmatpush1.msra.mxu0 %v2927
    %3260 = vmatprep.mubr.f32.mxu0 %v2627
    %3261 = vmatmul.mubr.f32.gmra.mrb[0].mxu0 %v2624
    %v3262 = vpop.f32.mrb[0].mxu0
    %v3263 = vadd.f32 %v3174, %v3262
    %v3264 = vpop.f32.mrb[0].mxu0
    %v3265 = vadd.f32 %v3176, %v3264
    %3266 = vmatprep.mubr.f32.mxu0 %v2635
    %3267 = vmatmul.mubr.f32.gmra.mrb[0].mxu0 %v2633
    %v3268 = vpop.f32.mrb[0].mxu0
    %v3269 = vadd.f32 %v3180, %v3268
    %v3270 = vpop.f32.mrb[0].mxu0
    %v3271 = vadd.f32 %v3182, %v3270
    %3272 = vmatprep.mubr.f32.mxu0 %v2647
    %3273 = vmatmul.mubr.f32.gmra.mrb[0].mxu0 %v2644
    %v3274 = vpop.f32.mrb[0].mxu0
    %v3275 = vadd.f32 %v3186, %v3274
    %v3276 = vpop.f32.mrb[0].mxu0
    %v3277 = vadd.f32 %v3188, %v3276
    %3278 = vmatprep.mubr.f32.mxu0 %v2655
    %3279 = vmatmul.mubr.f32.gmra.mrb[0].mxu0 %v2653
    %v3280 = vpop.f32.mrb[0].mxu0
    %v3281 = vadd.f32 %v3192, %v3280
    %v3282 = vpop.f32.mrb[0].mxu0
    %v3283 = vadd.f32 %v3194, %v3282
    %3284 = vdwg.mxu0
    %v3285 = vadd.f32 %v2367, %v3085
    %v3286 = vadd.f32 %v2369, %v3087
    %v3287 = vadd.f32 %v2545, %v3263
    %v3288 = vadd.f32 %v2547, %v3265
    %v3289 = vadd.f32 %v2373, %v3091
    %v3290 = vadd.f32 %v2375, %v3093
    %v3291 = vadd.f32 %v2551, %v3269
    %v3292 = vadd.f32 %v2553, %v3271
    %v3293 = vadd.f32 %v2379, %v3097
    %v3294 = vadd.f32 %v2381, %v3099
    %v3295 = vadd.f32 %v2557, %v3275
    %v3296 = vadd.f32 %v2559, %v3277
    %v3297 = vadd.f32 %v2385, %v3103
    %v3298 = vadd.f32 %v2387, %v3105
    %v3299 = vadd.f32 %v2563, %v3281
    %v3300 = vadd.f32 %v2565, %v3283
    %v3301 = vld [vmem:[#allocation2] sm:$0xfc]
    %v3302 = vld [vmem:[#allocation2 + $0x8] sm:$0xfc]
    %v3303 = vld [vmem:[#allocation2 + $0x10] sm:$0xfc]
    %v3304 = vld [vmem:[#allocation2 + $0x18] sm:$0xfc]
    %v3305 = vld [vmem:[#allocation2 + $0x40] sm:$0x3]
    %v3306 = vld [vmem:[#allocation2 + $0x48] sm:$0x3]
    %v3307 = vld [vmem:[#allocation2 + $0x50] sm:$0x3]
    %v3308 = vld [vmem:[#allocation2 + $0x58] sm:$0x3]
    %v3309 = vld [vmem:[#allocation2 + $0x60] sm:$0xfc]
    %v3310 = vld [vmem:[#allocation2 + $0x68] sm:$0xfc]
    %v3311 = vld [vmem:[#allocation2 + $0x70] sm:$0xfc]
    %v3312 = vld [vmem:[#allocation2 + $0x78] sm:$0xfc]
    %v3313 = vld [vmem:[#allocation2 + $0xa0] sm:$0x3]
    %v3314 = vld [vmem:[#allocation2 + $0xa8] sm:$0x3]
    %v3315 = vld [vmem:[#allocation2 + $0xb0] sm:$0x3]
    %v3316 = vld [vmem:[#allocation2 + $0xb8] sm:$0x3]
    %vm3333 = vcmask 1045504
    %v3334 = vrot.slane %v3301, 2
    %v3335 = vrot.slane %v2571, 2
    %v3336 = vsel %vm3333, %v3334, %v3335
    %v3337 = vrot.slane %v3302, 2
    %v3338 = vrot.slane %v2572, 2
    %v3339 = vsel %vm3333, %v3337, %v3338
    %v3340 = vrot.slane %v3303, 2
    %v3341 = vrot.slane %v2573, 2
    %v3342 = vsel %vm3333, %v3340, %v3341
    %v3343 = vrot.slane %v3304, 2
    %v3344 = vrot.slane %v2574, 2
    %v3345 = vsel %vm3333, %v3343, %v3344
    %v3346 = vrot.slane %v3305, 2
    %v3347 = vsel %vm3333, %v3335, %v3346
    %v3348 = vrot.slane %v3306, 2
    %v3349 = vsel %vm3333, %v3338, %v3348
    %v3350 = vrot.slane %v3307, 2
    %v3351 = vsel %vm3333, %v3341, %v3350
    %v3352 = vrot.slane %v3308, 2
    %v3353 = vsel %vm3333, %v3344, %v3352
    %v3354 = vrot.slane %v3309, 2
    %v3355 = vrot.slane %v2583, 2
    %v3356 = vsel %vm3333, %v3354, %v3355
    %v3357 = vrot.slane %v3310, 2
    %v3358 = vrot.slane %v2584, 2
    %v3359 = vsel %vm3333, %v3357, %v3358
    %v3360 = vrot.slane %v3311, 2
    %v3361 = vrot.slane %v2585, 2
    %v3362 = vsel %vm3333, %v3360, %v3361
    %v3363 = vrot.slane %v3312, 2
    %v3364 = vrot.slane %v2586, 2
    %v3365 = vsel %vm3333, %v3363, %v3364
    %v3366 = vrot.slane %v3313, 2
    %v3367 = vsel %vm3333, %v3355, %v3366
    %v3368 = vrot.slane %v3314, 2
    %v3369 = vsel %vm3333, %v3358, %v3368
    %v3370 = vrot.slane %v3315, 2
    %v3371 = vsel %vm3333, %v3361, %v3370
    %v3372 = vrot.slane %v3316, 2
    %v3373 = vsel %vm3333, %v3364, %v3372
    %s3390 = scalar_lea.vmem [#allocation12], 4096
    %v3391 = vld [vmem:[%s3390] sm:$0xff]
    %v3392 = vld [vmem:[%s3390 + $0x8] sm:$0xff]
    %v3393 = vld [vmem:[%s3390 + $0x10] sm:$0xff]
    %v3394 = vld [vmem:[%s3390 + $0x18] sm:$0xff]
    %v3395 = vld [vmem:[%s3390 + $0x20] sm:$0xff]
    %v3396 = vld [vmem:[%s3390 + $0x28] sm:$0xff]
    %v3397 = vld [vmem:[%s3390 + $0x30] sm:$0xff]
    %v3398 = vld [vmem:[%s3390 + $0x38] sm:$0xff]
    %v3399 = vld [vmem:[%s3390 + $0x40] sm:$0xff]
    %v3400 = vld [vmem:[%s3390 + $0x48] sm:$0xff]
    %v3401 = vld [vmem:[%s3390 + $0x50] sm:$0xff]
    %v3402 = vld [vmem:[%s3390 + $0x58] sm:$0xff]
    %v3403 = vld [vmem:[%s3390 + $0x60] sm:$0xff]
    %v3404 = vld [vmem:[%s3390 + $0x68] sm:$0xff]
    %v3405 = vld [vmem:[%s3390 + $0x70] sm:$0xff]
    %v3406 = vld [vmem:[%s3390 + $0x78] sm:$0xff]
    %v3407 = vld [vmem:[%s3390 + $0x80] sm:$0xff]
    %v3408 = vld [vmem:[%s3390 + $0x88] sm:$0xff]
    %v3409 = vld [vmem:[%s3390 + $0x90] sm:$0xff]
    %v3410 = vld [vmem:[%s3390 + $0x98] sm:$0xff]
    %v3411 = vld [vmem:[%s3390 + $0xa0] sm:$0xff]
    %v3412 = vld [vmem:[%s3390 + $0xa8] sm:$0xff]
    %v3413 = vld [vmem:[%s3390 + $0xb0] sm:$0xff]
    %v3414 = vld [vmem:[%s3390 + $0xb8] sm:$0xff]
    %v3415 = vld [vmem:[%s3390 + $0xc0] sm:$0xff]
    %v3416 = vld [vmem:[%s3390 + $0xc8] sm:$0xff]
    %v3417 = vld [vmem:[%s3390 + $0xd0] sm:$0xff]
    %v3418 = vld [vmem:[%s3390 + $0xd8] sm:$0xff]
    %v3419 = vld [vmem:[%s3390 + $0xe0] sm:$0xff]
    %v3420 = vld [vmem:[%s3390 + $0xe8] sm:$0xff]
    %v3421 = vld [vmem:[%s3390 + $0xf0] sm:$0xff]
    %v3422 = vld [vmem:[%s3390 + $0xf8] sm:$0xff]
    %v3423 = vld [vmem:[%s3390 + $0x100] sm:$0xff]
    %v3424 = vld [vmem:[%s3390 + $0x108] sm:$0xff]
    %v3425 = vld [vmem:[%s3390 + $0x110] sm:$0xff]
    %v3426 = vld [vmem:[%s3390 + $0x118] sm:$0xff]
    %v3427 = vld [vmem:[%s3390 + $0x120] sm:$0xff]
    %v3428 = vld [vmem:[%s3390 + $0x128] sm:$0xff]
    %v3429 = vld [vmem:[%s3390 + $0x130] sm:$0xff]
    %v3430 = vld [vmem:[%s3390 + $0x138] sm:$0xff]
    %v3431 = vld [vmem:[%s3390 + $0x140] sm:$0xff]
    %v3432 = vld [vmem:[%s3390 + $0x148] sm:$0xff]
    %v3433 = vld [vmem:[%s3390 + $0x150] sm:$0xff]
    %v3434 = vld [vmem:[%s3390 + $0x158] sm:$0xff]
    %v3435 = vld [vmem:[%s3390 + $0x160] sm:$0xff]
    %v3436 = vld [vmem:[%s3390 + $0x168] sm:$0xff]
    %v3437 = vld [vmem:[%s3390 + $0x170] sm:$0xff]
    %v3438 = vld [vmem:[%s3390 + $0x178] sm:$0xff]
    %v3439 = vld [vmem:[%s3390 + $0x180] sm:$0xff]
    %v3440 = vld [vmem:[%s3390 + $0x188] sm:$0xff]
    %v3441 = vld [vmem:[%s3390 + $0x190] sm:$0xff]
    %v3442 = vld [vmem:[%s3390 + $0x198] sm:$0xff]
    %v3443 = vld [vmem:[%s3390 + $0x1a0] sm:$0xff]
    %v3444 = vld [vmem:[%s3390 + $0x1a8] sm:$0xff]
    %v3445 = vld [vmem:[%s3390 + $0x1b0] sm:$0xff]
    %v3446 = vld [vmem:[%s3390 + $0x1b8] sm:$0xff]
    %v3447 = vld [vmem:[%s3390 + $0x1c0] sm:$0xff]
    %v3448 = vld [vmem:[%s3390 + $0x1c8] sm:$0xff]
    %v3449 = vld [vmem:[%s3390 + $0x1d0] sm:$0xff]
    %v3450 = vld [vmem:[%s3390 + $0x1d8] sm:$0xff]
    %v3451 = vld [vmem:[%s3390 + $0x1e0] sm:$0xff]
    %v3452 = vld [vmem:[%s3390 + $0x1e8] sm:$0xff]
    %v3453 = vld [vmem:[%s3390 + $0x1f0] sm:$0xff]
    %v3454 = vld [vmem:[%s3390 + $0x1f8] sm:$0xff]
    %v3455 = vld [vmem:[%s3390 + $0x200] sm:$0xff]
    %v3456 = vld [vmem:[%s3390 + $0x208] sm:$0xff]
    %v3457 = vld [vmem:[%s3390 + $0x210] sm:$0xff]
    %v3458 = vld [vmem:[%s3390 + $0x218] sm:$0xff]
    %v3459 = vld [vmem:[%s3390 + $0x220] sm:$0xff]
    %v3460 = vld [vmem:[%s3390 + $0x228] sm:$0xff]
    %v3461 = vld [vmem:[%s3390 + $0x230] sm:$0xff]
    %v3462 = vld [vmem:[%s3390 + $0x238] sm:$0xff]
    %v3463 = vld [vmem:[%s3390 + $0x240] sm:$0xff]
    %v3464 = vld [vmem:[%s3390 + $0x248] sm:$0xff]
    %v3465 = vld [vmem:[%s3390 + $0x250] sm:$0xff]
    %v3466 = vld [vmem:[%s3390 + $0x258] sm:$0xff]
    %v3467 = vld [vmem:[%s3390 + $0x260] sm:$0xff]
    %v3468 = vld [vmem:[%s3390 + $0x268] sm:$0xff]
    %v3469 = vld [vmem:[%s3390 + $0x270] sm:$0xff]
    %v3470 = vld [vmem:[%s3390 + $0x278] sm:$0xff]
    %v3471 = vld [vmem:[%s3390 + $0x280] sm:$0xff]
    %v3472 = vld [vmem:[%s3390 + $0x288] sm:$0xff]
    %v3473 = vld [vmem:[%s3390 + $0x290] sm:$0xff]
    %v3474 = vld [vmem:[%s3390 + $0x298] sm:$0xff]
    %v3475 = vld [vmem:[%s3390 + $0x2a0] sm:$0xff]
    %v3476 = vld [vmem:[%s3390 + $0x2a8] sm:$0xff]
    %v3477 = vld [vmem:[%s3390 + $0x2b0] sm:$0xff]
    %v3478 = vld [vmem:[%s3390 + $0x2b8] sm:$0xff]
    %v3479 = vld [vmem:[%s3390 + $0x2c0] sm:$0xff]
    %v3480 = vld [vmem:[%s3390 + $0x2c8] sm:$0xff]
    %v3481 = vld [vmem:[%s3390 + $0x2d0] sm:$0xff]
    %v3482 = vld [vmem:[%s3390 + $0x2d8] sm:$0xff]
    %v3483 = vld [vmem:[%s3390 + $0x2e0] sm:$0xff]
    %v3484 = vld [vmem:[%s3390 + $0x2e8] sm:$0xff]
    %v3485 = vld [vmem:[%s3390 + $0x2f0] sm:$0xff]
    %v3486 = vld [vmem:[%s3390 + $0x2f8] sm:$0xff]
    %v3487 = vld [vmem:[%s3390 + $0x300] sm:$0xff]
    %v3488 = vld [vmem:[%s3390 + $0x308] sm:$0xff]
    %v3489 = vld [vmem:[%s3390 + $0x310] sm:$0xff]
    %v3490 = vld [vmem:[%s3390 + $0x318] sm:$0xff]
    %v3491 = vld [vmem:[%s3390 + $0x320] sm:$0xff]
    %v3492 = vld [vmem:[%s3390 + $0x328] sm:$0xff]
    %v3493 = vld [vmem:[%s3390 + $0x330] sm:$0xff]
    %v3494 = vld [vmem:[%s3390 + $0x338] sm:$0xff]
    %v3495 = vld [vmem:[%s3390 + $0x340] sm:$0xff]
    %v3496 = vld [vmem:[%s3390 + $0x348] sm:$0xff]
    %v3497 = vld [vmem:[%s3390 + $0x350] sm:$0xff]
    %v3498 = vld [vmem:[%s3390 + $0x358] sm:$0xff]
    %v3499 = vld [vmem:[%s3390 + $0x360] sm:$0xff]
    %v3500 = vld [vmem:[%s3390 + $0x368] sm:$0xff]
    %v3501 = vld [vmem:[%s3390 + $0x370] sm:$0xff]
    %v3502 = vld [vmem:[%s3390 + $0x378] sm:$0xff]
    %v3503 = vld [vmem:[%s3390 + $0x380] sm:$0xff]
    %v3504 = vld [vmem:[%s3390 + $0x388] sm:$0xff]
    %v3505 = vld [vmem:[%s3390 + $0x390] sm:$0xff]
    %v3506 = vld [vmem:[%s3390 + $0x398] sm:$0xff]
    %v3507 = vld [vmem:[%s3390 + $0x3a0] sm:$0xff]
    %v3508 = vld [vmem:[%s3390 + $0x3a8] sm:$0xff]
    %v3509 = vld [vmem:[%s3390 + $0x3b0] sm:$0xff]
    %v3510 = vld [vmem:[%s3390 + $0x3b8] sm:$0xff]
    %v3511 = vld [vmem:[%s3390 + $0x3c0] sm:$0xff]
    %v3512 = vld [vmem:[%s3390 + $0x3c8] sm:$0xff]
    %v3513 = vld [vmem:[%s3390 + $0x3d0] sm:$0xff]
    %v3514 = vld [vmem:[%s3390 + $0x3d8] sm:$0xff]
    %v3515 = vld [vmem:[%s3390 + $0x3e0] sm:$0xff]
    %v3516 = vld [vmem:[%s3390 + $0x3e8] sm:$0xff]
    %v3517 = vld [vmem:[%s3390 + $0x3f0] sm:$0xff]
    %v3518 = vld [vmem:[%s3390 + $0x3f8] sm:$0xff]
    %v3519 = vld [vmem:[%s3390 + $0x400] sm:$0xff]
    %v3520 = vld [vmem:[%s3390 + $0x408] sm:$0xff]
    %v3521 = vld [vmem:[%s3390 + $0x410] sm:$0xff]
    %v3522 = vld [vmem:[%s3390 + $0x418] sm:$0xff]
    %v3523 = vld [vmem:[%s3390 + $0x420] sm:$0xff]
    %v3524 = vld [vmem:[%s3390 + $0x428] sm:$0xff]
    %v3525 = vld [vmem:[%s3390 + $0x430] sm:$0xff]
    %v3526 = vld [vmem:[%s3390 + $0x438] sm:$0xff]
    %v3527 = vld [vmem:[%s3390 + $0x440] sm:$0xff]
    %v3528 = vld [vmem:[%s3390 + $0x448] sm:$0xff]
    %v3529 = vld [vmem:[%s3390 + $0x450] sm:$0xff]
    %v3530 = vld [vmem:[%s3390 + $0x458] sm:$0xff]
    %v3531 = vld [vmem:[%s3390 + $0x460] sm:$0xff]
    %v3532 = vld [vmem:[%s3390 + $0x468] sm:$0xff]
    %v3533 = vld [vmem:[%s3390 + $0x470] sm:$0xff]
    %v3534 = vld [vmem:[%s3390 + $0x478] sm:$0xff]
    %v3535 = vld [vmem:[%s3390 + $0x480] sm:$0xff]
    %v3536 = vld [vmem:[%s3390 + $0x488] sm:$0xff]
    %v3537 = vld [vmem:[%s3390 + $0x490] sm:$0xff]
    %v3538 = vld [vmem:[%s3390 + $0x498] sm:$0xff]
    %v3539 = vld [vmem:[%s3390 + $0x4a0] sm:$0xff]
    %v3540 = vld [vmem:[%s3390 + $0x4a8] sm:$0xff]
    %v3541 = vld [vmem:[%s3390 + $0x4b0] sm:$0xff]
    %v3542 = vld [vmem:[%s3390 + $0x4b8] sm:$0xff]
    %v3543 = vld [vmem:[%s3390 + $0x4c0] sm:$0xff]
    %v3544 = vld [vmem:[%s3390 + $0x4c8] sm:$0xff]
    %v3545 = vld [vmem:[%s3390 + $0x4d0] sm:$0xff]
    %v3546 = vld [vmem:[%s3390 + $0x4d8] sm:$0xff]
    %v3547 = vld [vmem:[%s3390 + $0x4e0] sm:$0xff]
    %v3548 = vld [vmem:[%s3390 + $0x4e8] sm:$0xff]
    %v3549 = vld [vmem:[%s3390 + $0x4f0] sm:$0xff]
    %v3550 = vld [vmem:[%s3390 + $0x4f8] sm:$0xff]
    %v3551 = vld [vmem:[%s3390 + $0x500] sm:$0xff]
    %v3552 = vld [vmem:[%s3390 + $0x508] sm:$0xff]
    %v3553 = vld [vmem:[%s3390 + $0x510] sm:$0xff]
    %v3554 = vld [vmem:[%s3390 + $0x518] sm:$0xff]
    %v3555 = vld [vmem:[%s3390 + $0x520] sm:$0xff]
    %v3556 = vld [vmem:[%s3390 + $0x528] sm:$0xff]
    %v3557 = vld [vmem:[%s3390 + $0x530] sm:$0xff]
    %v3558 = vld [vmem:[%s3390 + $0x538] sm:$0xff]
    %v3559 = vld [vmem:[%s3390 + $0x540] sm:$0xff]
    %v3560 = vld [vmem:[%s3390 + $0x548] sm:$0xff]
    %v3561 = vld [vmem:[%s3390 + $0x550] sm:$0xff]
    %v3562 = vld [vmem:[%s3390 + $0x558] sm:$0xff]
    %v3563 = vld [vmem:[%s3390 + $0x560] sm:$0xff]
    %v3564 = vld [vmem:[%s3390 + $0x568] sm:$0xff]
    %v3565 = vld [vmem:[%s3390 + $0x570] sm:$0xff]
    %v3566 = vld [vmem:[%s3390 + $0x578] sm:$0xff]
    %v3567 = vld [vmem:[%s3390 + $0x580] sm:$0xff]
    %v3568 = vld [vmem:[%s3390 + $0x588] sm:$0xff]
    %v3569 = vld [vmem:[%s3390 + $0x590] sm:$0xff]
    %v3570 = vld [vmem:[%s3390 + $0x598] sm:$0xff]
    %v3571 = vld [vmem:[%s3390 + $0x5a0] sm:$0xff]
    %v3572 = vld [vmem:[%s3390 + $0x5a8] sm:$0xff]
    %v3573 = vld [vmem:[%s3390 + $0x5b0] sm:$0xff]
    %v3574 = vld [vmem:[%s3390 + $0x5b8] sm:$0xff]
    %v3575 = vld [vmem:[%s3390 + $0x5c0] sm:$0xff]
    %v3576 = vld [vmem:[%s3390 + $0x5c8] sm:$0xff]
    %v3577 = vld [vmem:[%s3390 + $0x5d0] sm:$0xff]
    %v3578 = vld [vmem:[%s3390 + $0x5d8] sm:$0xff]
    %v3579 = vld [vmem:[%s3390 + $0x5e0] sm:$0xff]
    %v3580 = vld [vmem:[%s3390 + $0x5e8] sm:$0xff]
    %v3581 = vld [vmem:[%s3390 + $0x5f0] sm:$0xff]
    %v3582 = vld [vmem:[%s3390 + $0x5f8] sm:$0xff]
    %v3583 = vld [vmem:[%s3390 + $0x600] sm:$0xff]
    %v3584 = vld [vmem:[%s3390 + $0x608] sm:$0xff]
    %v3585 = vld [vmem:[%s3390 + $0x610] sm:$0xff]
    %v3586 = vld [vmem:[%s3390 + $0x618] sm:$0xff]
    %v3587 = vld [vmem:[%s3390 + $0x620] sm:$0xff]
    %v3588 = vld [vmem:[%s3390 + $0x628] sm:$0xff]
    %v3589 = vld [vmem:[%s3390 + $0x630] sm:$0xff]
    %v3590 = vld [vmem:[%s3390 + $0x638] sm:$0xff]
    %v3591 = vld [vmem:[%s3390 + $0x640] sm:$0xff]
    %v3592 = vld [vmem:[%s3390 + $0x648] sm:$0xff]
    %v3593 = vld [vmem:[%s3390 + $0x650] sm:$0xff]
    %v3594 = vld [vmem:[%s3390 + $0x658] sm:$0xff]
    %v3595 = vld [vmem:[%s3390 + $0x660] sm:$0xff]
    %v3596 = vld [vmem:[%s3390 + $0x668] sm:$0xff]
    %v3597 = vld [vmem:[%s3390 + $0x670] sm:$0xff]
    %v3598 = vld [vmem:[%s3390 + $0x678] sm:$0xff]
    %v3599 = vld [vmem:[%s3390 + $0x680] sm:$0xff]
    %v3600 = vld [vmem:[%s3390 + $0x688] sm:$0xff]
    %v3601 = vld [vmem:[%s3390 + $0x690] sm:$0xff]
    %v3602 = vld [vmem:[%s3390 + $0x698] sm:$0xff]
    %v3603 = vld [vmem:[%s3390 + $0x6a0] sm:$0xff]
    %v3604 = vld [vmem:[%s3390 + $0x6a8] sm:$0xff]
    %v3605 = vld [vmem:[%s3390 + $0x6b0] sm:$0xff]
    %v3606 = vld [vmem:[%s3390 + $0x6b8] sm:$0xff]
    %v3607 = vld [vmem:[%s3390 + $0x6c0] sm:$0xff]
    %v3608 = vld [vmem:[%s3390 + $0x6c8] sm:$0xff]
    %v3609 = vld [vmem:[%s3390 + $0x6d0] sm:$0xff]
    %v3610 = vld [vmem:[%s3390 + $0x6d8] sm:$0xff]
    %v3611 = vld [vmem:[%s3390 + $0x6e0] sm:$0xff]
    %v3612 = vld [vmem:[%s3390 + $0x6e8] sm:$0xff]
    %v3613 = vld [vmem:[%s3390 + $0x6f0] sm:$0xff]
    %v3614 = vld [vmem:[%s3390 + $0x6f8] sm:$0xff]
    %v3615 = vld [vmem:[%s3390 + $0x700] sm:$0xff]
    %v3616 = vld [vmem:[%s3390 + $0x708] sm:$0xff]
    %v3617 = vld [vmem:[%s3390 + $0x710] sm:$0xff]
    %v3618 = vld [vmem:[%s3390 + $0x718] sm:$0xff]
    %v3619 = vld [vmem:[%s3390 + $0x720] sm:$0xff]
    %v3620 = vld [vmem:[%s3390 + $0x728] sm:$0xff]
    %v3621 = vld [vmem:[%s3390 + $0x730] sm:$0xff]
    %v3622 = vld [vmem:[%s3390 + $0x738] sm:$0xff]
    %v3623 = vld [vmem:[%s3390 + $0x740] sm:$0xff]
    %v3624 = vld [vmem:[%s3390 + $0x748] sm:$0xff]
    %v3625 = vld [vmem:[%s3390 + $0x750] sm:$0xff]
    %v3626 = vld [vmem:[%s3390 + $0x758] sm:$0xff]
    %v3627 = vld [vmem:[%s3390 + $0x760] sm:$0xff]
    %v3628 = vld [vmem:[%s3390 + $0x768] sm:$0xff]
    %v3629 = vld [vmem:[%s3390 + $0x770] sm:$0xff]
    %v3630 = vld [vmem:[%s3390 + $0x778] sm:$0xff]
    %v3631 = vld [vmem:[%s3390 + $0x780] sm:$0xff]
    %v3632 = vld [vmem:[%s3390 + $0x788] sm:$0xff]
    %v3633 = vld [vmem:[%s3390 + $0x790] sm:$0xff]
    %v3634 = vld [vmem:[%s3390 + $0x798] sm:$0xff]
    %v3635 = vld [vmem:[%s3390 + $0x7a0] sm:$0xff]
    %v3636 = vld [vmem:[%s3390 + $0x7a8] sm:$0xff]
    %v3637 = vld [vmem:[%s3390 + $0x7b0] sm:$0xff]
    %v3638 = vld [vmem:[%s3390 + $0x7b8] sm:$0xff]
    %v3639 = vld [vmem:[%s3390 + $0x7c0] sm:$0xff]
    %v3640 = vld [vmem:[%s3390 + $0x7c8] sm:$0xff]
    %v3641 = vld [vmem:[%s3390 + $0x7d0] sm:$0xff]
    %v3642 = vld [vmem:[%s3390 + $0x7d8] sm:$0xff]
    %v3643 = vld [vmem:[%s3390 + $0x7e0] sm:$0xff]
    %v3644 = vld [vmem:[%s3390 + $0x7e8] sm:$0xff]
    %v3645 = vld [vmem:[%s3390 + $0x7f0] sm:$0xff]
    %v3646 = vld [vmem:[%s3390 + $0x7f8] sm:$0xff]
    %3647 = vmatprep.subr.mxu0 %v3392
    %3648 = vmatpush1.msra.mxu0 %v3391
    %3649 = vmatprep.subr.mxu0 %v3396
    %3650 = vmatpush1.msra.mxu0 %v3395
    %3651 = vmatprep.subr.mxu0 %v3400
    %3652 = vmatpush1.msra.mxu0 %v3399
    %3653 = vmatprep.subr.mxu0 %v3404
    %3654 = vmatpush1.msra.mxu0 %v3403
    %3655 = vmatprep.subr.mxu0 %v3408
    %3656 = vmatpush1.msra.mxu0 %v3407
    %3657 = vmatprep.subr.mxu0 %v3412
    %3658 = vmatpush1.msra.mxu0 %v3411
    %3659 = vmatprep.subr.mxu0 %v3416
    %3660 = vmatpush1.msra.mxu0 %v3415
    %3661 = vmatprep.subr.mxu0 %v3420
    %3662 = vmatpush1.msra.mxu0 %v3419
    %3663 = vmatprep.subr.mxu0 %v3424
    %3664 = vmatpush1.msra.mxu0 %v3423
    %3665 = vmatprep.subr.mxu0 %v3428
    %3666 = vmatpush1.msra.mxu0 %v3427
    %3667 = vmatprep.subr.mxu0 %v3432
    %3668 = vmatpush1.msra.mxu0 %v3431
    %3669 = vmatprep.subr.mxu0 %v3436
    %3670 = vmatpush1.msra.mxu0 %v3435
    %3671 = vmatprep.subr.mxu0 %v3440
    %3672 = vmatpush1.msra.mxu0 %v3439
    %3673 = vmatprep.subr.mxu0 %v3444
    %3674 = vmatpush1.msra.mxu0 %v3443
    %3675 = vmatprep.subr.mxu0 %v3448
    %3676 = vmatpush1.msra.mxu0 %v3447
    %3677 = vmatprep.subr.mxu0 %v3452
    %3678 = vmatpush1.msra.mxu0 %v3451
    %3679 = vmatprep.subr.mxu0 %v3456
    %3680 = vmatpush1.msra.mxu0 %v3455
    %3681 = vmatprep.subr.mxu0 %v3460
    %3682 = vmatpush1.msra.mxu0 %v3459
    %3683 = vmatprep.subr.mxu0 %v3464
    %3684 = vmatpush1.msra.mxu0 %v3463
    %3685 = vmatprep.subr.mxu0 %v3468
    %3686 = vmatpush1.msra.mxu0 %v3467
    %3687 = vmatprep.subr.mxu0 %v3472
    %3688 = vmatpush1.msra.mxu0 %v3471
    %3689 = vmatprep.subr.mxu0 %v3476
    %3690 = vmatpush1.msra.mxu0 %v3475
    %3691 = vmatprep.subr.mxu0 %v3480
    %3692 = vmatpush1.msra.mxu0 %v3479
    %3693 = vmatprep.subr.mxu0 %v3484
    %3694 = vmatpush1.msra.mxu0 %v3483
    %3695 = vmatprep.subr.mxu0 %v3488
    %3696 = vmatpush1.msra.mxu0 %v3487
    %3697 = vmatprep.subr.mxu0 %v3492
    %3698 = vmatpush1.msra.mxu0 %v3491
    %3699 = vmatprep.subr.mxu0 %v3496
    %3700 = vmatpush1.msra.mxu0 %v3495
    %3701 = vmatprep.subr.mxu0 %v3500
    %3702 = vmatpush1.msra.mxu0 %v3499
    %3703 = vmatprep.subr.mxu0 %v3504
    %3704 = vmatpush1.msra.mxu0 %v3503
    %3705 = vmatprep.subr.mxu0 %v3508
    %3706 = vmatpush1.msra.mxu0 %v3507
    %3707 = vmatprep.subr.mxu0 %v3512
    %3708 = vmatpush1.msra.mxu0 %v3511
    %3709 = vmatprep.subr.mxu0 %v3516
    %3710 = vmatpush1.msra.mxu0 %v3515
    %3711 = vmatprep.mubr.f32.mxu0 %v3339
    %3712 = vmatmul.mubr.f32.gmra.mrb[0].mxu0 %v3336
    %v3713 = vpop.f32.mrb[0].mxu0
    %v3714 = vadd.f32 0.0, %v3713
    %v3715 = vpop.f32.mrb[0].mxu0
    %v3716 = vadd.f32 0.0, %v3715
    %3717 = vmatprep.mubr.f32.mxu0 %v3349
    %3718 = vmatmul.mubr.f32.gmra.mrb[0].mxu0 %v3347
    %v3719 = vpop.f32.mrb[0].mxu0
    %v3720 = vadd.f32 0.0, %v3719
    %v3721 = vpop.f32.mrb[0].mxu0
    %v3722 = vadd.f32 0.0, %v3721
    %3723 = vmatprep.mubr.f32.mxu0 %v3359
    %3724 = vmatmul.mubr.f32.gmra.mrb[0].mxu0 %v3356
    %v3725 = vpop.f32.mrb[0].mxu0
    %v3726 = vadd.f32 0.0, %v3725
    %v3727 = vpop.f32.mrb[0].mxu0
    %v3728 = vadd.f32 0.0, %v3727
    %3729 = vmatprep.mubr.f32.mxu0 %v3369
    %3730 = vmatmul.mubr.f32.gmra.mrb[0].mxu0 %v3367
    %v3731 = vpop.f32.mrb[0].mxu0
    %v3732 = vadd.f32 0.0, %v3731
    %v3733 = vpop.f32.mrb[0].mxu0
    %v3734 = vadd.f32 0.0, %v3733
    %3735 = vdwg.mxu0
    %3736 = vmatprep.subr.mxu0 %v3520
    %3737 = vmatpush1.msra.mxu0 %v3519
    %3738 = vmatprep.subr.mxu0 %v3524
    %3739 = vmatpush1.msra.mxu0 %v3523
    %3740 = vmatprep.subr.mxu0 %v3528
    %3741 = vmatpush1.msra.mxu0 %v3527
    %3742 = vmatprep.subr.mxu0 %v3532
    %3743 = vmatpush1.msra.mxu0 %v3531
    %3744 = vmatprep.subr.mxu0 %v3536
    %3745 = vmatpush1.msra.mxu0 %v3535
    %3746 = vmatprep.subr.mxu0 %v3540
    %3747 = vmatpush1.msra.mxu0 %v3539
    %3748 = vmatprep.subr.mxu0 %v3544
    %3749 = vmatpush1.msra.mxu0 %v3543
    %3750 = vmatprep.subr.mxu0 %v3548
    %3751 = vmatpush1.msra.mxu0 %v3547
    %3752 = vmatprep.subr.mxu0 %v3552
    %3753 = vmatpush1.msra.mxu0 %v3551
    %3754 = vmatprep.subr.mxu0 %v3556
    %3755 = vmatpush1.msra.mxu0 %v3555
    %3756 = vmatprep.subr.mxu0 %v3560
    %3757 = vmatpush1.msra.mxu0 %v3559
    %3758 = vmatprep.subr.mxu0 %v3564
    %3759 = vmatpush1.msra.mxu0 %v3563
    %3760 = vmatprep.subr.mxu0 %v3568
    %3761 = vmatpush1.msra.mxu0 %v3567
    %3762 = vmatprep.subr.mxu0 %v3572
    %3763 = vmatpush1.msra.mxu0 %v3571
    %3764 = vmatprep.subr.mxu0 %v3576
    %3765 = vmatpush1.msra.mxu0 %v3575
    %3766 = vmatprep.subr.mxu0 %v3580
    %3767 = vmatpush1.msra.mxu0 %v3579
    %3768 = vmatprep.subr.mxu0 %v3584
    %3769 = vmatpush1.msra.mxu0 %v3583
    %3770 = vmatprep.subr.mxu0 %v3588
    %3771 = vmatpush1.msra.mxu0 %v3587
    %3772 = vmatprep.subr.mxu0 %v3592
    %3773 = vmatpush1.msra.mxu0 %v3591
    %3774 = vmatprep.subr.mxu0 %v3596
    %3775 = vmatpush1.msra.mxu0 %v3595
    %3776 = vmatprep.subr.mxu0 %v3600
    %3777 = vmatpush1.msra.mxu0 %v3599
    %3778 = vmatprep.subr.mxu0 %v3604
    %3779 = vmatpush1.msra.mxu0 %v3603
    %3780 = vmatprep.subr.mxu0 %v3608
    %3781 = vmatpush1.msra.mxu0 %v3607
    %3782 = vmatprep.subr.mxu0 %v3612
    %3783 = vmatpush1.msra.mxu0 %v3611
    %3784 = vmatprep.subr.mxu0 %v3616
    %3785 = vmatpush1.msra.mxu0 %v3615
    %3786 = vmatprep.subr.mxu0 %v3620
    %3787 = vmatpush1.msra.mxu0 %v3619
    %3788 = vmatprep.subr.mxu0 %v3624
    %3789 = vmatpush1.msra.mxu0 %v3623
    %3790 = vmatprep.subr.mxu0 %v3628
    %3791 = vmatpush1.msra.mxu0 %v3627
    %3792 = vmatprep.subr.mxu0 %v3632
    %3793 = vmatpush1.msra.mxu0 %v3631
    %3794 = vmatprep.subr.mxu0 %v3636
    %3795 = vmatpush1.msra.mxu0 %v3635
    %3796 = vmatprep.subr.mxu0 %v3640
    %3797 = vmatpush1.msra.mxu0 %v3639
    %3798 = vmatprep.subr.mxu0 %v3644
    %3799 = vmatpush1.msra.mxu0 %v3643
    %3800 = vmatprep.mubr.f32.mxu0 %v3345
    %3801 = vmatmul.mubr.f32.gmra.mrb[0].mxu0 %v3342
    %v3802 = vpop.f32.mrb[0].mxu0
    %v3803 = vadd.f32 %v3714, %v3802
    %v3804 = vpop.f32.mrb[0].mxu0
    %v3805 = vadd.f32 %v3716, %v3804
    %3806 = vmatprep.mubr.f32.mxu0 %v3353
    %3807 = vmatmul.mubr.f32.gmra.mrb[0].mxu0 %v3351
    %v3808 = vpop.f32.mrb[0].mxu0
    %v3809 = vadd.f32 %v3720, %v3808
    %v3810 = vpop.f32.mrb[0].mxu0
    %v3811 = vadd.f32 %v3722, %v3810
    %3812 = vmatprep.mubr.f32.mxu0 %v3365
    %3813 = vmatmul.mubr.f32.gmra.mrb[0].mxu0 %v3362
    %v3814 = vpop.f32.mrb[0].mxu0
    %v3815 = vadd.f32 %v3726, %v3814
    %v3816 = vpop.f32.mrb[0].mxu0
    %v3817 = vadd.f32 %v3728, %v3816
    %3818 = vmatprep.mubr.f32.mxu0 %v3373
    %3819 = vmatmul.mubr.f32.gmra.mrb[0].mxu0 %v3371
    %v3820 = vpop.f32.mrb[0].mxu0
    %v3821 = vadd.f32 %v3732, %v3820
    %v3822 = vpop.f32.mrb[0].mxu0
    %v3823 = vadd.f32 %v3734, %v3822
    %3824 = vdwg.mxu0
    %3825 = vmatprep.subr.mxu0 %v3394
    %3826 = vmatpush1.msra.mxu0 %v3393
    %3827 = vmatprep.subr.mxu0 %v3398
    %3828 = vmatpush1.msra.mxu0 %v3397
    %3829 = vmatprep.subr.mxu0 %v3402
    %3830 = vmatpush1.msra.mxu0 %v3401
    %3831 = vmatprep.subr.mxu0 %v3406
    %3832 = vmatpush1.msra.mxu0 %v3405
    %3833 = vmatprep.subr.mxu0 %v3410
    %3834 = vmatpush1.msra.mxu0 %v3409
    %3835 = vmatprep.subr.mxu0 %v3414
    %3836 = vmatpush1.msra.mxu0 %v3413
    %3837 = vmatprep.subr.mxu0 %v3418
    %3838 = vmatpush1.msra.mxu0 %v3417
    %3839 = vmatprep.subr.mxu0 %v3422
    %3840 = vmatpush1.msra.mxu0 %v3421
    %3841 = vmatprep.subr.mxu0 %v3426
    %3842 = vmatpush1.msra.mxu0 %v3425
    %3843 = vmatprep.subr.mxu0 %v3430
    %3844 = vmatpush1.msra.mxu0 %v3429
    %3845 = vmatprep.subr.mxu0 %v3434
    %3846 = vmatpush1.msra.mxu0 %v3433
    %3847 = vmatprep.subr.mxu0 %v3438
    %3848 = vmatpush1.msra.mxu0 %v3437
    %3849 = vmatprep.subr.mxu0 %v3442
    %3850 = vmatpush1.msra.mxu0 %v3441
    %3851 = vmatprep.subr.mxu0 %v3446
    %3852 = vmatpush1.msra.mxu0 %v3445
    %3853 = vmatprep.subr.mxu0 %v3450
    %3854 = vmatpush1.msra.mxu0 %v3449
    %3855 = vmatprep.subr.mxu0 %v3454
    %3856 = vmatpush1.msra.mxu0 %v3453
    %3857 = vmatprep.subr.mxu0 %v3458
    %3858 = vmatpush1.msra.mxu0 %v3457
    %3859 = vmatprep.subr.mxu0 %v3462
    %3860 = vmatpush1.msra.mxu0 %v3461
    %3861 = vmatprep.subr.mxu0 %v3466
    %3862 = vmatpush1.msra.mxu0 %v3465
    %3863 = vmatprep.subr.mxu0 %v3470
    %3864 = vmatpush1.msra.mxu0 %v3469
    %3865 = vmatprep.subr.mxu0 %v3474
    %3866 = vmatpush1.msra.mxu0 %v3473
    %3867 = vmatprep.subr.mxu0 %v3478
    %3868 = vmatpush1.msra.mxu0 %v3477
    %3869 = vmatprep.subr.mxu0 %v3482
    %3870 = vmatpush1.msra.mxu0 %v3481
    %3871 = vmatprep.subr.mxu0 %v3486
    %3872 = vmatpush1.msra.mxu0 %v3485
    %3873 = vmatprep.subr.mxu0 %v3490
    %3874 = vmatpush1.msra.mxu0 %v3489
    %3875 = vmatprep.subr.mxu0 %v3494
    %3876 = vmatpush1.msra.mxu0 %v3493
    %3877 = vmatprep.subr.mxu0 %v3498
    %3878 = vmatpush1.msra.mxu0 %v3497
    %3879 = vmatprep.subr.mxu0 %v3502
    %3880 = vmatpush1.msra.mxu0 %v3501
    %3881 = vmatprep.subr.mxu0 %v3506
    %3882 = vmatpush1.msra.mxu0 %v3505
    %3883 = vmatprep.subr.mxu0 %v3510
    %3884 = vmatpush1.msra.mxu0 %v3509
    %3885 = vmatprep.subr.mxu0 %v3514
    %3886 = vmatpush1.msra.mxu0 %v3513
    %3887 = vmatprep.subr.mxu0 %v3518
    %3888 = vmatpush1.msra.mxu0 %v3517
    %3889 = vmatprep.mubr.f32.mxu0 %v3339
    %3890 = vmatmul.mubr.f32.gmra.mrb[0].mxu0 %v3336
    %v3891 = vpop.f32.mrb[0].mxu0
    %v3892 = vadd.f32 0.0, %v3891
    %v3893 = vpop.f32.mrb[0].mxu0
    %v3894 = vadd.f32 0.0, %v3893
    %3895 = vmatprep.mubr.f32.mxu0 %v3349
    %3896 = vmatmul.mubr.f32.gmra.mrb[0].mxu0 %v3347
    %v3897 = vpop.f32.mrb[0].mxu0
    %v3898 = vadd.f32 0.0, %v3897
    %v3899 = vpop.f32.mrb[0].mxu0
    %v3900 = vadd.f32 0.0, %v3899
    %3901 = vmatprep.mubr.f32.mxu0 %v3359
    %3902 = vmatmul.mubr.f32.gmra.mrb[0].mxu0 %v3356
    %v3903 = vpop.f32.mrb[0].mxu0
    %v3904 = vadd.f32 0.0, %v3903
    %v3905 = vpop.f32.mrb[0].mxu0
    %v3906 = vadd.f32 0.0, %v3905
    %3907 = vmatprep.mubr.f32.mxu0 %v3369
    %3908 = vmatmul.mubr.f32.gmra.mrb[0].mxu0 %v3367
    %v3909 = vpop.f32.mrb[0].mxu0
    %v3910 = vadd.f32 0.0, %v3909
    %v3911 = vpop.f32.mrb[0].mxu0
    %v3912 = vadd.f32 0.0, %v3911
    %3913 = vdwg.mxu0
    %3914 = vmatprep.subr.mxu0 %v3522
    %3915 = vmatpush1.msra.mxu0 %v3521
    %3916 = vmatprep.subr.mxu0 %v3526
    %3917 = vmatpush1.msra.mxu0 %v3525
    %3918 = vmatprep.subr.mxu0 %v3530
    %3919 = vmatpush1.msra.mxu0 %v3529
    %3920 = vmatprep.subr.mxu0 %v3534
    %3921 = vmatpush1.msra.mxu0 %v3533
    %3922 = vmatprep.subr.mxu0 %v3538
    %3923 = vmatpush1.msra.mxu0 %v3537
    %3924 = vmatprep.subr.mxu0 %v3542
    %3925 = vmatpush1.msra.mxu0 %v3541
    %3926 = vmatprep.subr.mxu0 %v3546
    %3927 = vmatpush1.msra.mxu0 %v3545
    %3928 = vmatprep.subr.mxu0 %v3550
    %3929 = vmatpush1.msra.mxu0 %v3549
    %3930 = vmatprep.subr.mxu0 %v3554
    %3931 = vmatpush1.msra.mxu0 %v3553
    %3932 = vmatprep.subr.mxu0 %v3558
    %3933 = vmatpush1.msra.mxu0 %v3557
    %3934 = vmatprep.subr.mxu0 %v3562
    %3935 = vmatpush1.msra.mxu0 %v3561
    %3936 = vmatprep.subr.mxu0 %v3566
    %3937 = vmatpush1.msra.mxu0 %v3565
    %3938 = vmatprep.subr.mxu0 %v3570
    %3939 = vmatpush1.msra.mxu0 %v3569
    %3940 = vmatprep.subr.mxu0 %v3574
    %3941 = vmatpush1.msra.mxu0 %v3573
    %3942 = vmatprep.subr.mxu0 %v3578
    %3943 = vmatpush1.msra.mxu0 %v3577
    %3944 = vmatprep.subr.mxu0 %v3582
    %3945 = vmatpush1.msra.mxu0 %v3581
    %3946 = vmatprep.subr.mxu0 %v3586
    %3947 = vmatpush1.msra.mxu0 %v3585
    %3948 = vmatprep.subr.mxu0 %v3590
    %3949 = vmatpush1.msra.mxu0 %v3589
    %3950 = vmatprep.subr.mxu0 %v3594
    %3951 = vmatpush1.msra.mxu0 %v3593
    %3952 = vmatprep.subr.mxu0 %v3598
    %3953 = vmatpush1.msra.mxu0 %v3597
    %3954 = vmatprep.subr.mxu0 %v3602
    %3955 = vmatpush1.msra.mxu0 %v3601
    %3956 = vmatprep.subr.mxu0 %v3606
    %3957 = vmatpush1.msra.mxu0 %v3605
    %3958 = vmatprep.subr.mxu0 %v3610
    %3959 = vmatpush1.msra.mxu0 %v3609
    %3960 = vmatprep.subr.mxu0 %v3614
    %3961 = vmatpush1.msra.mxu0 %v3613
    %3962 = vmatprep.subr.mxu0 %v3618
    %3963 = vmatpush1.msra.mxu0 %v3617
    %3964 = vmatprep.subr.mxu0 %v3622
    %3965 = vmatpush1.msra.mxu0 %v3621
    %3966 = vmatprep.subr.mxu0 %v3626
    %3967 = vmatpush1.msra.mxu0 %v3625
    %3968 = vmatprep.subr.mxu0 %v3630
    %3969 = vmatpush1.msra.mxu0 %v3629
    %3970 = vmatprep.subr.mxu0 %v3634
    %3971 = vmatpush1.msra.mxu0 %v3633
    %3972 = vmatprep.subr.mxu0 %v3638
    %3973 = vmatpush1.msra.mxu0 %v3637
    %3974 = vmatprep.subr.mxu0 %v3642
    %3975 = vmatpush1.msra.mxu0 %v3641
    %3976 = vmatprep.subr.mxu0 %v3646
    %3977 = vmatpush1.msra.mxu0 %v3645
    %3978 = vmatprep.mubr.f32.mxu0 %v3345
    %3979 = vmatmul.mubr.f32.gmra.mrb[0].mxu0 %v3342
    %v3980 = vpop.f32.mrb[0].mxu0
    %v3981 = vadd.f32 %v3892, %v3980
    %v3982 = vpop.f32.mrb[0].mxu0
    %v3983 = vadd.f32 %v3894, %v3982
    %3984 = vmatprep.mubr.f32.mxu0 %v3353
    %3985 = vmatmul.mubr.f32.gmra.mrb[0].mxu0 %v3351
    %v3986 = vpop.f32.mrb[0].mxu0
    %v3987 = vadd.f32 %v3898, %v3986
    %v3988 = vpop.f32.mrb[0].mxu0
    %v3989 = vadd.f32 %v3900, %v3988
    %3990 = vmatprep.mubr.f32.mxu0 %v3365
    %3991 = vmatmul.mubr.f32.gmra.mrb[0].mxu0 %v3362
    %v3992 = vpop.f32.mrb[0].mxu0
    %v3993 = vadd.f32 %v3904, %v3992
    %v3994 = vpop.f32.mrb[0].mxu0
    %v3995 = vadd.f32 %v3906, %v3994
    %3996 = vmatprep.mubr.f32.mxu0 %v3373
    %3997 = vmatmul.mubr.f32.gmra.mrb[0].mxu0 %v3371
    %v3998 = vpop.f32.mrb[0].mxu0
    %v3999 = vadd.f32 %v3910, %v3998
    %v4000 = vpop.f32.mrb[0].mxu0
    %v4001 = vadd.f32 %v3912, %v4000
    %4002 = vdwg.mxu0
    %v4003 = vadd.f32 %v3285, %v3803
    %v4004 = vadd.f32 %v3286, %v3805
    %v4005 = vadd.f32 %v3287, %v3981
    %v4006 = vadd.f32 %v3288, %v3983
    %v4007 = vadd.f32 %v3289, %v3809
    %v4008 = vadd.f32 %v3290, %v3811
    %v4009 = vadd.f32 %v3291, %v3987
    %v4010 = vadd.f32 %v3292, %v3989
    %v4011 = vadd.f32 %v3293, %v3815
    %v4012 = vadd.f32 %v3294, %v3817
    %v4013 = vadd.f32 %v3295, %v3993
    %v4014 = vadd.f32 %v3296, %v3995
    %v4015 = vadd.f32 %v3297, %v3821
    %v4016 = vadd.f32 %v3298, %v3823
    %v4017 = vadd.f32 %v3299, %v3999
    %v4018 = vadd.f32 %v3300, %v4001
    %v4019 = vld [vmem:[#allocation15] sm:$0xf]
    %v4020 = vld [vmem:[#allocation17] sm:$0xf]
    %v4021 = vld [vmem:[%s11] sm:$0xff]
    %v4022 = vld [vmem:[%s11 + $0x8] sm:$0xff]
    %v4023 = vld [vmem:[%s11 + $0x10] sm:$0xff]
    %v4024 = vld [vmem:[%s11 + $0x18] sm:$0xff]
    %v4025 = vld [vmem:[%s11 + $0x20] sm:$0xff]
    %v4026 = vld [vmem:[%s11 + $0x28] sm:$0xff]
    %v4027 = vld [vmem:[%s11 + $0x30] sm:$0xff]
    %v4028 = vld [vmem:[%s11 + $0x38] sm:$0xff]
    %v4029 = vld [vmem:[%s11 + $0x40] sm:$0xff]
    %v4030 = vld [vmem:[%s11 + $0x48] sm:$0xff]
    %v4031 = vld [vmem:[%s11 + $0x50] sm:$0xff]
    %v4032 = vld [vmem:[%s11 + $0x58] sm:$0xff]
    %v4033 = vld [vmem:[%s11 + $0x60] sm:$0xff]
    %v4034 = vld [vmem:[%s11 + $0x68] sm:$0xff]
    %v4035 = vld [vmem:[%s11 + $0x70] sm:$0xff]
    %v4036 = vld [vmem:[%s11 + $0x78] sm:$0xff]
    %v4037 = vld [vmem:[%s11 + $0x80] sm:$0xff]
    %v4038 = vld [vmem:[%s11 + $0x88] sm:$0xff]
    %v4039 = vld [vmem:[%s11 + $0x90] sm:$0xff]
    %v4040 = vld [vmem:[%s11 + $0x98] sm:$0xff]
    %v4041 = vld [vmem:[%s11 + $0xa0] sm:$0xff]
    %v4042 = vld [vmem:[%s11 + $0xa8] sm:$0xff]
    %v4043 = vld [vmem:[%s11 + $0xb0] sm:$0xff]
    %v4044 = vld [vmem:[%s11 + $0xb8] sm:$0xff]
    %v4045 = vld [vmem:[%s11 + $0xc0] sm:$0xff]
    %v4046 = vld [vmem:[%s11 + $0xc8] sm:$0xff]
    %v4047 = vld [vmem:[%s11 + $0xd0] sm:$0xff]
    %v4048 = vld [vmem:[%s11 + $0xd8] sm:$0xff]
    %v4049 = vld [vmem:[%s11 + $0xe0] sm:$0xff]
    %v4050 = vld [vmem:[%s11 + $0xe8] sm:$0xff]
    %v4051 = vld [vmem:[%s11 + $0xf0] sm:$0xff]
    %v4052 = vld [vmem:[%s11 + $0xf8] sm:$0xff]
    %v4053 = vld [vmem:[%s11 + $0x100] sm:$0xff]
    %v4054 = vld [vmem:[%s11 + $0x108] sm:$0xff]
    %v4055 = vld [vmem:[%s11 + $0x110] sm:$0xff]
    %v4056 = vld [vmem:[%s11 + $0x118] sm:$0xff]
    %v4057 = vld [vmem:[%s11 + $0x120] sm:$0xff]
    %v4058 = vld [vmem:[%s11 + $0x128] sm:$0xff]
    %v4059 = vld [vmem:[%s11 + $0x130] sm:$0xff]
    %v4060 = vld [vmem:[%s11 + $0x138] sm:$0xff]
    %v4061 = vld [vmem:[%s11 + $0x140] sm:$0xff]
    %v4062 = vld [vmem:[%s11 + $0x148] sm:$0xff]
    %v4063 = vld [vmem:[%s11 + $0x150] sm:$0xff]
    %v4064 = vld [vmem:[%s11 + $0x158] sm:$0xff]
    %v4065 = vld [vmem:[%s11 + $0x160] sm:$0xff]
    %v4066 = vld [vmem:[%s11 + $0x168] sm:$0xff]
    %v4067 = vld [vmem:[%s11 + $0x170] sm:$0xff]
    %v4068 = vld [vmem:[%s11 + $0x178] sm:$0xff]
    %v4069 = vld [vmem:[%s11 + $0x180] sm:$0xff]
    %v4070 = vld [vmem:[%s11 + $0x188] sm:$0xff]
    %v4071 = vld [vmem:[%s11 + $0x190] sm:$0xff]
    %v4072 = vld [vmem:[%s11 + $0x198] sm:$0xff]
    %v4073 = vld [vmem:[%s11 + $0x1a0] sm:$0xff]
    %v4074 = vld [vmem:[%s11 + $0x1a8] sm:$0xff]
    %v4075 = vld [vmem:[%s11 + $0x1b0] sm:$0xff]
    %v4076 = vld [vmem:[%s11 + $0x1b8] sm:$0xff]
    %v4077 = vld [vmem:[%s11 + $0x1c0] sm:$0xff]
    %v4078 = vld [vmem:[%s11 + $0x1c8] sm:$0xff]
    %v4079 = vld [vmem:[%s11 + $0x1d0] sm:$0xff]
    %v4080 = vld [vmem:[%s11 + $0x1d8] sm:$0xff]
    %v4081 = vld [vmem:[%s11 + $0x1e0] sm:$0xff]
    %v4082 = vld [vmem:[%s11 + $0x1e8] sm:$0xff]
    %v4083 = vld [vmem:[%s11 + $0x1f0] sm:$0xff]
    %v4084 = vld [vmem:[%s11 + $0x1f8] sm:$0xff]
    %4085 = vmatprep.subr.mxu0 0.0
    %4086 = vmatpush1.msra.mxu0 %v4021
    %4087 = vmatprep.subr.mxu0 0.0
    %4088 = vmatpush1.msra.mxu0 %v4022
    %4089 = vmatprep.subr.mxu0 0.0
    %4090 = vmatpush1.msra.mxu0 %v4023
    %4091 = vmatprep.subr.mxu0 0.0
    %4092 = vmatpush1.msra.mxu0 %v4024
    %4093 = vmatprep.subr.mxu0 0.0
    %4094 = vmatpush1.msra.mxu0 %v4025
    %4095 = vmatprep.subr.mxu0 0.0
    %4096 = vmatpush1.msra.mxu0 %v4026
    %4097 = vmatprep.subr.mxu0 0.0
    %4098 = vmatpush1.msra.mxu0 %v4027
    %4099 = vmatprep.subr.mxu0 0.0
    %4100 = vmatpush1.msra.mxu0 %v4028
    %4101 = vmatprep.subr.mxu0 0.0
    %4102 = vmatpush1.msra.mxu0 %v4029
    %4103 = vmatprep.subr.mxu0 0.0
    %4104 = vmatpush1.msra.mxu0 %v4030
    %4105 = vmatprep.subr.mxu0 0.0
    %4106 = vmatpush1.msra.mxu0 %v4031
    %4107 = vmatprep.subr.mxu0 0.0
    %4108 = vmatpush1.msra.mxu0 %v4032
    %4109 = vmatprep.subr.mxu0 0.0
    %4110 = vmatpush1.msra.mxu0 %v4033
    %4111 = vmatprep.subr.mxu0 0.0
    %4112 = vmatpush1.msra.mxu0 %v4034
    %4113 = vmatprep.subr.mxu0 0.0
    %4114 = vmatpush1.msra.mxu0 %v4035
    %4115 = vmatprep.subr.mxu0 0.0
    %4116 = vmatpush1.msra.mxu0 %v4036
    %4117 = vmatprep.subr.mxu0 0.0
    %4118 = vmatpush1.msra.mxu0 %v4037
    %4119 = vmatprep.subr.mxu0 0.0
    %4120 = vmatpush1.msra.mxu0 %v4038
    %4121 = vmatprep.subr.mxu0 0.0
    %4122 = vmatpush1.msra.mxu0 %v4039
    %4123 = vmatprep.subr.mxu0 0.0
    %4124 = vmatpush1.msra.mxu0 %v4040
    %4125 = vmatprep.subr.mxu0 0.0
    %4126 = vmatpush1.msra.mxu0 %v4041
    %4127 = vmatprep.subr.mxu0 0.0
    %4128 = vmatpush1.msra.mxu0 %v4042
    %4129 = vmatprep.subr.mxu0 0.0
    %4130 = vmatpush1.msra.mxu0 %v4043
    %4131 = vmatprep.subr.mxu0 0.0
    %4132 = vmatpush1.msra.mxu0 %v4044
    %4133 = vmatprep.subr.mxu0 0.0
    %4134 = vmatpush1.msra.mxu0 %v4045
    %4135 = vmatprep.subr.mxu0 0.0
    %4136 = vmatpush1.msra.mxu0 %v4046
    %4137 = vmatprep.subr.mxu0 0.0
    %4138 = vmatpush1.msra.mxu0 %v4047
    %4139 = vmatprep.subr.mxu0 0.0
    %4140 = vmatpush1.msra.mxu0 %v4048
    %4141 = vmatprep.subr.mxu0 0.0
    %4142 = vmatpush1.msra.mxu0 %v4049
    %4143 = vmatprep.subr.mxu0 0.0
    %4144 = vmatpush1.msra.mxu0 %v4050
    %4145 = vmatprep.subr.mxu0 0.0
    %4146 = vmatpush1.msra.mxu0 %v4051
    %4147 = vmatprep.subr.mxu0 0.0
    %4148 = vmatpush1.msra.mxu0 %v4052
    %4149 = vmatprep.mubr.f32.mxu0 %v4004
    %4150 = vmatmul.mubr.f32.gmra.mrb[0].mxu0 %v4003
    %v4151 = vpop.f32.mrb[0].mxu0
    %v4152 = vadd.f32 0.0, %v4151
    %v4153 = vpop.f32.mrb[0].mxu0
    %4154 = vmatprep.mubr.f32.mxu0 %v4008
    %4155 = vmatmul.mubr.f32.gmra.mrb[0].mxu0 %v4007
    %v4156 = vpop.f32.mrb[0].mxu0
    %v4157 = vadd.f32 0.0, %v4156
    %v4158 = vpop.f32.mrb[0].mxu0
    %4159 = vmatprep.mubr.f32.mxu0 %v4012
    %4160 = vmatmul.mubr.f32.gmra.mrb[0].mxu0 %v4011
    %v4161 = vpop.f32.mrb[0].mxu0
    %v4162 = vadd.f32 0.0, %v4161
    %v4163 = vpop.f32.mrb[0].mxu0
    %4164 = vmatprep.mubr.f32.mxu0 %v4016
    %4165 = vmatmul.mubr.f32.gmra.mrb[0].mxu0 %v4015
    %v4166 = vpop.f32.mrb[0].mxu0
    %v4167 = vadd.f32 0.0, %v4166
    %v4168 = vpop.f32.mrb[0].mxu0
    %4169 = vdwg.mxu0
    %4170 = vmatprep.subr.mxu0 0.0
    %4171 = vmatpush1.msra.mxu0 %v4053
    %4172 = vmatprep.subr.mxu0 0.0
    %4173 = vmatpush1.msra.mxu0 %v4054
    %4174 = vmatprep.subr.mxu0 0.0
    %4175 = vmatpush1.msra.mxu0 %v4055
    %4176 = vmatprep.subr.mxu0 0.0
    %4177 = vmatpush1.msra.mxu0 %v4056
    %4178 = vmatprep.subr.mxu0 0.0
    %4179 = vmatpush1.msra.mxu0 %v4057
    %4180 = vmatprep.subr.mxu0 0.0
    %4181 = vmatpush1.msra.mxu0 %v4058
    %4182 = vmatprep.subr.mxu0 0.0
    %4183 = vmatpush1.msra.mxu0 %v4059
    %4184 = vmatprep.subr.mxu0 0.0
    %4185 = vmatpush1.msra.mxu0 %v4060
    %4186 = vmatprep.subr.mxu0 0.0
    %4187 = vmatpush1.msra.mxu0 %v4061
    %4188 = vmatprep.subr.mxu0 0.0
    %4189 = vmatpush1.msra.mxu0 %v4062
    %4190 = vmatprep.subr.mxu0 0.0
    %4191 = vmatpush1.msra.mxu0 %v4063
    %4192 = vmatprep.subr.mxu0 0.0
    %4193 = vmatpush1.msra.mxu0 %v4064
    %4194 = vmatprep.subr.mxu0 0.0
    %4195 = vmatpush1.msra.mxu0 %v4065
    %4196 = vmatprep.subr.mxu0 0.0
    %4197 = vmatpush1.msra.mxu0 %v4066
    %4198 = vmatprep.subr.mxu0 0.0
    %4199 = vmatpush1.msra.mxu0 %v4067
    %4200 = vmatprep.subr.mxu0 0.0
    %4201 = vmatpush1.msra.mxu0 %v4068
    %4202 = vmatprep.subr.mxu0 0.0
    %4203 = vmatpush1.msra.mxu0 %v4069
    %4204 = vmatprep.subr.mxu0 0.0
    %4205 = vmatpush1.msra.mxu0 %v4070
    %4206 = vmatprep.subr.mxu0 0.0
    %4207 = vmatpush1.msra.mxu0 %v4071
    %4208 = vmatprep.subr.mxu0 0.0
    %4209 = vmatpush1.msra.mxu0 %v4072
    %4210 = vmatprep.subr.mxu0 0.0
    %4211 = vmatpush1.msra.mxu0 %v4073
    %4212 = vmatprep.subr.mxu0 0.0
    %4213 = vmatpush1.msra.mxu0 %v4074
    %4214 = vmatprep.subr.mxu0 0.0
    %4215 = vmatpush1.msra.mxu0 %v4075
    %4216 = vmatprep.subr.mxu0 0.0
    %4217 = vmatpush1.msra.mxu0 %v4076
    %4218 = vmatprep.subr.mxu0 0.0
    %4219 = vmatpush1.msra.mxu0 %v4077
    %4220 = vmatprep.subr.mxu0 0.0
    %4221 = vmatpush1.msra.mxu0 %v4078
    %4222 = vmatprep.subr.mxu0 0.0
    %4223 = vmatpush1.msra.mxu0 %v4079
    %4224 = vmatprep.subr.mxu0 0.0
    %4225 = vmatpush1.msra.mxu0 %v4080
    %4226 = vmatprep.subr.mxu0 0.0
    %4227 = vmatpush1.msra.mxu0 %v4081
    %4228 = vmatprep.subr.mxu0 0.0
    %4229 = vmatpush1.msra.mxu0 %v4082
    %4230 = vmatprep.subr.mxu0 0.0
    %4231 = vmatpush1.msra.mxu0 %v4083
    %4232 = vmatprep.subr.mxu0 0.0
    %4233 = vmatpush1.msra.mxu0 %v4084
    %4234 = vmatprep.mubr.f32.mxu0 %v4006
    %4235 = vmatmul.mubr.f32.gmra.mrb[0].mxu0 %v4005
    %v4236 = vpop.f32.mrb[0].mxu0
    %v4237 = vadd.f32 %v4152, %v4236
    %v4238 = vpop.f32.mrb[0].mxu0
    %4239 = vmatprep.mubr.f32.mxu0 %v4010
    %4240 = vmatmul.mubr.f32.gmra.mrb[0].mxu0 %v4009
    %v4241 = vpop.f32.mrb[0].mxu0
    %v4242 = vadd.f32 %v4157, %v4241
    %v4243 = vpop.f32.mrb[0].mxu0
    %4244 = vmatprep.mubr.f32.mxu0 %v4014
    %4245 = vmatmul.mubr.f32.gmra.mrb[0].mxu0 %v4013
    %v4246 = vpop.f32.mrb[0].mxu0
    %v4247 = vadd.f32 %v4162, %v4246
    %v4248 = vpop.f32.mrb[0].mxu0
    %4249 = vmatprep.mubr.f32.mxu0 %v4018
    %4250 = vmatmul.mubr.f32.gmra.mrb[0].mxu0 %v4017
    %v4251 = vpop.f32.mrb[0].mxu0
    %v4252 = vadd.f32 %v4167, %v4251
    %v4253 = vpop.f32.mrb[0].mxu0
    %4254 = vdwg.mxu0
    %v4255 = vmul.f32 %v4003, %v4003
    %v4256 = vmul.f32 %v4004, %v4004
    %v4257 = vmul.f32 %v4005, %v4005
    %v4258 = vmul.f32 %v4006, %v4006
    %v4259 = vmul.f32 %v4007, %v4007
    %v4260 = vmul.f32 %v4008, %v4008
    %v4261 = vmul.f32 %v4009, %v4009
    %v4262 = vmul.f32 %v4010, %v4010
    %v4263 = vmul.f32 %v4011, %v4011
    %v4264 = vmul.f32 %v4012, %v4012
    %v4265 = vmul.f32 %v4013, %v4013
    %v4266 = vmul.f32 %v4014, %v4014
    %v4267 = vmul.f32 %v4015, %v4015
    %v4268 = vmul.f32 %v4016, %v4016
    %v4269 = vmul.f32 %v4017, %v4017
    %v4270 = vmul.f32 %v4018, %v4018
    %4271 = vmatprep.subr.mxu0 0.0
    %4272 = vmatpush1.msra.mxu0 %v4021
    %4273 = vmatprep.subr.mxu0 0.0
    %4274 = vmatpush1.msra.mxu0 %v4022
    %4275 = vmatprep.subr.mxu0 0.0
    %4276 = vmatpush1.msra.mxu0 %v4023
    %4277 = vmatprep.subr.mxu0 0.0
    %4278 = vmatpush1.msra.mxu0 %v4024
    %4279 = vmatprep.subr.mxu0 0.0
    %4280 = vmatpush1.msra.mxu0 %v4025
    %4281 = vmatprep.subr.mxu0 0.0
    %4282 = vmatpush1.msra.mxu0 %v4026
    %4283 = vmatprep.subr.mxu0 0.0
    %4284 = vmatpush1.msra.mxu0 %v4027
    %4285 = vmatprep.subr.mxu0 0.0
    %4286 = vmatpush1.msra.mxu0 %v4028
    %4287 = vmatprep.subr.mxu0 0.0
    %4288 = vmatpush1.msra.mxu0 %v4029
    %4289 = vmatprep.subr.mxu0 0.0
    %4290 = vmatpush1.msra.mxu0 %v4030
    %4291 = vmatprep.subr.mxu0 0.0
    %4292 = vmatpush1.msra.mxu0 %v4031
    %4293 = vmatprep.subr.mxu0 0.0
    %4294 = vmatpush1.msra.mxu0 %v4032
    %4295 = vmatprep.subr.mxu0 0.0
    %4296 = vmatpush1.msra.mxu0 %v4033
    %4297 = vmatprep.subr.mxu0 0.0
    %4298 = vmatpush1.msra.mxu0 %v4034
    %4299 = vmatprep.subr.mxu0 0.0
    %4300 = vmatpush1.msra.mxu0 %v4035
    %4301 = vmatprep.subr.mxu0 0.0
    %4302 = vmatpush1.msra.mxu0 %v4036
    %4303 = vmatprep.subr.mxu0 0.0
    %4304 = vmatpush1.msra.mxu0 %v4037
    %4305 = vmatprep.subr.mxu0 0.0
    %4306 = vmatpush1.msra.mxu0 %v4038
    %4307 = vmatprep.subr.mxu0 0.0
    %4308 = vmatpush1.msra.mxu0 %v4039
    %4309 = vmatprep.subr.mxu0 0.0
    %4310 = vmatpush1.msra.mxu0 %v4040
    %4311 = vmatprep.subr.mxu0 0.0
    %4312 = vmatpush1.msra.mxu0 %v4041
    %4313 = vmatprep.subr.mxu0 0.0
    %4314 = vmatpush1.msra.mxu0 %v4042
    %4315 = vmatprep.subr.mxu0 0.0
    %4316 = vmatpush1.msra.mxu0 %v4043
    %4317 = vmatprep.subr.mxu0 0.0
    %4318 = vmatpush1.msra.mxu0 %v4044
    %4319 = vmatprep.subr.mxu0 0.0
    %4320 = vmatpush1.msra.mxu0 %v4045
    %4321 = vmatprep.subr.mxu0 0.0
    %4322 = vmatpush1.msra.mxu0 %v4046
    %4323 = vmatprep.subr.mxu0 0.0
    %4324 = vmatpush1.msra.mxu0 %v4047
    %4325 = vmatprep.subr.mxu0 0.0
    %4326 = vmatpush1.msra.mxu0 %v4048
    %4327 = vmatprep.subr.mxu0 0.0
    %4328 = vmatpush1.msra.mxu0 %v4049
    %4329 = vmatprep.subr.mxu0 0.0
    %4330 = vmatpush1.msra.mxu0 %v4050
    %4331 = vmatprep.subr.mxu0 0.0
    %4332 = vmatpush1.msra.mxu0 %v4051
    %4333 = vmatprep.subr.mxu0 0.0
    %4334 = vmatpush1.msra.mxu0 %v4052
    %4335 = vmatprep.mubr.f32.mxu0 %v4256
    %4336 = vmatmul.mubr.f32.gmra.mrb[0].mxu0 %v4255
    %v4337 = vpop.f32.mrb[0].mxu0
    %v4338 = vadd.f32 0.0, %v4337
    %v4339 = vpop.f32.mrb[0].mxu0
    %4340 = vmatprep.mubr.f32.mxu0 %v4260
    %4341 = vmatmul.mubr.f32.gmra.mrb[0].mxu0 %v4259
    %v4342 = vpop.f32.mrb[0].mxu0
    %v4343 = vadd.f32 0.0, %v4342
    %v4344 = vpop.f32.mrb[0].mxu0
    %4345 = vmatprep.mubr.f32.mxu0 %v4264
    %4346 = vmatmul.mubr.f32.gmra.mrb[0].mxu0 %v4263
    %v4347 = vpop.f32.mrb[0].mxu0
    %v4348 = vadd.f32 0.0, %v4347
    %v4349 = vpop.f32.mrb[0].mxu0
    %4350 = vmatprep.mubr.f32.mxu0 %v4268
    %4351 = vmatmul.mubr.f32.gmra.mrb[0].mxu0 %v4267
    %v4352 = vpop.f32.mrb[0].mxu0
    %v4353 = vadd.f32 0.0, %v4352
    %v4354 = vpop.f32.mrb[0].mxu0
    %4355 = vdwg.mxu0
    %4356 = vmatprep.subr.mxu0 0.0
    %4357 = vmatpush1.msra.mxu0 %v4053
    %4358 = vmatprep.subr.mxu0 0.0
    %4359 = vmatpush1.msra.mxu0 %v4054
    %4360 = vmatprep.subr.mxu0 0.0
    %4361 = vmatpush1.msra.mxu0 %v4055
    %4362 = vmatprep.subr.mxu0 0.0
    %4363 = vmatpush1.msra.mxu0 %v4056
    %4364 = vmatprep.subr.mxu0 0.0
    %4365 = vmatpush1.msra.mxu0 %v4057
    %4366 = vmatprep.subr.mxu0 0.0
    %4367 = vmatpush1.msra.mxu0 %v4058
    %4368 = vmatprep.subr.mxu0 0.0
    %4369 = vmatpush1.msra.mxu0 %v4059
    %4370 = vmatprep.subr.mxu0 0.0
    %4371 = vmatpush1.msra.mxu0 %v4060
    %4372 = vmatprep.subr.mxu0 0.0
    %4373 = vmatpush1.msra.mxu0 %v4061
    %4374 = vmatprep.subr.mxu0 0.0
    %4375 = vmatpush1.msra.mxu0 %v4062
    %4376 = vmatprep.subr.mxu0 0.0
    %4377 = vmatpush1.msra.mxu0 %v4063
    %4378 = vmatprep.subr.mxu0 0.0
    %4379 = vmatpush1.msra.mxu0 %v4064
    %4380 = vmatprep.subr.mxu0 0.0
    %4381 = vmatpush1.msra.mxu0 %v4065
    %4382 = vmatprep.subr.mxu0 0.0
    %4383 = vmatpush1.msra.mxu0 %v4066
    %4384 = vmatprep.subr.mxu0 0.0
    %4385 = vmatpush1.msra.mxu0 %v4067
    %4386 = vmatprep.subr.mxu0 0.0
    %4387 = vmatpush1.msra.mxu0 %v4068
    %4388 = vmatprep.subr.mxu0 0.0
    %4389 = vmatpush1.msra.mxu0 %v4069
    %4390 = vmatprep.subr.mxu0 0.0
    %4391 = vmatpush1.msra.mxu0 %v4070
    %4392 = vmatprep.subr.mxu0 0.0
    %4393 = vmatpush1.msra.mxu0 %v4071
    %4394 = vmatprep.subr.mxu0 0.0
    %4395 = vmatpush1.msra.mxu0 %v4072
    %4396 = vmatprep.subr.mxu0 0.0
    %4397 = vmatpush1.msra.mxu0 %v4073
    %4398 = vmatprep.subr.mxu0 0.0
    %4399 = vmatpush1.msra.mxu0 %v4074
    %4400 = vmatprep.subr.mxu0 0.0
    %4401 = vmatpush1.msra.mxu0 %v4075
    %4402 = vmatprep.subr.mxu0 0.0
    %4403 = vmatpush1.msra.mxu0 %v4076
    %4404 = vmatprep.subr.mxu0 0.0
    %4405 = vmatpush1.msra.mxu0 %v4077
    %4406 = vmatprep.subr.mxu0 0.0
    %4407 = vmatpush1.msra.mxu0 %v4078
    %4408 = vmatprep.subr.mxu0 0.0
    %4409 = vmatpush1.msra.mxu0 %v4079
    %4410 = vmatprep.subr.mxu0 0.0
    %4411 = vmatpush1.msra.mxu0 %v4080
    %4412 = vmatprep.subr.mxu0 0.0
    %4413 = vmatpush1.msra.mxu0 %v4081
    %4414 = vmatprep.subr.mxu0 0.0
    %4415 = vmatpush1.msra.mxu0 %v4082
    %4416 = vmatprep.subr.mxu0 0.0
    %4417 = vmatpush1.msra.mxu0 %v4083
    %4418 = vmatprep.subr.mxu0 0.0
    %4419 = vmatpush1.msra.mxu0 %v4084
    %4420 = vmatprep.mubr.f32.mxu0 %v4258
    %4421 = vmatmul.mubr.f32.gmra.mrb[0].mxu0 %v4257
    %v4422 = vpop.f32.mrb[0].mxu0
    %v4423 = vadd.f32 %v4338, %v4422
    %v4424 = vpop.f32.mrb[0].mxu0
    %4425 = vmatprep.mubr.f32.mxu0 %v4262
    %4426 = vmatmul.mubr.f32.gmra.mrb[0].mxu0 %v4261
    %v4427 = vpop.f32.mrb[0].mxu0
    %v4428 = vadd.f32 %v4343, %v4427
    %v4429 = vpop.f32.mrb[0].mxu0
    %4430 = vmatprep.mubr.f32.mxu0 %v4266
    %4431 = vmatmul.mubr.f32.gmra.mrb[0].mxu0 %v4265
    %v4432 = vpop.f32.mrb[0].mxu0
    %v4433 = vadd.f32 %v4348, %v4432
    %v4434 = vpop.f32.mrb[0].mxu0
    %4435 = vmatprep.mubr.f32.mxu0 %v4270
    %4436 = vmatmul.mubr.f32.gmra.mrb[0].mxu0 %v4269
    %v4437 = vpop.f32.mrb[0].mxu0
    %v4438 = vadd.f32 %v4353, %v4437
    %v4439 = vpop.f32.mrb[0].mxu0
    %4440 = vdwg.mxu0
    %v4441 = vsel %vm1326, %v4237, 0.0
    %v4442 = vsel %vm1326, %v4242, 0.0
    %v4443 = vadd.f32 %v4441, %v4442
    %v4444 = vrot.slane %v4443, 4
    %v4445 = vadd.f32 %v4443, %v4444
    %v4446 = vrot.slane %v4445, 2
    %v4447 = vadd.f32 %v4445, %v4446
    %v4448 = vrot.slane %v4447, 1
    %v4449 = vadd.f32 %v4447, %v4448
    %v4450 = vsel %vm1326, %v4247, 0.0
    %v4451 = vsel %vm1326, %v4252, 0.0
    %v4452 = vadd.f32 %v4450, %v4451
    %v4453 = vrot.slane %v4452, 4
    %v4454 = vadd.f32 %v4452, %v4453
    %v4455 = vrot.slane %v4454, 2
    %v4456 = vadd.f32 %v4454, %v4455
    %v4457 = vrot.slane %v4456, 1
    %v4458 = vadd.f32 %v4456, %v4457
    %v4459 = vsel %vm1326, %v4423, 0.0
    %v4460 = vsel %vm1326, %v4428, 0.0
    %v4461 = vadd.f32 %v4459, %v4460
    %v4462 = vrot.slane %v4461, 4
    %v4463 = vadd.f32 %v4461, %v4462
    %v4464 = vrot.slane %v4463, 2
    %v4465 = vadd.f32 %v4463, %v4464
    %v4466 = vrot.slane %v4465, 1
    %v4467 = vadd.f32 %v4465, %v4466
    %v4468 = vsel %vm1326, %v4433, 0.0
    %v4469 = vsel %vm1326, %v4438, 0.0
    %v4470 = vadd.f32 %v4468, %v4469
    %v4471 = vrot.slane %v4470, 4
    %v4472 = vadd.f32 %v4470, %v4471
    %v4473 = vrot.slane %v4472, 2
    %v4474 = vadd.f32 %v4472, %v4473
    %v4475 = vrot.slane %v4474, 1
    %v4476 = vadd.f32 %v4474, %v4475
    %v4477 = vmul.f32 %v4449, %v1363
    %v4478 = vmul.f32 %v4458, %v1363
    %v4479 = vmul.f32 %v4467, %v1363
    %v4480 = vmul.f32 %v4476, %v1363
    %v4481 = vmul.f32 %v4477, %v4477
    %v4482 = vmul.f32 %v4478, %v4478
    %v4483 = vsub.f32 %v4479, %v4481
    %v4484 = vsub.f32 %v4480, %v4482
    %v4485 = vadd.f32 %v4483, 1e-05
    %v4486 = vadd.f32 %v4484, 1e-05
    %v4487 = vrsqrt.pop %v4485
    %v4488 = vrsqrt.pop %v4486
    %v4491 = vsel %vm1378, %v4478, %v4477
    %v4495 = vsel %vm1383, %v4488, %v4487
    %v4497 = vsel %vm1386, %v4491, %v4495
    %v4498 = vld [vmem:[#allocation18] sm:$0xff]
    %v4499 = vld [vmem:[#allocation18 + $0x8] sm:$0xff]
    %v4500 = vld [vmem:[#allocation18 + $0x10] sm:$0xff]
    %v4501 = vld [vmem:[#allocation18 + $0x18] sm:$0xff]
    %v4502 = vld [vmem:[#allocation18 + $0x20] sm:$0xff]
    %v4503 = vld [vmem:[#allocation18 + $0x28] sm:$0xff]
    %v4504 = vld [vmem:[#allocation18 + $0x30] sm:$0xff]
    %v4505 = vld [vmem:[#allocation18 + $0x38] sm:$0xff]
    %v4506 = vld [vmem:[#allocation18 + $0x40] sm:$0xff]
    %v4507 = vld [vmem:[#allocation18 + $0x48] sm:$0xff]
    %v4508 = vld [vmem:[#allocation18 + $0x50] sm:$0xff]
    %v4509 = vld [vmem:[#allocation18 + $0x58] sm:$0xff]
    %v4510 = vld [vmem:[#allocation18 + $0x60] sm:$0xff]
    %v4511 = vld [vmem:[#allocation18 + $0x68] sm:$0xff]
    %v4512 = vld [vmem:[#allocation18 + $0x70] sm:$0xff]
    %v4513 = vld [vmem:[#allocation18 + $0x78] sm:$0xff]
    %v4515 = vsel %vm1326, %v4497, 0
    %4517 = vmatprep.subr.mxu0 %v4499
    %4518 = vmatpush1.msra.mxu0 %v4498
    %4519 = vmatprep.subr.mxu0 %v4503
    %4520 = vmatpush1.msra.mxu0 %v4502
    %4521 = vmatprep.subr.mxu0 %v4507
    %4522 = vmatpush1.msra.mxu0 %v4506
    %4523 = vmatprep.subr.mxu0 %v4511
    %4524 = vmatpush1.msra.mxu0 %v4510
    %4525 = vmatprep.subr.mxu0 0.0
    %4526 = vmatpush1.msra.mxu0 0.0
    %4527 = vmatprep.subr.mxu0 0.0
    %4528 = vmatpush1.msra.mxu0 0.0
    %4529 = vmatprep.subr.mxu0 0.0
    %4530 = vmatpush1.msra.mxu0 0.0
    %4531 = vmatprep.subr.mxu0 0.0
    %4532 = vmatpush1.msra.mxu0 0.0
    %4533 = vmatprep.subr.mxu0 0.0
    %4534 = vmatpush1.msra.mxu0 0.0
    %4535 = vmatprep.subr.mxu0 0.0
    %4536 = vmatpush1.msra.mxu0 0.0
    %4537 = vmatprep.subr.mxu0 0.0
    %4538 = vmatpush1.msra.mxu0 0.0
    %4539 = vmatprep.subr.mxu0 0.0
    %4540 = vmatpush1.msra.mxu0 0.0
    %4541 = vmatprep.subr.mxu0 0.0
    %4542 = vmatpush1.msra.mxu0 0.0
    %4543 = vmatprep.subr.mxu0 0.0
    %4544 = vmatpush1.msra.mxu0 0.0
    %4545 = vmatprep.subr.mxu0 0.0
    %4546 = vmatpush1.msra.mxu0 0.0
    %4547 = vmatprep.subr.mxu0 0.0
    %4548 = vmatpush1.msra.mxu0 0.0
    %4549 = vmatprep.subr.mxu0 0.0
    %4550 = vmatpush1.msra.mxu0 0.0
    %4551 = vmatprep.subr.mxu0 0.0
    %4552 = vmatpush1.msra.mxu0 0.0
    %4553 = vmatprep.subr.mxu0 0.0
    %4554 = vmatpush1.msra.mxu0 0.0
    %4555 = vmatprep.subr.mxu0 0.0
    %4556 = vmatpush1.msra.mxu0 0.0
    %4557 = vmatprep.subr.mxu0 0.0
    %4558 = vmatpush1.msra.mxu0 0.0
    %4559 = vmatprep.subr.mxu0 0.0
    %4560 = vmatpush1.msra.mxu0 0.0
    %4561 = vmatprep.subr.mxu0 0.0
    %4562 = vmatpush1.msra.mxu0 0.0
    %4563 = vmatprep.subr.mxu0 0.0
    %4564 = vmatpush1.msra.mxu0 0.0
    %4565 = vmatprep.subr.mxu0 0.0
    %4566 = vmatpush1.msra.mxu0 0.0
    %4567 = vmatprep.subr.mxu0 0.0
    %4568 = vmatpush1.msra.mxu0 0.0
    %4569 = vmatprep.subr.mxu0 0.0
    %4570 = vmatpush1.msra.mxu0 0.0
    %4571 = vmatprep.subr.mxu0 0.0
    %4572 = vmatpush1.msra.mxu0 0.0
    %4573 = vmatprep.subr.mxu0 0.0
    %4574 = vmatpush1.msra.mxu0 0.0
    %4575 = vmatprep.subr.mxu0 0.0
    %4576 = vmatpush1.msra.mxu0 0.0
    %4577 = vmatprep.subr.mxu0 0.0
    %4578 = vmatpush1.msra.mxu0 0.0
    %4579 = vmatprep.subr.mxu0 0.0
    %4580 = vmatpush1.msra.mxu0 0.0
    %4581 = vmatprep.mubr.f32.mxu0 0.0
    %4582 = vmatmul.mubr.f32.gmra.mrb[0].mxu0 %v4515
    %v4583 = vpop.f32.mrb[0].mxu0
    %v4584 = vadd.f32 0.0, %v4583
    %v4585 = vpop.f32.mrb[0].mxu0
    %v4586 = vadd.f32 0.0, %v4585
    %4587 = vdwg.mxu0
    %4588 = vmatprep.subr.mxu0 %v4501
    %4589 = vmatpush1.msra.mxu0 %v4500
    %4590 = vmatprep.subr.mxu0 %v4505
    %4591 = vmatpush1.msra.mxu0 %v4504
    %4592 = vmatprep.subr.mxu0 %v4509
    %4593 = vmatpush1.msra.mxu0 %v4508
    %4594 = vmatprep.subr.mxu0 %v4513
    %4595 = vmatpush1.msra.mxu0 %v4512
    %4596 = vmatprep.subr.mxu0 0.0
    %4597 = vmatpush1.msra.mxu0 0.0
    %4598 = vmatprep.subr.mxu0 0.0
    %4599 = vmatpush1.msra.mxu0 0.0
    %4600 = vmatprep.subr.mxu0 0.0
    %4601 = vmatpush1.msra.mxu0 0.0
    %4602 = vmatprep.subr.mxu0 0.0
    %4603 = vmatpush1.msra.mxu0 0.0
    %4604 = vmatprep.subr.mxu0 0.0
    %4605 = vmatpush1.msra.mxu0 0.0
    %4606 = vmatprep.subr.mxu0 0.0
    %4607 = vmatpush1.msra.mxu0 0.0
    %4608 = vmatprep.subr.mxu0 0.0
    %4609 = vmatpush1.msra.mxu0 0.0
    %4610 = vmatprep.subr.mxu0 0.0
    %4611 = vmatpush1.msra.mxu0 0.0
    %4612 = vmatprep.subr.mxu0 0.0
    %4613 = vmatpush1.msra.mxu0 0.0
    %4614 = vmatprep.subr.mxu0 0.0
    %4615 = vmatpush1.msra.mxu0 0.0
    %4616 = vmatprep.subr.mxu0 0.0
    %4617 = vmatpush1.msra.mxu0 0.0
    %4618 = vmatprep.subr.mxu0 0.0
    %4619 = vmatpush1.msra.mxu0 0.0
    %4620 = vmatprep.subr.mxu0 0.0
    %4621 = vmatpush1.msra.mxu0 0.0
    %4622 = vmatprep.subr.mxu0 0.0
    %4623 = vmatpush1.msra.mxu0 0.0
    %4624 = vmatprep.subr.mxu0 0.0
    %4625 = vmatpush1.msra.mxu0 0.0
    %4626 = vmatprep.subr.mxu0 0.0
    %4627 = vmatpush1.msra.mxu0 0.0
    %4628 = vmatprep.subr.mxu0 0.0
    %4629 = vmatpush1.msra.mxu0 0.0
    %4630 = vmatprep.subr.mxu0 0.0
    %4631 = vmatpush1.msra.mxu0 0.0
    %4632 = vmatprep.subr.mxu0 0.0
    %4633 = vmatpush1.msra.mxu0 0.0
    %4634 = vmatprep.subr.mxu0 0.0
    %4635 = vmatpush1.msra.mxu0 0.0
    %4636 = vmatprep.subr.mxu0 0.0
    %4637 = vmatpush1.msra.mxu0 0.0
    %4638 = vmatprep.subr.mxu0 0.0
    %4639 = vmatpush1.msra.mxu0 0.0
    %4640 = vmatprep.subr.mxu0 0.0
    %4641 = vmatpush1.msra.mxu0 0.0
    %4642 = vmatprep.subr.mxu0 0.0
    %4643 = vmatpush1.msra.mxu0 0.0
    %4644 = vmatprep.subr.mxu0 0.0
    %4645 = vmatpush1.msra.mxu0 0.0
    %4646 = vmatprep.subr.mxu0 0.0
    %4647 = vmatpush1.msra.mxu0 0.0
    %4648 = vmatprep.subr.mxu0 0.0
    %4649 = vmatpush1.msra.mxu0 0.0
    %4650 = vmatprep.subr.mxu0 0.0
    %4651 = vmatpush1.msra.mxu0 0.0
    %4652 = vmatprep.mubr.f32.mxu0 0.0
    %4653 = vmatmul.mubr.f32.gmra.mrb[0].mxu0 %v4515
    %v4654 = vpop.f32.mrb[0].mxu0
    %v4655 = vadd.f32 0.0, %v4654
    %v4656 = vpop.f32.mrb[0].mxu0
    %v4657 = vadd.f32 0.0, %v4656
    %4658 = vdwg.mxu0
    %v4660 = vlaneseq
    %v4661 = vshrl.u32 %v4660, 7
    %v4662 = vsub.s32 0, %v4661
    %v4663 = vrot.slane %v4019, %v4662
    %v4664 = vlaneseq
    %v4665 = vshrl.u32 %v4664, 7
    %v4666 = vsub.s32 1, %v4665
    %v4667 = vrot.slane %v4019, %v4666
    %v4668 = vlaneseq
    %v4669 = vshrl.u32 %v4668, 7
    %v4670 = vsub.s32 2, %v4669
    %v4671 = vrot.slane %v4019, %v4670
    %v4672 = vlaneseq
    %v4673 = vshrl.u32 %v4672, 7
    %v4674 = vsub.s32 3, %v4673
    %v4675 = vrot.slane %v4019, %v4674
    %v4680 = vmul.f32 %v4584, %v4663
    %v4681 = vmul.f32 %v4586, %v4667
    %v4682 = vmul.f32 %v4655, %v4671
    %v4683 = vmul.f32 %v4657, %v4675
    %v4688 = vrot.slane %v4680, 2
    %v4689 = vrot.slane %v4681, 2
    %v4690 = vrot.slane %v4682, 2
    %v4691 = vrot.slane %v4683, 2
    %v4696 = vmul.f32 %v4584, %v4688
    %v4697 = vmul.f32 %v4586, %v4689
    %v4698 = vmul.f32 %v4655, %v4690
    %v4699 = vmul.f32 %v4657, %v4691
    %v4701 = vlaneseq
    %v4702 = vshrl.u32 %v4701, 7
    %v4703 = vsub.s32 0, %v4702
    %v4704 = vrot.slane %v4020, %v4703
    %v4705 = vlaneseq
    %v4706 = vshrl.u32 %v4705, 7
    %v4707 = vsub.s32 1, %v4706
    %v4708 = vrot.slane %v4020, %v4707
    %v4709 = vlaneseq
    %v4710 = vshrl.u32 %v4709, 7
    %v4711 = vsub.s32 2, %v4710
    %v4712 = vrot.slane %v4020, %v4711
    %v4713 = vlaneseq
    %v4714 = vshrl.u32 %v4713, 7
    %v4715 = vsub.s32 3, %v4714
    %v4716 = vrot.slane %v4020, %v4715
    %v4721 = vsub.f32 %v4704, %v4696
    %v4722 = vsub.f32 %v4708, %v4697
    %v4723 = vsub.f32 %v4712, %v4698
    %v4724 = vsub.f32 %v4716, %v4699
    %v4725 = vcombine.low %v4680, %v4681
    %v4726 = vcombine.low %v4682, %v4683
    %v4728 = vunpack.c.l.s4 1966171168
    %v4729 = vunpack.c.0.s8 %v4728
    %v4730 = vlaneseq
    %v4731 = vshrl.u32 %v4730, 7
    %v4732 = vsub.s32 %v4729, %v4731
    %v4733 = vrot.slane %v4725, %v4732
    %v4735 = vunpack.c.l.s4 1966171168
    %v4736 = vunpack.c.0.s8 %v4735
    %v4737 = vlaneseq
    %v4738 = vshrl.u32 %v4737, 7
    %v4739 = vsub.s32 %v4736, %v4738
    %v4740 = vrot.slane %v4726, %v4739
    %v4741 = vcombine.low %v4733, %v4740
    %v4742 = vcombine.high %v4733, %v4740
    %v4744 = vunpack.c.l.s4 1966171168
    %v4745 = vunpack.c.0.s8 %v4744
    %v4746 = vlaneseq
    %v4747 = vshrl.u32 %v4746, 7
    %v4748 = vsub.s32 %v4745, %v4747
    %v4749 = vrot.slane %v4741, %v4748
    %v4751 = vunpack.c.l.s4 1966171168
    %v4752 = vunpack.c.0.s8 %v4751
    %v4753 = vlaneseq
    %v4754 = vshrl.u32 %v4753, 7
    %v4755 = vsub.s32 %v4752, %v4754
    %v4756 = vrot.slane %v4742, %v4755
    %v4757 = vcombine.high %v4749, %v4749
    %v4758 = vcombine.high %v4756, %v4756
    %v4759 = vlaneseq
    %v4760 = vshrl.u32 %v4759, 7
    %v4761 = vsub.s32 0, %v4760
    %v4762 = vrot.slane %v4757, %v4761
    %v4763 = vlaneseq
    %v4764 = vshrl.u32 %v4763, 7
    %v4765 = vsub.s32 1, %v4764
    %v4766 = vrot.slane %v4757, %v4765
    %v4767 = vlaneseq
    %v4768 = vshrl.u32 %v4767, 7
    %v4769 = vsub.s32 2, %v4768
    %v4770 = vrot.slane %v4757, %v4769
    %v4771 = vlaneseq
    %v4772 = vshrl.u32 %v4771, 7
    %v4773 = vsub.s32 3, %v4772
    %v4774 = vrot.slane %v4757, %v4773
    %v4775 = vlaneseq
    %v4776 = vshrl.u32 %v4775, 7
    %v4777 = vsub.s32 0, %v4776
    %v4778 = vrot.slane %v4758, %v4777
    %v4779 = vlaneseq
    %v4780 = vshrl.u32 %v4779, 7
    %v4781 = vsub.s32 1, %v4780
    %v4782 = vrot.slane %v4758, %v4781
    %v4783 = vlaneseq
    %v4784 = vshrl.u32 %v4783, 7
    %v4785 = vsub.s32 2, %v4784
    %v4786 = vrot.slane %v4758, %v4785
    %v4787 = vlaneseq
    %v4788 = vshrl.u32 %v4787, 7
    %v4789 = vsub.s32 3, %v4788
    %v4790 = vrot.slane %v4758, %v4789
    %v4799 = vmul.f32 %v4003, %v4762
    %v4800 = vmul.f32 %v4004, %v4766
    %v4801 = vmul.f32 %v4005, %v4770
    %v4802 = vmul.f32 %v4006, %v4774
    %v4803 = vmul.f32 %v4007, %v4762
    %v4804 = vmul.f32 %v4008, %v4766
    %v4805 = vmul.f32 %v4009, %v4770
    %v4806 = vmul.f32 %v4010, %v4774
    %v4807 = vmul.f32 %v4011, %v4778
    %v4808 = vmul.f32 %v4012, %v4782
    %v4809 = vmul.f32 %v4013, %v4786
    %v4810 = vmul.f32 %v4014, %v4790
    %v4811 = vmul.f32 %v4015, %v4778
    %v4812 = vmul.f32 %v4016, %v4782
    %v4813 = vmul.f32 %v4017, %v4786
    %v4814 = vmul.f32 %v4018, %v4790
    %v4819 = vcombine.low %v4721, %v4722
    %v4820 = vcombine.low %v4723, %v4724
    %v4822 = vunpack.c.l.s4 1966171168
    %v4823 = vunpack.c.0.s8 %v4822
    %v4824 = vlaneseq
    %v4825 = vshrl.u32 %v4824, 7
    %v4826 = vsub.s32 %v4823, %v4825
    %v4827 = vrot.slane %v4819, %v4826
    %v4829 = vunpack.c.l.s4 1966171168
    %v4830 = vunpack.c.0.s8 %v4829
    %v4831 = vlaneseq
    %v4832 = vshrl.u32 %v4831, 7
    %v4833 = vsub.s32 %v4830, %v4832
    %v4834 = vrot.slane %v4820, %v4833
    %v4835 = vcombine.low %v4827, %v4834
    %v4836 = vcombine.high %v4827, %v4834
    %v4838 = vunpack.c.l.s4 1966171168
    %v4839 = vunpack.c.0.s8 %v4838
    %v4840 = vlaneseq
    %v4841 = vshrl.u32 %v4840, 7
    %v4842 = vsub.s32 %v4839, %v4841
    %v4843 = vrot.slane %v4835, %v4842
    %v4845 = vunpack.c.l.s4 1966171168
    %v4846 = vunpack.c.0.s8 %v4845
    %v4847 = vlaneseq
    %v4848 = vshrl.u32 %v4847, 7
    %v4849 = vsub.s32 %v4846, %v4848
    %v4850 = vrot.slane %v4836, %v4849
    %v4851 = vlaneseq
    %v4852 = vshrl.u32 %v4851, 7
    %v4853 = vsub.s32 0, %v4852
    %v4854 = vrot.slane %v4843, %v4853
    %v4855 = vlaneseq
    %v4856 = vshrl.u32 %v4855, 7
    %v4857 = vsub.s32 1, %v4856
    %v4858 = vrot.slane %v4843, %v4857
    %v4859 = vlaneseq
    %v4860 = vshrl.u32 %v4859, 7
    %v4861 = vsub.s32 2, %v4860
    %v4862 = vrot.slane %v4843, %v4861
    %v4863 = vlaneseq
    %v4864 = vshrl.u32 %v4863, 7
    %v4865 = vsub.s32 3, %v4864
    %v4866 = vrot.slane %v4843, %v4865
    %v4867 = vlaneseq
    %v4868 = vshrl.u32 %v4867, 7
    %v4869 = vsub.s32 0, %v4868
    %v4870 = vrot.slane %v4850, %v4869
    %v4871 = vlaneseq
    %v4872 = vshrl.u32 %v4871, 7
    %v4873 = vsub.s32 1, %v4872
    %v4874 = vrot.slane %v4850, %v4873
    %v4875 = vlaneseq
    %v4876 = vshrl.u32 %v4875, 7
    %v4877 = vsub.s32 2, %v4876
    %v4878 = vrot.slane %v4850, %v4877
    %v4879 = vlaneseq
    %v4880 = vshrl.u32 %v4879, 7
    %v4881 = vsub.s32 3, %v4880
    %v4882 = vrot.slane %v4850, %v4881
    %v4891 = vadd.f32 %v4799, %v4854
    %v4892 = vadd.f32 %v4800, %v4858
    %v4893 = vadd.f32 %v4801, %v4862
    %v4894 = vadd.f32 %v4802, %v4866
    %v4895 = vadd.f32 %v4803, %v4854
    %v4896 = vadd.f32 %v4804, %v4858
    %v4897 = vadd.f32 %v4805, %v4862
    %v4898 = vadd.f32 %v4806, %v4866
    %v4899 = vadd.f32 %v4807, %v4870
    %v4900 = vadd.f32 %v4808, %v4874
    %v4901 = vadd.f32 %v4809, %v4878
    %v4902 = vadd.f32 %v4810, %v4882
    %v4903 = vadd.f32 %v4811, %v4870
    %v4904 = vadd.f32 %v4812, %v4874
    %v4905 = vadd.f32 %v4813, %v4878
    %v4906 = vadd.f32 %v4814, %v4882
    %v4907 = vmax.f32 %v4891, 0.0
    %v4908 = vmax.f32 %v4892, 0.0
    %v4909 = vmax.f32 %v4893, 0.0
    %v4910 = vmax.f32 %v4894, 0.0
    %v4911 = vmax.f32 %v4895, 0.0
    %v4912 = vmax.f32 %v4896, 0.0
    %v4913 = vmax.f32 %v4897, 0.0
    %v4914 = vmax.f32 %v4898, 0.0
    %v4915 = vmax.f32 %v4899, 0.0
    %v4916 = vmax.f32 %v4900, 0.0
    %v4917 = vmax.f32 %v4901, 0.0
    %v4918 = vmax.f32 %v4902, 0.0
    %v4919 = vmax.f32 %v4903, 0.0
    %v4920 = vmax.f32 %v4904, 0.0
    %v4921 = vmax.f32 %v4905, 0.0
    %v4922 = vmax.f32 %v4906, 0.0
    %4923 = vst [vmem:[#allocation20] sm:$0xff] %v4907
    %4924 = vst [vmem:[#allocation20 + $0x8] sm:$0xff] %v4908
    %4925 = vst [vmem:[#allocation20 + $0x10] sm:$0xff] %v4909
    %4926 = vst [vmem:[#allocation20 + $0x18] sm:$0xff] %v4910
    %4927 = vst [vmem:[#allocation20 + $0x20] sm:$0xff] %v4911
    %4928 = vst [vmem:[#allocation20 + $0x28] sm:$0xff] %v4912
    %4929 = vst [vmem:[#allocation20 + $0x30] sm:$0xff] %v4913
    %4930 = vst [vmem:[#allocation20 + $0x38] sm:$0xff] %v4914
    %4931 = vst [vmem:[#allocation20 + $0x40] sm:$0xff] %v4915
    %4932 = vst [vmem:[#allocation20 + $0x48] sm:$0xff] %v4916
    %4933 = vst [vmem:[#allocation20 + $0x50] sm:$0xff] %v4917
    %4934 = vst [vmem:[#allocation20 + $0x58] sm:$0xff] %v4918
    %4935 = vst [vmem:[#allocation20 + $0x60] sm:$0xff] %v4919
    %4936 = vst [vmem:[#allocation20 + $0x68] sm:$0xff] %v4920
    %4937 = vst [vmem:[#allocation20 + $0x70] sm:$0xff] %v4921
    %4938 = vst [vmem:[#allocation20 + $0x78] sm:$0xff] %v4922
    // Predicated region
    $region94: #{tpu_custom_call.1} parent=1 // pred_check
      _
    $region95: #{tpu_custom_call.1} parent=1 // pred_check_branch
      %4940 = sbr.rel (0) target = $region97
    $region96: #{tpu_custom_call.1} parent=1 // pred_region
      %s4942 = ssub.s32 2048, 2048
      %4943 = vsyncadd [#allocation5], %s4942
      %s4944 = sshll.u32 [#allocation20], 4
      %s4945 = int_to_ptr.vmem [resolvable:$true] %s4944
      %4950 = dma.vmem_to_hbm [thread:$0]  %s4945, 2048, %s13, [#allocation5], 512, 512, 32
    $region97: #{tpu_custom_call.1} parent=1 // pred_fallthru
      _
    // Predicated region
    $region98: #{tpu_custom_call.1} parent=1 // pred_check
      _
    $region99: #{tpu_custom_call.1} parent=1 // pred_check_branch
      %4952 = sbr.rel (0) target = $region101
    $region100: #{tpu_custom_call.1} parent=1 // pred_region
      %4953 = dma.done [#allocation5], 2048
    $region101: #{tpu_custom_call.1} parent=1 // pred_fallthru
      _
    %4954 = vsyncpa [#allocation4], 1
    %4955 = vsyncpa [#allocation7], 1
    %4956 = vsyncpa [#allocation10], 1
    %4957 = vsyncpa [#allocation13], 1
    %4958 = vsyncpa [#allocation16], 1
    %4959 = vsyncpa [#allocation19], 1
    %4960 = vsyncpa [#allocation5], 1

</llo_original>
